<compile_context>
chip_gen: v7x
topology: tpu7x:2x2x1
jax: 0.10.0
libtpu: 0.0.40
codegen_flags: <defaults>
</compile_context>

<pallas_src>
import functools

import jax
import jax.numpy as jnp
from jax.experimental import pallas as pl
from jax.experimental.pallas import tpu as pltpu


# ------------------------------ device tuning -------------------------------

_VMEM_LIMIT_CACHE = None


def _vmem_limit():
    """Generation-aware scoped-VMEM limit: ~half of physical VMEM, capped at
    64 MiB (v5e/v6e: 128 MiB phys -> 64 MiB; v7x: 64 MiB phys -> 32 MiB)."""
    global _VMEM_LIMIT_CACHE
    if _VMEM_LIMIT_CACHE is None:
        cap = 128 * 1024 * 1024
        try:
            cap = int(getattr(pltpu.get_tpu_info(), "vmem_capacity_bytes", cap))
        except Exception:
            pass
        _VMEM_LIMIT_CACHE = max(16 * 1024 * 1024,
                                min(cap // 2, 64 * 1024 * 1024))
    return _VMEM_LIMIT_CACHE


def _pick_row_tile(m, target):
    """Largest multiple-of-8 divisor of m that is <= target; when m >= 16 the
    tile is also capped at m//2 so the grid has >= 2 steps (megacore).  Falls
    back to the full dimension (always a legal block size)."""
    if m <= 8 or m % 8 != 0:
        return m
    cap = min(target, m // 2)
    cap = max(8, cap - cap % 8)
    for cand in range(cap, 7, -8):
        if m % cand == 0:
            return cand
    return m


def _pick_h_tile(h, w, c, itemsize=4, budget=2 * 1024 * 1024):
    """H-block for the fused upsample kernel: multiple-of-8 divisor of h whose
    flattened chunk (h_tile*w) is 128-lane aligned and within a per-buffer
    VMEM budget; guarantees >= 2 h-blocks whenever one exists."""
    cands = [d for d in range(8, h, 8)
             if h % d == 0 and (d * w) % 128 == 0
             and c * d * w * itemsize <= budget]
    return max(cands) if cands else h


# ------------------------------ Pallas kernels ------------------------------

def _embed_ln_pw_kernel(p_ref, we_ref, be_ref, g_ref, bg_ref, wp_ref, sh_ref,
                        o_ref):
    """Fused low-res path at patch resolution:
       patch-embed conv (bf16 MXU matmul + bias) -> WithBias LayerNorm (f32,
       one-pass stats) -> '+ emb' residual -> 1x1 conv with folded eval-BN
       scale (bf16 MXU matmul) -> + folded BN shift (pre-ReLU)."""
    emb = jnp.dot(p_ref[...], we_ref[...],
                  preferred_element_type=jnp.float32) + be_ref[...]
    mu = jnp.mean(emb, axis=-1, keepdims=True)
    var = jnp.maximum(jnp.mean(emb * emb, axis=-1, keepdims=True) - mu * mu, 0.0)
    ln = (emb - mu) * jax.lax.rsqrt(var + 1e-5) * g_ref[...] + bg_ref[...]
    s = (ln + emb).astype(jnp.bfloat16)                 # cx_i + emb_i
    pre = jnp.dot(s, wp_ref[...], preferred_element_type=jnp.float32)
    o_ref[...] = (pre + sh_ref[...]).astype(o_ref.dtype)


def embed_ln_pw(patches, w_emb, b_emb, ln_g, ln_b, w_pw, shift, *,
                row_tile=1024):
    """(M, C*P*P) bf16 patches -> (M, C) f32 pre-ReLU reconstruct output at
    patch resolution."""
    M, K = patches.shape
    C = w_emb.shape[1]
    Mp = ((M + 7) // 8) * 8                   # pad rows to a multiple of 8
    if Mp != M:
        patches = jnp.pad(patches, ((0, Mp - M), (0, 0)))
    bytes_per_row = K * patches.dtype.itemsize
    row_target = max(8, min(row_tile, (4 * 1024 * 1024) // max(1, bytes_per_row)))
    tm = _pick_row_tile(Mp, row_target)
    grid = (Mp // tm,)
    vec = lambda v: v.reshape(1, C).astype(jnp.float32)

    flops = 2 * Mp * K * C + 2 * Mp * C * C + 10 * Mp * C
    bytes_acc = (Mp * K + K * C + C * C) * 2 + (Mp * C + 5 * C) * 4

    out = pl.pallas_call(
        _embed_ln_pw_kernel,
        out_shape=jax.ShapeDtypeStruct((Mp, C), jnp.float32),
        grid=grid,
        in_specs=[
            pl.BlockSpec((tm, K), lambda i: (i, 0)),   # im2col patches (bf16)
            pl.BlockSpec((K, C), lambda i: (0, 0)),    # patch-embed weight (bf16)
            pl.BlockSpec((1, C), lambda i: (0, 0)),    # patch-embed bias
            pl.BlockSpec((1, C), lambda i: (0, 0)),    # LN gamma
            pl.BlockSpec((1, C), lambda i: (0, 0)),    # LN beta
            pl.BlockSpec((C, C), lambda i: (0, 0)),    # 1x1 conv weight * BN scale (bf16)
            pl.BlockSpec((1, C), lambda i: (0, 0)),    # folded BN shift
        ],
        out_specs=pl.BlockSpec((tm, C), lambda i: (i, 0)),
        compiler_params=pltpu.CompilerParams(
            dimension_semantics=("parallel",),
            vmem_limit_bytes=_vmem_limit(),
            # let XLA fuse the NCHW -> im2col relayout / bf16 cast into the
            # patches operand instead of materializing it in HBM.
            allow_input_fusion=[True, False, False, False, False, False, False]),
        cost_estimate=pl.CostEstimate(flops=int(flops), transcendentals=int(Mp),
                                      bytes_accessed=int(bytes_acc)),
    )(patches, w_emb, vec(b_emb), vec(ln_g), vec(ln_b), w_pw, vec(shift))
    return out[:M]


def _upsample_relu_add_kernel(pre_ref, kt_ref, org_ref, o_ref):
    """Fused bilinear upsample (small matmul against precomposed interpolation
    weights) + ReLU + residual add, written lane-dense on the flattened
    (C, H*W) view, i.e. directly in NCHW order."""
    up = jnp.dot(pre_ref[0], kt_ref[...], preferred_element_type=jnp.float32)
    o_ref[0] = (org_ref[0].astype(jnp.float32)
                + jnp.maximum(up, 0.0)).astype(o_ref.dtype)


def upsample_relu_residual(pre, kt, org2, h, w):
    """pre: (B, C, hp*wp) f32 pre-ReLU patch-res map; kt: (hp*wp, H*W) f32
    precomposed bilinear weights; org2: (B, C, H*W).  Returns org + relu(up)."""
    B, C, KP = pre.shape
    HW = h * w
    th = _pick_h_tile(h, w, C, itemsize=org2.dtype.itemsize)
    chunk = th * w
    grid = (h // th, B)        # b innermost -> the kt block is reused across b
    flops = 2 * B * C * HW * (KP + 1)
    bytes_acc = 4 * (B * C * KP + KP * HW) + 2 * org2.dtype.itemsize * B * C * HW
    return pl.pallas_call(
        _upsample_relu_add_kernel,
        out_shape=jax.ShapeDtypeStruct((B, C, HW), org2.dtype),
        grid=grid,
        in_specs=[
            pl.BlockSpec((1, C, KP), lambda hb, b: (b, 0, 0)),     # patch-res map
            pl.BlockSpec((KP, chunk), lambda hb, b: (0, hb)),      # bilinear weights
            pl.BlockSpec((1, C, chunk), lambda hb, b: (b, 0, hb)), # org (flattened NCHW)
        ],
        out_specs=pl.BlockSpec((1, C, chunk), lambda hb, b: (b, 0, hb)),
        compiler_params=pltpu.CompilerParams(
            dimension_semantics=("parallel", "parallel"),
            vmem_limit_bytes=_vmem_limit()),
        cost_estimate=pl.CostEstimate(flops=int(flops), transcendentals=0,
                                      bytes_accessed=int(bytes_acc)),
    )(pre, kt, org2)


# --------------------------- layout helpers (glue) ---------------------------

def _im2col(x_nchw, p):
    """Non-overlapping PxP patches -> (B*Hp*Wp, C*P*P), row layout (c, ph, pw)."""
    B, C, H, W = x_nchw.shape
    hp, wp = H // p, W // p
    t = x_nchw.reshape(B, C, hp, p, wp, p).transpose(0, 2, 4, 1, 3, 5)
    return t.reshape(B * hp * wp, C * p * p), (hp, wp)


def _bilinear_matrix(out_size, in_size):
    """Row-stochastic (out, in) interpolation matrix matching
    torch nn.Upsample(mode='bilinear', align_corners=False)."""
    scale = in_size / out_size
    dst = jnp.arange(out_size, dtype=jnp.float32)
    src = jnp.clip((dst + 0.5) * scale - 0.5, 0.0, in_size - 1.0)
    i0 = jnp.clip(jnp.floor(src).astype(jnp.int32), 0, in_size - 1)
    i1 = jnp.minimum(i0 + 1, in_size - 1)
    frac = src - i0.astype(jnp.float32)
    rows = jnp.arange(out_size)
    m = jnp.zeros((out_size, in_size), jnp.float32)
    m = m.at[rows, i0].add(1.0 - frac)
    m = m.at[rows, i1].add(frac)
    return m


# ------------------------------- module pieces -------------------------------

def dcat_scale(en, emb_p, ln_p, rec_p, p):
    """One DCAT scale.  With SIC / MSAF / CISA identity stubs the math is
         emb = PatchConv(en);  o = WithBiasLN(emb) + emb
         y   = en + ReLU(Upsample_P(BN(Conv1x1(o))))
       Conv1x1 + eval-BN (per-pixel affine) is commuted below the bilinear
       upsample (exact: interpolation weights sum to 1), so all matmul work
       runs at patch resolution; the upsample itself is a tiny matmul against
       precomposed weights fused with ReLU + the final residual."""
    B, C, H, W = en.shape
    patches, (hp, wp) = _im2col(en.astype(jnp.bfloat16), p)
    w_emb = emb_p[0].reshape(C, -1).T.astype(jnp.bfloat16)          # (C*P*P, C)
    b_emb = emb_p[1]
    ln_g, ln_b = ln_p
    inv = rec_p["gamma"] * jax.lax.rsqrt(rec_p["var"] + 1e-5)       # BN scale
    w_pw = (rec_p["w"].reshape(C, C).T * inv[None, :]).astype(jnp.bfloat16)
    shift = (rec_p["b"] - rec_p["mean"]) * inv + rec_p["beta"]

    pre = embed_ln_pw(patches, w_emb, b_emb, ln_g, ln_b, w_pw, shift)  # (M, C)
    pre = pre.reshape(B, hp * wp, C).transpose(0, 2, 1)     # tiny patch-res transpose

    wh = _bilinear_matrix(H, hp)                                      # (H, hp)
    ww = _bilinear_matrix(W, wp)                                      # (W, wp)
    kt = jnp.einsum("hi,wj->ijhw", wh, ww).reshape(hp * wp, H * W)

    y = upsample_relu_residual(pre, kt, en.reshape(B, C, H * W), H, W)
    return y.reshape(B, C, H, W)


# -------------------------------- parameters --------------------------------

def init_params(key, channel_num, patch_sizes):
    params = {"emb": [], "ln": [], "rec": []}
    ks = jax.random.split(key, 2 * len(channel_num))
    idx = 0
    for c, p in zip(channel_num, patch_sizes):
        w = 0.05 * jax.random.normal(ks[idx], (c, c, p, p), jnp.float32); idx += 1
        params["emb"].append((w, jnp.zeros((c,), jnp.float32)))
        params["ln"].append((jnp.ones((c,), jnp.float32),
                             jnp.zeros((c,), jnp.float32)))
        rw = 0.05 * jax.random.normal(ks[idx], (c, c, 1, 1), jnp.float32); idx += 1
        params["rec"].append(dict(
            w=rw, b=jnp.zeros((c,), jnp.float32),
            gamma=jnp.ones((c,), jnp.float32), beta=jnp.zeros((c,), jnp.float32),
            mean=jnp.zeros((c,), jnp.float32), var=jnp.ones((c,), jnp.float32)))
    # NOTE: attn_norm over KV_size is elided (it only feeds the CISA stub).
    return params


# ---------------------------------- forward ----------------------------------

def dcat_forward(params, en1, en2, en3, en4, patch_sizes):
    ens = [en1, en2, en3, en4]
    # TODO(synk): SIC / MSAF / CISA are identity stubs (sources not provided),
    # hence emb_all_i == emb_i (patch-embed computed once) and the dead
    # concat + attn_norm(emb_all) feeding CISA is elided; weights = None.
    ys = [dcat_scale(ens[i], params["emb"][i], params["ln"][i],
                     params["rec"][i], patch_sizes[i]) for i in range(4)]
    weights = None
    return ys[0], ys[1], ys[2], ys[3], weights


# ------------------------------------ main -----------------------------------

if __name__ == "__main__":
    key = jax.random.PRNGKey(0)
    # small synthetic config: channel_num and patchSize scaled down
    channel_num = [8, 16, 32, 64]
    patch_sizes = [8, 4, 2, 1]
    img_size = 16
    B = 2

    k1, k2, k3, k4, kp = jax.random.split(key, 5)
    en1 = jax.random.normal(k1, (B, channel_num[0], img_size, img_size), jnp.float32)
    en2 = jax.random.normal(k2, (B, channel_num[1], img_size // 2, img_size // 2), jnp.float32)
    en3 = jax.random.normal(k3, (B, channel_num[2], img_size // 4, img_size // 4), jnp.float32)
    en4 = jax.random.normal(k4, (B, channel_num[3], img_size // 8, img_size // 8), jnp.float32)

    params = init_params(kp, channel_num, patch_sizes)

    fwd = jax.jit(functools.partial(dcat_forward, patch_sizes=tuple(patch_sizes)))
    y1, y2, y3, y4, w = fwd(params, en1, en2, en3, en4)
    jax.block_until_ready((y1, y2, y3, y4))

    assert y1.shape == en1.shape and y2.shape == en2.shape
    assert y3.shape == en3.shape and y4.shape == en4.shape
    assert w is None
    print("KERNEL_OK")
</pallas_src>

<mosaic_0001>
module attributes {stable_mosaic.version = 11 : i64} {
  func.func private @main(%arg0: i32) attributes {dimension_semantics = [#tpu.dimension_semantics<core_parallel>], iteration_bounds = array<i64: 2>, tpu.core_type = #tpu.core_type<sc_scalar_subcore>, window_params = []} {
    return
  }
}

module attributes {stable_mosaic.version = 11 : i64} {
  func.func private @main(%arg0: i32) attributes {dimension_semantics = [#tpu.dimension_semantics<core_parallel>], iteration_bounds = array<i64: 2>, tpu.core_type = #tpu.core_type<sc_scalar_subcore>, window_params = []} {
    return
  }
}

module attributes {stable_mosaic.version = 11 : i64} {
  func.func @_embed_ln_pw_kernel(%arg0: i32, %arg1: memref<8x512xbf16, #tpu.memory_space<vmem>>, %arg2: memref<512x8xbf16, #tpu.memory_space<vmem>>, %arg3: memref<1x8xf32, #tpu.memory_space<vmem>>, %arg4: memref<1x8xf32, #tpu.memory_space<vmem>>, %arg5: memref<1x8xf32, #tpu.memory_space<vmem>>, %arg6: memref<8x8xbf16, #tpu.memory_space<vmem>>, %arg7: memref<1x8xf32, #tpu.memory_space<vmem>>, %arg8: memref<8x8xf32, #tpu.memory_space<vmem>>) attributes {dimension_semantics = [#tpu.dimension_semantics<parallel>], iteration_bounds = array<i64: 1>, scalar_prefetch = 0 : i64, scratch_operands = 0 : i64, tpu.core_type = #tpu.core_type<tc>, window_params = [{transform_indices = @transform_0, window_bounds = array<i64: 8, 512>}, {pipeline_mode = #tpu.pipeline_mode<synchronous>, transform_indices = @transform_1, window_bounds = array<i64: 512, 8>}, {pipeline_mode = #tpu.pipeline_mode<synchronous>, transform_indices = @transform_2, window_bounds = array<i64: 1, 8>}, {pipeline_mode = #tpu.pipeline_mode<synchronous>, transform_indices = @transform_3, window_bounds = array<i64: 1, 8>}, {pipeline_mode = #tpu.pipeline_mode<synchronous>, transform_indices = @transform_4, window_bounds = array<i64: 1, 8>}, {pipeline_mode = #tpu.pipeline_mode<synchronous>, transform_indices = @transform_5, window_bounds = array<i64: 8, 8>}, {pipeline_mode = #tpu.pipeline_mode<synchronous>, transform_indices = @transform_6, window_bounds = array<i64: 1, 8>}, {transform_indices = @transform_7, window_bounds = array<i64: 8, 8>}]} {
    %c0 = arith.constant 0 : index
    %c0_0 = arith.constant 0 : index
    %0 = vector.load %arg1[%c0, %c0_0] : memref<8x512xbf16, #tpu.memory_space<vmem>>, vector<8x512xbf16>
    %c0_1 = arith.constant 0 : index
    %c0_2 = arith.constant 0 : index
    %1 = vector.load %arg2[%c0_1, %c0_2] : memref<512x8xbf16, #tpu.memory_space<vmem>>, vector<512x8xbf16>
    %cst = arith.constant dense<0.000000e+00> : vector<8x8xf32>
    %2 = tpu.matmul %0, %1, %cst {dimension_numbers = #tpu.dot_dimension_numbers<[1], [0], [0], [1], [0, 0, 1, 1], [], []>} : vector<8x512xbf16>, vector<512x8xbf16>, vector<8x8xf32> -> vector<8x8xf32>
    %c0_3 = arith.constant 0 : index
    %c0_4 = arith.constant 0 : index
    %3 = vector.load %arg3[%c0_3, %c0_4] : memref<1x8xf32, #tpu.memory_space<vmem>>, vector<1x8xf32>
    %4 = vector.broadcast %3 : vector<1x8xf32> to vector<8x8xf32>
    %5 = arith.addf %2, %4 : vector<8x8xf32>
    %cst_5 = arith.constant dense<0.000000e+00> : vector<8xf32>
    %6 = vector.multi_reduction <add>, %5, %cst_5 [1] : vector<8x8xf32> to vector<8xf32>
    %7 = vector.shape_cast %6 : vector<8xf32> to vector<8x1xf32>
    %cst_6 = arith.constant 8.000000e+00 : f32
    %8 = vector.broadcast %cst_6 : f32 to vector<8x1xf32>
    %9 = arith.divf %7, %8 : vector<8x1xf32>
    %10 = arith.mulf %5, %5 : vector<8x8xf32>
    %cst_7 = arith.constant dense<0.000000e+00> : vector<8xf32>
    %11 = vector.multi_reduction <add>, %10, %cst_7 [1] : vector<8x8xf32> to vector<8xf32>
    %12 = vector.shape_cast %11 : vector<8xf32> to vector<8x1xf32>
    %cst_8 = arith.constant 8.000000e+00 : f32
    %13 = vector.broadcast %cst_8 : f32 to vector<8x1xf32>
    %14 = arith.divf %12, %13 : vector<8x1xf32>
    %15 = arith.mulf %9, %9 : vector<8x1xf32>
    %16 = arith.subf %14, %15 : vector<8x1xf32>
    %cst_9 = arith.constant 0.000000e+00 : f32
    %17 = vector.broadcast %cst_9 : f32 to vector<8x1xf32>
    %18 = arith.maximumf %16, %17 : vector<8x1xf32>
    %19 = vector.broadcast %9 : vector<8x1xf32> to vector<8x8xf32>
    %20 = arith.subf %5, %19 : vector<8x8xf32>
    %cst_10 = arith.constant 9.99999974E-6 : f32
    %21 = vector.broadcast %cst_10 : f32 to vector<8x1xf32>
    %22 = arith.addf %18, %21 : vector<8x1xf32>
    %23 = math.rsqrt %22 : vector<8x1xf32>
    %24 = vector.broadcast %23 : vector<8x1xf32> to vector<8x8xf32>
    %25 = arith.mulf %20, %24 : vector<8x8xf32>
    %c0_11 = arith.constant 0 : index
    %c0_12 = arith.constant 0 : index
    %26 = vector.load %arg4[%c0_11, %c0_12] : memref<1x8xf32, #tpu.memory_space<vmem>>, vector<1x8xf32>
    %27 = vector.broadcast %26 : vector<1x8xf32> to vector<8x8xf32>
    %28 = arith.mulf %25, %27 : vector<8x8xf32>
    %c0_13 = arith.constant 0 : index
    %c0_14 = arith.constant 0 : index
    %29 = vector.load %arg5[%c0_13, %c0_14] : memref<1x8xf32, #tpu.memory_space<vmem>>, vector<1x8xf32>
    %30 = vector.broadcast %29 : vector<1x8xf32> to vector<8x8xf32>
    %31 = arith.addf %28, %30 : vector<8x8xf32>
    %32 = arith.addf %31, %5 : vector<8x8xf32>
    %33 = arith.truncf %32 : vector<8x8xf32> to vector<8x8xbf16>
    %c0_15 = arith.constant 0 : index
    %c0_16 = arith.constant 0 : index
    %34 = vector.load %arg6[%c0_15, %c0_16] : memref<8x8xbf16, #tpu.memory_space<vmem>>, vector<8x8xbf16>
    %cst_17 = arith.constant dense<0.000000e+00> : vector<8x8xf32>
    %35 = tpu.matmul %33, %34, %cst_17 {dimension_numbers = #tpu.dot_dimension_numbers<[1], [0], [0], [1], [0, 0, 1, 1], [], []>} : vector<8x8xbf16>, vector<8x8xbf16>, vector<8x8xf32> -> vector<8x8xf32>
    %c0_18 = arith.constant 0 : index
    %c0_19 = arith.constant 0 : index
    %36 = vector.load %arg7[%c0_18, %c0_19] : memref<1x8xf32, #tpu.memory_space<vmem>>, vector<1x8xf32>
    %37 = vector.broadcast %36 : vector<1x8xf32> to vector<8x8xf32>
    %38 = arith.addf %35, %37 : vector<8x8xf32>
    %c0_20 = arith.constant 0 : index
    %c0_21 = arith.constant 0 : index
    %39 = vector.load %arg8[%c0_20, %c0_21] : memref<8x8xf32, #tpu.memory_space<vmem>>, vector<8x8xf32>
    tpu.vector_store %arg8[%c0_20, %c0_21], %38 {strides = array<i32>} : memref<8x8xf32, #tpu.memory_space<vmem>>, vector<8x8xf32>,
    return
  }
  func.func @transform_0(%arg0: i32) -> (i32, i32) {
    %c0_i32 = arith.constant 0 : i32
    %c0_i32_0 = arith.constant 0 : i32
    return %arg0, %c0_i32 : i32, i32
  }
  func.func @transform_1(%arg0: i32) -> (i32, i32) {
    %c0_i32 = arith.constant 0 : i32
    %c0_i32_0 = arith.constant 0 : i32
    %c0_i32_1 = arith.constant 0 : i32
    return %c0_i32, %c0_i32_0 : i32, i32
  }
  func.func @transform_2(%arg0: i32) -> (i32, i32) {
    %c0_i32 = arith.constant 0 : i32
    %c0_i32_0 = arith.constant 0 : i32
    %c0_i32_1 = arith.constant 0 : i32
    return %c0_i32, %c0_i32_0 : i32, i32
  }
  func.func @transform_3(%arg0: i32) -> (i32, i32) {
    %c0_i32 = arith.constant 0 : i32
    %c0_i32_0 = arith.constant 0 : i32
    %c0_i32_1 = arith.constant 0 : i32
    return %c0_i32, %c0_i32_0 : i32, i32
  }
  func.func @transform_4(%arg0: i32) -> (i32, i32) {
    %c0_i32 = arith.constant 0 : i32
    %c0_i32_0 = arith.constant 0 : i32
    %c0_i32_1 = arith.constant 0 : i32
    return %c0_i32, %c0_i32_0 : i32, i32
  }
  func.func @transform_5(%arg0: i32) -> (i32, i32) {
    %c0_i32 = arith.constant 0 : i32
    %c0_i32_0 = arith.constant 0 : i32
    %c0_i32_1 = arith.constant 0 : i32
    return %c0_i32, %c0_i32_0 : i32, i32
  }
  func.func @transform_6(%arg0: i32) -> (i32, i32) {
    %c0_i32 = arith.constant 0 : i32
    %c0_i32_0 = arith.constant 0 : i32
    %c0_i32_1 = arith.constant 0 : i32
    return %c0_i32, %c0_i32_0 : i32, i32
  }
  func.func @transform_7(%arg0: i32) -> (i32, i32) {
    %c0_i32 = arith.constant 0 : i32
    %c0_i32_0 = arith.constant 0 : i32
    return %arg0, %c0_i32 : i32, i32
  }
}

module attributes {stable_mosaic.version = 11 : i64} {
  func.func @_embed_ln_pw_kernel(%arg0: i32, %arg1: memref<8x256xbf16, #tpu.memory_space<vmem>>, %arg2: memref<256x16xbf16, #tpu.memory_space<vmem>>, %arg3: memref<1x16xf32, #tpu.memory_space<vmem>>, %arg4: memref<1x16xf32, #tpu.memory_space<vmem>>, %arg5: memref<1x16xf32, #tpu.memory_space<vmem>>, %arg6: memref<16x16xbf16, #tpu.memory_space<vmem>>, %arg7: memref<1x16xf32, #tpu.memory_space<vmem>>, %arg8: memref<8x16xf32, #tpu.memory_space<vmem>>) attributes {dimension_semantics = [#tpu.dimension_semantics<parallel>], iteration_bounds = array<i64: 1>, scalar_prefetch = 0 : i64, scratch_operands = 0 : i64, tpu.core_type = #tpu.core_type<tc>, window_params = [{transform_indices = @transform_0, window_bounds = array<i64: 8, 256>}, {pipeline_mode = #tpu.pipeline_mode<synchronous>, transform_indices = @transform_1, window_bounds = array<i64: 256, 16>}, {pipeline_mode = #tpu.pipeline_mode<synchronous>, transform_indices = @transform_2, window_bounds = array<i64: 1, 16>}, {pipeline_mode = #tpu.pipeline_mode<synchronous>, transform_indices = @transform_3, window_bounds = array<i64: 1, 16>}, {pipeline_mode = #tpu.pipeline_mode<synchronous>, transform_indices = @transform_4, window_bounds = array<i64: 1, 16>}, {pipeline_mode = #tpu.pipeline_mode<synchronous>, transform_indices = @transform_5, window_bounds = array<i64: 16, 16>}, {pipeline_mode = #tpu.pipeline_mode<synchronous>, transform_indices = @transform_6, window_bounds = array<i64: 1, 16>}, {transform_indices = @transform_7, window_bounds = array<i64: 8, 16>}]} {
    %c0 = arith.constant 0 : index
    %c0_0 = arith.constant 0 : index
    %0 = vector.load %arg1[%c0, %c0_0] : memref<8x256xbf16, #tpu.memory_space<vmem>>, vector<8x256xbf16>
    %c0_1 = arith.constant 0 : index
    %c0_2 = arith.constant 0 : index
    %1 = vector.load %arg2[%c0_1, %c0_2] : memref<256x16xbf16, #tpu.memory_space<vmem>>, vector<256x16xbf16>
    %cst = arith.constant dense<0.000000e+00> : vector<8x16xf32>
    %2 = tpu.matmul %0, %1, %cst {dimension_numbers = #tpu.dot_dimension_numbers<[1], [0], [0], [1], [0, 0, 1, 1], [], []>} : vector<8x256xbf16>, vector<256x16xbf16>, vector<8x16xf32> -> vector<8x16xf32>
    %c0_3 = arith.constant 0 : index
    %c0_4 = arith.constant 0 : index
    %3 = vector.load %arg3[%c0_3, %c0_4] : memref<1x16xf32, #tpu.memory_space<vmem>>, vector<1x16xf32>
    %4 = vector.broadcast %3 : vector<1x16xf32> to vector<8x16xf32>
    %5 = arith.addf %2, %4 : vector<8x16xf32>
    %cst_5 = arith.constant dense<0.000000e+00> : vector<8xf32>
    %6 = vector.multi_reduction <add>, %5, %cst_5 [1] : vector<8x16xf32> to vector<8xf32>
    %7 = vector.shape_cast %6 : vector<8xf32> to vector<8x1xf32>
    %cst_6 = arith.constant 1.600000e+01 : f32
    %8 = vector.broadcast %cst_6 : f32 to vector<8x1xf32>
    %9 = arith.divf %7, %8 : vector<8x1xf32>
    %10 = arith.mulf %5, %5 : vector<8x16xf32>
    %cst_7 = arith.constant dense<0.000000e+00> : vector<8xf32>
    %11 = vector.multi_reduction <add>, %10, %cst_7 [1] : vector<8x16xf32> to vector<8xf32>
    %12 = vector.shape_cast %11 : vector<8xf32> to vector<8x1xf32>
    %cst_8 = arith.constant 1.600000e+01 : f32
    %13 = vector.broadcast %cst_8 : f32 to vector<8x1xf32>
    %14 = arith.divf %12, %13 : vector<8x1xf32>
    %15 = arith.mulf %9, %9 : vector<8x1xf32>
    %16 = arith.subf %14, %15 : vector<8x1xf32>
    %cst_9 = arith.constant 0.000000e+00 : f32
    %17 = vector.broadcast %cst_9 : f32 to vector<8x1xf32>
    %18 = arith.maximumf %16, %17 : vector<8x1xf32>
    %19 = vector.broadcast %9 : vector<8x1xf32> to vector<8x16xf32>
    %20 = arith.subf %5, %19 : vector<8x16xf32>
    %cst_10 = arith.constant 9.99999974E-6 : f32
    %21 = vector.broadcast %cst_10 : f32 to vector<8x1xf32>
    %22 = arith.addf %18, %21 : vector<8x1xf32>
    %23 = math.rsqrt %22 : vector<8x1xf32>
    %24 = vector.broadcast %23 : vector<8x1xf32> to vector<8x16xf32>
    %25 = arith.mulf %20, %24 : vector<8x16xf32>
    %c0_11 = arith.constant 0 : index
    %c0_12 = arith.constant 0 : index
    %26 = vector.load %arg4[%c0_11, %c0_12] : memref<1x16xf32, #tpu.memory_space<vmem>>, vector<1x16xf32>
    %27 = vector.broadcast %26 : vector<1x16xf32> to vector<8x16xf32>
    %28 = arith.mulf %25, %27 : vector<8x16xf32>
    %c0_13 = arith.constant 0 : index
    %c0_14 = arith.constant 0 : index
    %29 = vector.load %arg5[%c0_13, %c0_14] : memref<1x16xf32, #tpu.memory_space<vmem>>, vector<1x16xf32>
    %30 = vector.broadcast %29 : vector<1x16xf32> to vector<8x16xf32>
    %31 = arith.addf %28, %30 : vector<8x16xf32>
    %32 = arith.addf %31, %5 : vector<8x16xf32>
    %33 = arith.truncf %32 : vector<8x16xf32> to vector<8x16xbf16>
    %c0_15 = arith.constant 0 : index
    %c0_16 = arith.constant 0 : index
    %34 = vector.load %arg6[%c0_15, %c0_16] : memref<16x16xbf16, #tpu.memory_space<vmem>>, vector<16x16xbf16>
    %cst_17 = arith.constant dense<0.000000e+00> : vector<8x16xf32>
    %35 = tpu.matmul %33, %34, %cst_17 {dimension_numbers = #tpu.dot_dimension_numbers<[1], [0], [0], [1], [0, 0, 1, 1], [], []>} : vector<8x16xbf16>, vector<16x16xbf16>, vector<8x16xf32> -> vector<8x16xf32>
    %c0_18 = arith.constant 0 : index
    %c0_19 = arith.constant 0 : index
    %36 = vector.load %arg7[%c0_18, %c0_19] : memref<1x16xf32, #tpu.memory_space<vmem>>, vector<1x16xf32>
    %37 = vector.broadcast %36 : vector<1x16xf32> to vector<8x16xf32>
    %38 = arith.addf %35, %37 : vector<8x16xf32>
    %c0_20 = arith.constant 0 : index
    %c0_21 = arith.constant 0 : index
    %39 = vector.load %arg8[%c0_20, %c0_21] : memref<8x16xf32, #tpu.memory_space<vmem>>, vector<8x16xf32>
    tpu.vector_store %arg8[%c0_20, %c0_21], %38 {strides = array<i32>} : memref<8x16xf32, #tpu.memory_space<vmem>>, vector<8x16xf32>,
    return
  }
  func.func @transform_0(%arg0: i32) -> (i32, i32) {
    %c0_i32 = arith.constant 0 : i32
    %c0_i32_0 = arith.constant 0 : i32
    return %arg0, %c0_i32 : i32, i32
  }
  func.func @transform_1(%arg0: i32) -> (i32, i32) {
    %c0_i32 = arith.constant 0 : i32
    %c0_i32_0 = arith.constant 0 : i32
    %c0_i32_1 = arith.constant 0 : i32
    return %c0_i32, %c0_i32_0 : i32, i32
  }
  func.func @transform_2(%arg0: i32) -> (i32, i32) {
    %c0_i32 = arith.constant 0 : i32
    %c0_i32_0 = arith.constant 0 : i32
    %c0_i32_1 = arith.constant 0 : i32
    return %c0_i32, %c0_i32_0 : i32, i32
  }
  func.func @transform_3(%arg0: i32) -> (i32, i32) {
    %c0_i32 = arith.constant 0 : i32
    %c0_i32_0 = arith.constant 0 : i32
    %c0_i32_1 = arith.constant 0 : i32
    return %c0_i32, %c0_i32_0 : i32, i32
  }
  func.func @transform_4(%arg0: i32) -> (i32, i32) {
    %c0_i32 = arith.constant 0 : i32
    %c0_i32_0 = arith.constant 0 : i32
    %c0_i32_1 = arith.constant 0 : i32
    return %c0_i32, %c0_i32_0 : i32, i32
  }
  func.func @transform_5(%arg0: i32) -> (i32, i32) {
    %c0_i32 = arith.constant 0 : i32
    %c0_i32_0 = arith.constant 0 : i32
    %c0_i32_1 = arith.constant 0 : i32
    return %c0_i32, %c0_i32_0 : i32, i32
  }
  func.func @transform_6(%arg0: i32) -> (i32, i32) {
    %c0_i32 = arith.constant 0 : i32
    %c0_i32_0 = arith.constant 0 : i32
    %c0_i32_1 = arith.constant 0 : i32
    return %c0_i32, %c0_i32_0 : i32, i32
  }
  func.func @transform_7(%arg0: i32) -> (i32, i32) {
    %c0_i32 = arith.constant 0 : i32
    %c0_i32_0 = arith.constant 0 : i32
    return %arg0, %c0_i32 : i32, i32
  }
}

module attributes {stable_mosaic.version = 11 : i64} {
  func.func @_upsample_relu_add_kernel(%arg0: i32, %arg1: i32, %arg2: memref<1x16x4xf32, #tpu.memory_space<vmem>>, %arg3: memref<4x64xf32, #tpu.memory_space<vmem>>, %arg4: memref<1x16x64xf32, #tpu.memory_space<vmem>>, %arg5: memref<1x16x64xf32, #tpu.memory_space<vmem>>) attributes {dimension_semantics = [#tpu.dimension_semantics<parallel>, #tpu.dimension_semantics<parallel>], iteration_bounds = array<i64: 1, 2>, scalar_prefetch = 0 : i64, scratch_operands = 0 : i64, tpu.core_type = #tpu.core_type<tc>, window_params = [{transform_indices = @transform_0, window_bounds = array<i64: 1, 16, 4>}, {transform_indices = @transform_1, window_bounds = array<i64: 4, 64>}, {transform_indices = @transform_2, window_bounds = array<i64: 1, 16, 64>}, {transform_indices = @transform_3, window_bounds = array<i64: 1, 16, 64>}]} {
    %c0 = arith.constant 0 : index
    %c0_0 = arith.constant 0 : index
    %c0_1 = arith.constant 0 : index
    %0 = vector.load %arg2[%c0, %c0_0, %c0_1] : memref<1x16x4xf32, #tpu.memory_space<vmem>>, vector<1x16x4xf32>
    %1 = vector.shape_cast %0 : vector<1x16x4xf32> to vector<16x4xf32>
    %c0_2 = arith.constant 0 : index
    %c0_3 = arith.constant 0 : index
    %2 = vector.load %arg3[%c0_2, %c0_3] : memref<4x64xf32, #tpu.memory_space<vmem>>, vector<4x64xf32>
    %cst = arith.constant dense<0.000000e+00> : vector<16x64xf32>
    %3 = tpu.matmul %1, %2, %cst {dimension_numbers = #tpu.dot_dimension_numbers<[1], [0], [0], [1], [0, 0, 1, 1], [], []>} : vector<16x4xf32>, vector<4x64xf32>, vector<16x64xf32> -> vector<16x64xf32>
    %c0_4 = arith.constant 0 : index
    %c0_5 = arith.constant 0 : index
    %c0_6 = arith.constant 0 : index
    %4 = vector.load %arg4[%c0_4, %c0_5, %c0_6] : memref<1x16x64xf32, #tpu.memory_space<vmem>>, vector<1x16x64xf32>
    %5 = vector.shape_cast %4 : vector<1x16x64xf32> to vector<16x64xf32>
    %cst_7 = arith.constant 0.000000e+00 : f32
    %6 = vector.broadcast %cst_7 : f32 to vector<16x64xf32>
    %7 = arith.maximumf %3, %6 : vector<16x64xf32>
    %8 = arith.addf %5, %7 : vector<16x64xf32>
    %c0_8 = arith.constant 0 : index
    %c0_9 = arith.constant 0 : index
    %c0_10 = arith.constant 0 : index
    %9 = vector.load %arg5[%c0_8, %c0_9, %c0_10] : memref<1x16x64xf32, #tpu.memory_space<vmem>>, vector<1x16x64xf32>
    %10 = vector.shape_cast %9 : vector<1x16x64xf32> to vector<16x64xf32>
    %11 = vector.shape_cast %8 : vector<16x64xf32> to vector<1x16x64xf32>
    tpu.vector_store %arg5[%c0_8, %c0_9, %c0_10], %11 {strides = array<i32>} : memref<1x16x64xf32, #tpu.memory_space<vmem>>, vector<1x16x64xf32>,
    return
  }
  func.func @transform_0(%arg0: i32, %arg1: i32) -> (i32, i32, i32) {
    %c0_i32 = arith.constant 0 : i32
    %c0_i32_0 = arith.constant 0 : i32
    %c0_i32_1 = arith.constant 0 : i32
    return %arg1, %c0_i32, %c0_i32_0 : i32, i32, i32
  }
  func.func @transform_1(%arg0: i32, %arg1: i32) -> (i32, i32) {
    %c0_i32 = arith.constant 0 : i32
    %c0_i32_0 = arith.constant 0 : i32
    return %c0_i32, %arg0 : i32, i32
  }
  func.func @transform_2(%arg0: i32, %arg1: i32) -> (i32, i32, i32) {
    %c0_i32 = arith.constant 0 : i32
    %c0_i32_0 = arith.constant 0 : i32
    return %arg1, %c0_i32, %arg0 : i32, i32, i32
  }
  func.func @transform_3(%arg0: i32, %arg1: i32) -> (i32, i32, i32) {
    %c0_i32 = arith.constant 0 : i32
    %c0_i32_0 = arith.constant 0 : i32
    return %arg1, %c0_i32, %arg0 : i32, i32, i32
  }
}

module attributes {stable_mosaic.version = 11 : i64} {
  func.func @_embed_ln_pw_kernel(%arg0: i32, %arg1: memref<8x128xbf16, #tpu.memory_space<vmem>>, %arg2: memref<128x32xbf16, #tpu.memory_space<vmem>>, %arg3: memref<1x32xf32, #tpu.memory_space<vmem>>, %arg4: memref<1x32xf32, #tpu.memory_space<vmem>>, %arg5: memref<1x32xf32, #tpu.memory_space<vmem>>, %arg6: memref<32x32xbf16, #tpu.memory_space<vmem>>, %arg7: memref<1x32xf32, #tpu.memory_space<vmem>>, %arg8: memref<8x32xf32, #tpu.memory_space<vmem>>) attributes {dimension_semantics = [#tpu.dimension_semantics<parallel>], iteration_bounds = array<i64: 1>, scalar_prefetch = 0 : i64, scratch_operands = 0 : i64, tpu.core_type = #tpu.core_type<tc>, window_params = [{transform_indices = @transform_0, window_bounds = array<i64: 8, 128>}, {pipeline_mode = #tpu.pipeline_mode<synchronous>, transform_indices = @transform_1, window_bounds = array<i64: 128, 32>}, {pipeline_mode = #tpu.pipeline_mode<synchronous>, transform_indices = @transform_2, window_bounds = array<i64: 1, 32>}, {pipeline_mode = #tpu.pipeline_mode<synchronous>, transform_indices = @transform_3, window_bounds = array<i64: 1, 32>}, {pipeline_mode = #tpu.pipeline_mode<synchronous>, transform_indices = @transform_4, window_bounds = array<i64: 1, 32>}, {pipeline_mode = #tpu.pipeline_mode<synchronous>, transform_indices = @transform_5, window_bounds = array<i64: 32, 32>}, {pipeline_mode = #tpu.pipeline_mode<synchronous>, transform_indices = @transform_6, window_bounds = array<i64: 1, 32>}, {transform_indices = @transform_7, window_bounds = array<i64: 8, 32>}]} {
    %c0 = arith.constant 0 : index
    %c0_0 = arith.constant 0 : index
    %0 = vector.load %arg1[%c0, %c0_0] : memref<8x128xbf16, #tpu.memory_space<vmem>>, vector<8x128xbf16>
    %c0_1 = arith.constant 0 : index
    %c0_2 = arith.constant 0 : index
    %1 = vector.load %arg2[%c0_1, %c0_2] : memref<128x32xbf16, #tpu.memory_space<vmem>>, vector<128x32xbf16>
    %cst = arith.constant dense<0.000000e+00> : vector<8x32xf32>
    %2 = tpu.matmul %0, %1, %cst {dimension_numbers = #tpu.dot_dimension_numbers<[1], [0], [0], [1], [0, 0, 1, 1], [], []>} : vector<8x128xbf16>, vector<128x32xbf16>, vector<8x32xf32> -> vector<8x32xf32>
    %c0_3 = arith.constant 0 : index
    %c0_4 = arith.constant 0 : index
    %3 = vector.load %arg3[%c0_3, %c0_4] : memref<1x32xf32, #tpu.memory_space<vmem>>, vector<1x32xf32>
    %4 = vector.broadcast %3 : vector<1x32xf32> to vector<8x32xf32>
    %5 = arith.addf %2, %4 : vector<8x32xf32>
    %cst_5 = arith.constant dense<0.000000e+00> : vector<8xf32>
    %6 = vector.multi_reduction <add>, %5, %cst_5 [1] : vector<8x32xf32> to vector<8xf32>
    %7 = vector.shape_cast %6 : vector<8xf32> to vector<8x1xf32>
    %cst_6 = arith.constant 3.200000e+01 : f32
    %8 = vector.broadcast %cst_6 : f32 to vector<8x1xf32>
    %9 = arith.divf %7, %8 : vector<8x1xf32>
    %10 = arith.mulf %5, %5 : vector<8x32xf32>
    %cst_7 = arith.constant dense<0.000000e+00> : vector<8xf32>
    %11 = vector.multi_reduction <add>, %10, %cst_7 [1] : vector<8x32xf32> to vector<8xf32>
    %12 = vector.shape_cast %11 : vector<8xf32> to vector<8x1xf32>
    %cst_8 = arith.constant 3.200000e+01 : f32
    %13 = vector.broadcast %cst_8 : f32 to vector<8x1xf32>
    %14 = arith.divf %12, %13 : vector<8x1xf32>
    %15 = arith.mulf %9, %9 : vector<8x1xf32>
    %16 = arith.subf %14, %15 : vector<8x1xf32>
    %cst_9 = arith.constant 0.000000e+00 : f32
    %17 = vector.broadcast %cst_9 : f32 to vector<8x1xf32>
    %18 = arith.maximumf %16, %17 : vector<8x1xf32>
    %19 = vector.broadcast %9 : vector<8x1xf32> to vector<8x32xf32>
    %20 = arith.subf %5, %19 : vector<8x32xf32>
    %cst_10 = arith.constant 9.99999974E-6 : f32
    %21 = vector.broadcast %cst_10 : f32 to vector<8x1xf32>
    %22 = arith.addf %18, %21 : vector<8x1xf32>
    %23 = math.rsqrt %22 : vector<8x1xf32>
    %24 = vector.broadcast %23 : vector<8x1xf32> to vector<8x32xf32>
    %25 = arith.mulf %20, %24 : vector<8x32xf32>
    %c0_11 = arith.constant 0 : index
    %c0_12 = arith.constant 0 : index
    %26 = vector.load %arg4[%c0_11, %c0_12] : memref<1x32xf32, #tpu.memory_space<vmem>>, vector<1x32xf32>
    %27 = vector.broadcast %26 : vector<1x32xf32> to vector<8x32xf32>
    %28 = arith.mulf %25, %27 : vector<8x32xf32>
    %c0_13 = arith.constant 0 : index
    %c0_14 = arith.constant 0 : index
    %29 = vector.load %arg5[%c0_13, %c0_14] : memref<1x32xf32, #tpu.memory_space<vmem>>, vector<1x32xf32>
    %30 = vector.broadcast %29 : vector<1x32xf32> to vector<8x32xf32>
    %31 = arith.addf %28, %30 : vector<8x32xf32>
    %32 = arith.addf %31, %5 : vector<8x32xf32>
    %33 = arith.truncf %32 : vector<8x32xf32> to vector<8x32xbf16>
    %c0_15 = arith.constant 0 : index
    %c0_16 = arith.constant 0 : index
    %34 = vector.load %arg6[%c0_15, %c0_16] : memref<32x32xbf16, #tpu.memory_space<vmem>>, vector<32x32xbf16>
    %cst_17 = arith.constant dense<0.000000e+00> : vector<8x32xf32>
    %35 = tpu.matmul %33, %34, %cst_17 {dimension_numbers = #tpu.dot_dimension_numbers<[1], [0], [0], [1], [0, 0, 1, 1], [], []>} : vector<8x32xbf16>, vector<32x32xbf16>, vector<8x32xf32> -> vector<8x32xf32>
    %c0_18 = arith.constant 0 : index
    %c0_19 = arith.constant 0 : index
    %36 = vector.load %arg7[%c0_18, %c0_19] : memref<1x32xf32, #tpu.memory_space<vmem>>, vector<1x32xf32>
    %37 = vector.broadcast %36 : vector<1x32xf32> to vector<8x32xf32>
    %38 = arith.addf %35, %37 : vector<8x32xf32>
    %c0_20 = arith.constant 0 : index
    %c0_21 = arith.constant 0 : index
    %39 = vector.load %arg8[%c0_20, %c0_21] : memref<8x32xf32, #tpu.memory_space<vmem>>, vector<8x32xf32>
    tpu.vector_store %arg8[%c0_20, %c0_21], %38 {strides = array<i32>} : memref<8x32xf32, #tpu.memory_space<vmem>>, vector<8x32xf32>,
    return
  }
  func.func @transform_0(%arg0: i32) -> (i32, i32) {
    %c0_i32 = arith.constant 0 : i32
    %c0_i32_0 = arith.constant 0 : i32
    return %arg0, %c0_i32 : i32, i32
  }
  func.func @transform_1(%arg0: i32) -> (i32, i32) {
    %c0_i32 = arith.constant 0 : i32
    %c0_i32_0 = arith.constant 0 : i32
    %c0_i32_1 = arith.constant 0 : i32
    return %c0_i32, %c0_i32_0 : i32, i32
  }
  func.func @transform_2(%arg0: i32) -> (i32, i32) {
    %c0_i32 = arith.constant 0 : i32
    %c0_i32_0 = arith.constant 0 : i32
    %c0_i32_1 = arith.constant 0 : i32
    return %c0_i32, %c0_i32_0 : i32, i32
  }
  func.func @transform_3(%arg0: i32) -> (i32, i32) {
    %c0_i32 = arith.constant 0 : i32
    %c0_i32_0 = arith.constant 0 : i32
    %c0_i32_1 = arith.constant 0 : i32
    return %c0_i32, %c0_i32_0 : i32, i32
  }
  func.func @transform_4(%arg0: i32) -> (i32, i32) {
    %c0_i32 = arith.constant 0 : i32
    %c0_i32_0 = arith.constant 0 : i32
    %c0_i32_1 = arith.constant 0 : i32
    return %c0_i32, %c0_i32_0 : i32, i32
  }
  func.func @transform_5(%arg0: i32) -> (i32, i32) {
    %c0_i32 = arith.constant 0 : i32
    %c0_i32_0 = arith.constant 0 : i32
    %c0_i32_1 = arith.constant 0 : i32
    return %c0_i32, %c0_i32_0 : i32, i32
  }
  func.func @transform_6(%arg0: i32) -> (i32, i32) {
    %c0_i32 = arith.constant 0 : i32
    %c0_i32_0 = arith.constant 0 : i32
    %c0_i32_1 = arith.constant 0 : i32
    return %c0_i32, %c0_i32_0 : i32, i32
  }
  func.func @transform_7(%arg0: i32) -> (i32, i32) {
    %c0_i32 = arith.constant 0 : i32
    %c0_i32_0 = arith.constant 0 : i32
    return %arg0, %c0_i32 : i32, i32
  }
}

module attributes {stable_mosaic.version = 11 : i64} {
  func.func @_upsample_relu_add_kernel(%arg0: i32, %arg1: i32, %arg2: memref<1x32x4xf32, #tpu.memory_space<vmem>>, %arg3: memref<4x16xf32, #tpu.memory_space<vmem>>, %arg4: memref<1x32x16xf32, #tpu.memory_space<vmem>>, %arg5: memref<1x32x16xf32, #tpu.memory_space<vmem>>) attributes {dimension_semantics = [#tpu.dimension_semantics<parallel>, #tpu.dimension_semantics<parallel>], iteration_bounds = array<i64: 1, 2>, scalar_prefetch = 0 : i64, scratch_operands = 0 : i64, tpu.core_type = #tpu.core_type<tc>, window_params = [{transform_indices = @transform_0, window_bounds = array<i64: 1, 32, 4>}, {transform_indices = @transform_1, window_bounds = array<i64: 4, 16>}, {transform_indices = @transform_2, window_bounds = array<i64: 1, 32, 16>}, {transform_indices = @transform_3, window_bounds = array<i64: 1, 32, 16>}]} {
    %c0 = arith.constant 0 : index
    %c0_0 = arith.constant 0 : index
    %c0_1 = arith.constant 0 : index
    %0 = vector.load %arg2[%c0, %c0_0, %c0_1] : memref<1x32x4xf32, #tpu.memory_space<vmem>>, vector<1x32x4xf32>
    %1 = vector.shape_cast %0 : vector<1x32x4xf32> to vector<32x4xf32>
    %c0_2 = arith.constant 0 : index
    %c0_3 = arith.constant 0 : index
    %2 = vector.load %arg3[%c0_2, %c0_3] : memref<4x16xf32, #tpu.memory_space<vmem>>, vector<4x16xf32>
    %cst = arith.constant dense<0.000000e+00> : vector<32x16xf32>
    %3 = tpu.matmul %1, %2, %cst {dimension_numbers = #tpu.dot_dimension_numbers<[1], [0], [0], [1], [0, 0, 1, 1], [], []>} : vector<32x4xf32>, vector<4x16xf32>, vector<32x16xf32> -> vector<32x16xf32>
    %c0_4 = arith.constant 0 : index
    %c0_5 = arith.constant 0 : index
    %c0_6 = arith.constant 0 : index
    %4 = vector.load %arg4[%c0_4, %c0_5, %c0_6] : memref<1x32x16xf32, #tpu.memory_space<vmem>>, vector<1x32x16xf32>
    %5 = vector.shape_cast %4 : vector<1x32x16xf32> to vector<32x16xf32>
    %cst_7 = arith.constant 0.000000e+00 : f32
    %6 = vector.broadcast %cst_7 : f32 to vector<32x16xf32>
    %7 = arith.maximumf %3, %6 : vector<32x16xf32>
    %8 = arith.addf %5, %7 : vector<32x16xf32>
    %c0_8 = arith.constant 0 : index
    %c0_9 = arith.constant 0 : index
    %c0_10 = arith.constant 0 : index
    %9 = vector.load %arg5[%c0_8, %c0_9, %c0_10] : memref<1x32x16xf32, #tpu.memory_space<vmem>>, vector<1x32x16xf32>
    %10 = vector.shape_cast %9 : vector<1x32x16xf32> to vector<32x16xf32>
    %11 = vector.shape_cast %8 : vector<32x16xf32> to vector<1x32x16xf32>
    tpu.vector_store %arg5[%c0_8, %c0_9, %c0_10], %11 {strides = array<i32>} : memref<1x32x16xf32, #tpu.memory_space<vmem>>, vector<1x32x16xf32>,
    return
  }
  func.func @transform_0(%arg0: i32, %arg1: i32) -> (i32, i32, i32) {
    %c0_i32 = arith.constant 0 : i32
    %c0_i32_0 = arith.constant 0 : i32
    %c0_i32_1 = arith.constant 0 : i32
    return %arg1, %c0_i32, %c0_i32_0 : i32, i32, i32
  }
  func.func @transform_1(%arg0: i32, %arg1: i32) -> (i32, i32) {
    %c0_i32 = arith.constant 0 : i32
    %c0_i32_0 = arith.constant 0 : i32
    return %c0_i32, %arg0 : i32, i32
  }
  func.func @transform_2(%arg0: i32, %arg1: i32) -> (i32, i32, i32) {
    %c0_i32 = arith.constant 0 : i32
    %c0_i32_0 = arith.constant 0 : i32
    return %arg1, %c0_i32, %arg0 : i32, i32, i32
  }
  func.func @transform_3(%arg0: i32, %arg1: i32) -> (i32, i32, i32) {
    %c0_i32 = arith.constant 0 : i32
    %c0_i32_0 = arith.constant 0 : i32
    return %arg1, %c0_i32, %arg0 : i32, i32, i32
  }
}

module attributes {stable_mosaic.version = 11 : i64} {
  func.func @_embed_ln_pw_kernel(%arg0: i32, %arg1: memref<8x64xbf16, #tpu.memory_space<vmem>>, %arg2: memref<64x64xbf16, #tpu.memory_space<vmem>>, %arg3: memref<1x64xf32, #tpu.memory_space<vmem>>, %arg4: memref<1x64xf32, #tpu.memory_space<vmem>>, %arg5: memref<1x64xf32, #tpu.memory_space<vmem>>, %arg6: memref<64x64xbf16, #tpu.memory_space<vmem>>, %arg7: memref<1x64xf32, #tpu.memory_space<vmem>>, %arg8: memref<8x64xf32, #tpu.memory_space<vmem>>) attributes {dimension_semantics = [#tpu.dimension_semantics<parallel>], iteration_bounds = array<i64: 1>, scalar_prefetch = 0 : i64, scratch_operands = 0 : i64, tpu.core_type = #tpu.core_type<tc>, window_params = [{transform_indices = @transform_0, window_bounds = array<i64: 8, 64>}, {pipeline_mode = #tpu.pipeline_mode<synchronous>, transform_indices = @transform_1, window_bounds = array<i64: 64, 64>}, {pipeline_mode = #tpu.pipeline_mode<synchronous>, transform_indices = @transform_2, window_bounds = array<i64: 1, 64>}, {pipeline_mode = #tpu.pipeline_mode<synchronous>, transform_indices = @transform_3, window_bounds = array<i64: 1, 64>}, {pipeline_mode = #tpu.pipeline_mode<synchronous>, transform_indices = @transform_4, window_bounds = array<i64: 1, 64>}, {pipeline_mode = #tpu.pipeline_mode<synchronous>, transform_indices = @transform_5, window_bounds = array<i64: 64, 64>}, {pipeline_mode = #tpu.pipeline_mode<synchronous>, transform_indices = @transform_6, window_bounds = array<i64: 1, 64>}, {transform_indices = @transform_7, window_bounds = array<i64: 8, 64>}]} {
    %c0 = arith.constant 0 : index
    %c0_0 = arith.constant 0 : index
    %0 = vector.load %arg1[%c0, %c0_0] : memref<8x64xbf16, #tpu.memory_space<vmem>>, vector<8x64xbf16>
    %c0_1 = arith.constant 0 : index
    %c0_2 = arith.constant 0 : index
    %1 = vector.load %arg2[%c0_1, %c0_2] : memref<64x64xbf16, #tpu.memory_space<vmem>>, vector<64x64xbf16>
    %cst = arith.constant dense<0.000000e+00> : vector<8x64xf32>
    %2 = tpu.matmul %0, %1, %cst {dimension_numbers = #tpu.dot_dimension_numbers<[1], [0], [0], [1], [0, 0, 1, 1], [], []>} : vector<8x64xbf16>, vector<64x64xbf16>, vector<8x64xf32> -> vector<8x64xf32>
    %c0_3 = arith.constant 0 : index
    %c0_4 = arith.constant 0 : index
    %3 = vector.load %arg3[%c0_3, %c0_4] : memref<1x64xf32, #tpu.memory_space<vmem>>, vector<1x64xf32>
    %4 = vector.broadcast %3 : vector<1x64xf32> to vector<8x64xf32>
    %5 = arith.addf %2, %4 : vector<8x64xf32>
    %cst_5 = arith.constant dense<0.000000e+00> : vector<8xf32>
    %6 = vector.multi_reduction <add>, %5, %cst_5 [1] : vector<8x64xf32> to vector<8xf32>
    %7 = vector.shape_cast %6 : vector<8xf32> to vector<8x1xf32>
    %cst_6 = arith.constant 6.400000e+01 : f32
    %8 = vector.broadcast %cst_6 : f32 to vector<8x1xf32>
    %9 = arith.divf %7, %8 : vector<8x1xf32>
    %10 = arith.mulf %5, %5 : vector<8x64xf32>
    %cst_7 = arith.constant dense<0.000000e+00> : vector<8xf32>
    %11 = vector.multi_reduction <add>, %10, %cst_7 [1] : vector<8x64xf32> to vector<8xf32>
    %12 = vector.shape_cast %11 : vector<8xf32> to vector<8x1xf32>
    %cst_8 = arith.constant 6.400000e+01 : f32
    %13 = vector.broadcast %cst_8 : f32 to vector<8x1xf32>
    %14 = arith.divf %12, %13 : vector<8x1xf32>
    %15 = arith.mulf %9, %9 : vector<8x1xf32>
    %16 = arith.subf %14, %15 : vector<8x1xf32>
    %cst_9 = arith.constant 0.000000e+00 : f32
    %17 = vector.broadcast %cst_9 : f32 to vector<8x1xf32>
    %18 = arith.maximumf %16, %17 : vector<8x1xf32>
    %19 = vector.broadcast %9 : vector<8x1xf32> to vector<8x64xf32>
    %20 = arith.subf %5, %19 : vector<8x64xf32>
    %cst_10 = arith.constant 9.99999974E-6 : f32
    %21 = vector.broadcast %cst_10 : f32 to vector<8x1xf32>
    %22 = arith.addf %18, %21 : vector<8x1xf32>
    %23 = math.rsqrt %22 : vector<8x1xf32>
    %24 = vector.broadcast %23 : vector<8x1xf32> to vector<8x64xf32>
    %25 = arith.mulf %20, %24 : vector<8x64xf32>
    %c0_11 = arith.constant 0 : index
    %c0_12 = arith.constant 0 : index
    %26 = vector.load %arg4[%c0_11, %c0_12] : memref<1x64xf32, #tpu.memory_space<vmem>>, vector<1x64xf32>
    %27 = vector.broadcast %26 : vector<1x64xf32> to vector<8x64xf32>
    %28 = arith.mulf %25, %27 : vector<8x64xf32>
    %c0_13 = arith.constant 0 : index
    %c0_14 = arith.constant 0 : index
    %29 = vector.load %arg5[%c0_13, %c0_14] : memref<1x64xf32, #tpu.memory_space<vmem>>, vector<1x64xf32>
    %30 = vector.broadcast %29 : vector<1x64xf32> to vector<8x64xf32>
    %31 = arith.addf %28, %30 : vector<8x64xf32>
    %32 = arith.addf %31, %5 : vector<8x64xf32>
    %33 = arith.truncf %32 : vector<8x64xf32> to vector<8x64xbf16>
    %c0_15 = arith.constant 0 : index
    %c0_16 = arith.constant 0 : index
    %34 = vector.load %arg6[%c0_15, %c0_16] : memref<64x64xbf16, #tpu.memory_space<vmem>>, vector<64x64xbf16>
    %cst_17 = arith.constant dense<0.000000e+00> : vector<8x64xf32>
    %35 = tpu.matmul %33, %34, %cst_17 {dimension_numbers = #tpu.dot_dimension_numbers<[1], [0], [0], [1], [0, 0, 1, 1], [], []>} : vector<8x64xbf16>, vector<64x64xbf16>, vector<8x64xf32> -> vector<8x64xf32>
    %c0_18 = arith.constant 0 : index
    %c0_19 = arith.constant 0 : index
    %36 = vector.load %arg7[%c0_18, %c0_19] : memref<1x64xf32, #tpu.memory_space<vmem>>, vector<1x64xf32>
    %37 = vector.broadcast %36 : vector<1x64xf32> to vector<8x64xf32>
    %38 = arith.addf %35, %37 : vector<8x64xf32>
    %c0_20 = arith.constant 0 : index
    %c0_21 = arith.constant 0 : index
    %39 = vector.load %arg8[%c0_20, %c0_21] : memref<8x64xf32, #tpu.memory_space<vmem>>, vector<8x64xf32>
    tpu.vector_store %arg8[%c0_20, %c0_21], %38 {strides = array<i32>} : memref<8x64xf32, #tpu.memory_space<vmem>>, vector<8x64xf32>,
    return
  }
  func.func @transform_0(%arg0: i32) -> (i32, i32) {
    %c0_i32 = arith.constant 0 : i32
    %c0_i32_0 = arith.constant 0 : i32
    return %arg0, %c0_i32 : i32, i32
  }
  func.func @transform_1(%arg0: i32) -> (i32, i32) {
    %c0_i32 = arith.constant 0 : i32
    %c0_i32_0 = arith.constant 0 : i32
    %c0_i32_1 = arith.constant 0 : i32
    return %c0_i32, %c0_i32_0 : i32, i32
  }
  func.func @transform_2(%arg0: i32) -> (i32, i32) {
    %c0_i32 = arith.constant 0 : i32
    %c0_i32_0 = arith.constant 0 : i32
    %c0_i32_1 = arith.constant 0 : i32
    return %c0_i32, %c0_i32_0 : i32, i32
  }
  func.func @transform_3(%arg0: i32) -> (i32, i32) {
    %c0_i32 = arith.constant 0 : i32
    %c0_i32_0 = arith.constant 0 : i32
    %c0_i32_1 = arith.constant 0 : i32
    return %c0_i32, %c0_i32_0 : i32, i32
  }
  func.func @transform_4(%arg0: i32) -> (i32, i32) {
    %c0_i32 = arith.constant 0 : i32
    %c0_i32_0 = arith.constant 0 : i32
    %c0_i32_1 = arith.constant 0 : i32
    return %c0_i32, %c0_i32_0 : i32, i32
  }
  func.func @transform_5(%arg0: i32) -> (i32, i32) {
    %c0_i32 = arith.constant 0 : i32
    %c0_i32_0 = arith.constant 0 : i32
    %c0_i32_1 = arith.constant 0 : i32
    return %c0_i32, %c0_i32_0 : i32, i32
  }
  func.func @transform_6(%arg0: i32) -> (i32, i32) {
    %c0_i32 = arith.constant 0 : i32
    %c0_i32_0 = arith.constant 0 : i32
    %c0_i32_1 = arith.constant 0 : i32
    return %c0_i32, %c0_i32_0 : i32, i32
  }
  func.func @transform_7(%arg0: i32) -> (i32, i32) {
    %c0_i32 = arith.constant 0 : i32
    %c0_i32_0 = arith.constant 0 : i32
    return %arg0, %c0_i32 : i32, i32
  }
}

module attributes {stable_mosaic.version = 11 : i64} {
  func.func @_upsample_relu_add_kernel(%arg0: i32, %arg1: i32, %arg2: memref<1x64x4xf32, #tpu.memory_space<vmem>>, %arg3: memref<4x4xf32, #tpu.memory_space<vmem>>, %arg4: memref<1x64x4xf32, #tpu.memory_space<vmem>>, %arg5: memref<1x64x4xf32, #tpu.memory_space<vmem>>) attributes {dimension_semantics = [#tpu.dimension_semantics<parallel>, #tpu.dimension_semantics<parallel>], iteration_bounds = array<i64: 1, 2>, scalar_prefetch = 0 : i64, scratch_operands = 0 : i64, tpu.core_type = #tpu.core_type<tc>, window_params = [{transform_indices = @transform_0, window_bounds = array<i64: 1, 64, 4>}, {transform_indices = @transform_1, window_bounds = array<i64: 4, 4>}, {transform_indices = @transform_2, window_bounds = array<i64: 1, 64, 4>}, {transform_indices = @transform_3, window_bounds = array<i64: 1, 64, 4>}]} {
    %c0 = arith.constant 0 : index
    %c0_0 = arith.constant 0 : index
    %c0_1 = arith.constant 0 : index
    %0 = vector.load %arg2[%c0, %c0_0, %c0_1] : memref<1x64x4xf32, #tpu.memory_space<vmem>>, vector<1x64x4xf32>
    %1 = vector.shape_cast %0 : vector<1x64x4xf32> to vector<64x4xf32>
    %c0_2 = arith.constant 0 : index
    %c0_3 = arith.constant 0 : index
    %2 = vector.load %arg3[%c0_2, %c0_3] : memref<4x4xf32, #tpu.memory_space<vmem>>, vector<4x4xf32>
    %cst = arith.constant dense<0.000000e+00> : vector<64x4xf32>
    %3 = tpu.matmul %1, %2, %cst {dimension_numbers = #tpu.dot_dimension_numbers<[1], [0], [0], [1], [0, 0, 1, 1], [], []>} : vector<64x4xf32>, vector<4x4xf32>, vector<64x4xf32> -> vector<64x4xf32>
    %c0_4 = arith.constant 0 : index
    %c0_5 = arith.constant 0 : index
    %c0_6 = arith.constant 0 : index
    %4 = vector.load %arg4[%c0_4, %c0_5, %c0_6] : memref<1x64x4xf32, #tpu.memory_space<vmem>>, vector<1x64x4xf32>
    %5 = vector.shape_cast %4 : vector<1x64x4xf32> to vector<64x4xf32>
    %cst_7 = arith.constant 0.000000e+00 : f32
    %6 = vector.broadcast %cst_7 : f32 to vector<64x4xf32>
    %7 = arith.maximumf %3, %6 : vector<64x4xf32>
    %8 = arith.addf %5, %7 : vector<64x4xf32>
    %c0_8 = arith.constant 0 : index
    %c0_9 = arith.constant 0 : index
    %c0_10 = arith.constant 0 : index
    %9 = vector.load %arg5[%c0_8, %c0_9, %c0_10] : memref<1x64x4xf32, #tpu.memory_space<vmem>>, vector<1x64x4xf32>
    %10 = vector.shape_cast %9 : vector<1x64x4xf32> to vector<64x4xf32>
    %11 = vector.shape_cast %8 : vector<64x4xf32> to vector<1x64x4xf32>
    tpu.vector_store %arg5[%c0_8, %c0_9, %c0_10], %11 {strides = array<i32>} : memref<1x64x4xf32, #tpu.memory_space<vmem>>, vector<1x64x4xf32>,
    return
  }
  func.func @transform_0(%arg0: i32, %arg1: i32) -> (i32, i32, i32) {
    %c0_i32 = arith.constant 0 : i32
    %c0_i32_0 = arith.constant 0 : i32
    %c0_i32_1 = arith.constant 0 : i32
    return %arg1, %c0_i32, %c0_i32_0 : i32, i32, i32
  }
  func.func @transform_1(%arg0: i32, %arg1: i32) -> (i32, i32) {
    %c0_i32 = arith.constant 0 : i32
    %c0_i32_0 = arith.constant 0 : i32
    return %c0_i32, %arg0 : i32, i32
  }
  func.func @transform_2(%arg0: i32, %arg1: i32) -> (i32, i32, i32) {
    %c0_i32 = arith.constant 0 : i32
    %c0_i32_0 = arith.constant 0 : i32
    return %arg1, %c0_i32, %arg0 : i32, i32, i32
  }
  func.func @transform_3(%arg0: i32, %arg1: i32) -> (i32, i32, i32) {
    %c0_i32 = arith.constant 0 : i32
    %c0_i32_0 = arith.constant 0 : i32
    return %arg1, %c0_i32, %arg0 : i32, i32, i32
  }
}

module attributes {stable_mosaic.version = 11 : i64} {
  func.func @_upsample_relu_add_kernel(%arg0: i32, %arg1: i32, %arg2: memref<1x8x4xf32, #tpu.memory_space<vmem>>, %arg3: memref<4x128xf32, #tpu.memory_space<vmem>>, %arg4: memref<1x8x128xf32, #tpu.memory_space<vmem>>, %arg5: memref<1x8x128xf32, #tpu.memory_space<vmem>>) attributes {dimension_semantics = [#tpu.dimension_semantics<parallel>, #tpu.dimension_semantics<parallel>], iteration_bounds = array<i64: 2, 2>, scalar_prefetch = 0 : i64, scratch_operands = 0 : i64, tpu.core_type = #tpu.core_type<tc>, window_params = [{transform_indices = @transform_0, window_bounds = array<i64: 1, 8, 4>}, {transform_indices = @transform_1, window_bounds = array<i64: 4, 128>}, {transform_indices = @transform_2, window_bounds = array<i64: 1, 8, 128>}, {transform_indices = @transform_3, window_bounds = array<i64: 1, 8, 128>}]} {
    %c0 = arith.constant 0 : index
    %c0_0 = arith.constant 0 : index
    %c0_1 = arith.constant 0 : index
    %0 = vector.load %arg2[%c0, %c0_0, %c0_1] : memref<1x8x4xf32, #tpu.memory_space<vmem>>, vector<1x8x4xf32>
    %1 = vector.shape_cast %0 : vector<1x8x4xf32> to vector<8x4xf32>
    %c0_2 = arith.constant 0 : index
    %c0_3 = arith.constant 0 : index
    %2 = vector.load %arg3[%c0_2, %c0_3] : memref<4x128xf32, #tpu.memory_space<vmem>>, vector<4x128xf32>
    %cst = arith.constant dense<0.000000e+00> : vector<8x128xf32>
    %3 = tpu.matmul %1, %2, %cst {dimension_numbers = #tpu.dot_dimension_numbers<[1], [0], [0], [1], [0, 0, 1, 1], [], []>} : vector<8x4xf32>, vector<4x128xf32>, vector<8x128xf32> -> vector<8x128xf32>
    %c0_4 = arith.constant 0 : index
    %c0_5 = arith.constant 0 : index
    %c0_6 = arith.constant 0 : index
    %4 = vector.load %arg4[%c0_4, %c0_5, %c0_6] : memref<1x8x128xf32, #tpu.memory_space<vmem>>, vector<1x8x128xf32>
    %5 = vector.shape_cast %4 : vector<1x8x128xf32> to vector<8x128xf32>
    %cst_7 = arith.constant 0.000000e+00 : f32
    %6 = vector.broadcast %cst_7 : f32 to vector<8x128xf32>
    %7 = arith.maximumf %3, %6 : vector<8x128xf32>
    %8 = arith.addf %5, %7 : vector<8x128xf32>
    %c0_8 = arith.constant 0 : index
    %c0_9 = arith.constant 0 : index
    %c0_10 = arith.constant 0 : index
    %9 = vector.load %arg5[%c0_8, %c0_9, %c0_10] : memref<1x8x128xf32, #tpu.memory_space<vmem>>, vector<1x8x128xf32>
    %10 = vector.shape_cast %9 : vector<1x8x128xf32> to vector<8x128xf32>
    %11 = vector.shape_cast %8 : vector<8x128xf32> to vector<1x8x128xf32>
    tpu.vector_store %arg5[%c0_8, %c0_9, %c0_10], %11 {strides = array<i32>} : memref<1x8x128xf32, #tpu.memory_space<vmem>>, vector<1x8x128xf32>,
    return
  }
  func.func @transform_0(%arg0: i32, %arg1: i32) -> (i32, i32, i32) {
    %c0_i32 = arith.constant 0 : i32
    %c0_i32_0 = arith.constant 0 : i32
    %c0_i32_1 = arith.constant 0 : i32
    return %arg1, %c0_i32, %c0_i32_0 : i32, i32, i32
  }
  func.func @transform_1(%arg0: i32, %arg1: i32) -> (i32, i32) {
    %c0_i32 = arith.constant 0 : i32
    %c0_i32_0 = arith.constant 0 : i32
    return %c0_i32, %arg0 : i32, i32
  }
  func.func @transform_2(%arg0: i32, %arg1: i32) -> (i32, i32, i32) {
    %c0_i32 = arith.constant 0 : i32
    %c0_i32_0 = arith.constant 0 : i32
    return %arg1, %c0_i32, %arg0 : i32, i32, i32
  }
  func.func @transform_3(%arg0: i32, %arg1: i32) -> (i32, i32, i32) {
    %c0_i32 = arith.constant 0 : i32
    %c0_i32_0 = arith.constant 0 : i32
    return %arg1, %c0_i32, %arg0 : i32, i32, i32
  }
}

</mosaic_0001>

<llo_original>
// kernel: dcat_forward.8
$region0: #{dcat_forward.8}
  #allocation0 [shape = 'u32[]', space=smem, size = 0x4, offset = 0x4, fixed_abs, tag = 'smem constant byte address 0x4 - core index']
  #allocation1 [shape = 'u32[144,128]{1,0:T(1,128)}', space=vmem, size = 0x12000, scoped, tag = 'internal scratch']
  %s0 = inlined_call_operand.hbm [shape: bf16[8,512], index: 0, kind: input, shape index: {}]
  %s1 = inlined_call_operand.hbm [shape: bf16[512,8], index: 1, kind: input, shape index: {}]
  %s2 = inlined_call_operand.hbm [shape: f32[1,8], index: 2, kind: input, shape index: {}]
  %s3 = inlined_call_operand.hbm [shape: f32[1,8], index: 3, kind: input, shape index: {}]
  %s4 = inlined_call_operand.hbm [shape: f32[1,8], index: 4, kind: input, shape index: {}]
  %s5 = inlined_call_operand.hbm [shape: bf16[8,8], index: 5, kind: input, shape index: {}]
  %s6 = inlined_call_operand.hbm [shape: f32[1,8], index: 6, kind: input, shape index: {}]
  %s7 = inlined_call_operand.hbm [shape: f32[8,8], index: 7, kind: output, shape index: {}]
  %s8 = sld [smem:[#allocation0]]
  $region66: #{dcat_forward.8} parent=0
    _
  %s10 = ssub.s32 1, %s8
  %s11 = scalar_select 0, %s10, %s8
  $region1: #{dcat_forward.8} parent=0
    #allocation2 [shape = 'u8[8192]{0}', space=vmem, size = 0x2000, scoped, tag = 'input window, operand 0, single buffered']
    #allocation3 [shape = 's32[1]{0}', space=sflag, size = 0x4, scoped, tag = 'scoped memory for dcat_forward.8']
    #allocation4 [shape = 's32[1]{0}', space=sflag, size = 0x4, scoped, tag = 'scoped memory for dcat_forward.8']
    #allocation5 [shape = 'u8[131072]{0}', space=vmem, size = 0x20000, scoped, tag = 'input window, operand 1, single buffered']
    #allocation6 [shape = 's32[1]{0}', space=sflag, size = 0x4, scoped, tag = 'scoped memory for dcat_forward.8']
    #allocation7 [shape = 'u8[512]{0}', space=vmem, size = 0x400, scoped, tag = 'input window, operand 2, single buffered']
    #allocation8 [shape = 'u8[512]{0}', space=vmem, size = 0x400, scoped, tag = 'input window, operand 3, single buffered']
    #allocation9 [shape = 's32[1]{0}', space=sflag, size = 0x4, scoped, tag = 'scoped memory for dcat_forward.8']
    #allocation10 [shape = 'u8[512]{0}', space=vmem, size = 0x400, scoped, tag = 'input window, operand 4, single buffered']
    #allocation11 [shape = 'u8[2048]{0}', space=vmem, size = 0x800, scoped, tag = 'input window, operand 5, single buffered']
    #allocation12 [shape = 's32[1]{0}', space=sflag, size = 0x4, scoped, tag = 'scoped memory for dcat_forward.8']
    #allocation13 [shape = 'u8[512]{0}', space=vmem, size = 0x400, scoped, tag = 'input window, operand 6, single buffered']
    #allocation14 [shape = 'u8[4096]{0}', space=vmem, size = 0x1000, scoped, tag = 'output window, operand 0, single buffered']
    %12 = vsyncpa [#allocation3], 0
    %13 = vsyncpa [#allocation6], 0
    %14 = vsyncpa [#allocation9], 0
    %15 = vsyncpa [#allocation12], 0
    %16 = vsyncpa [#allocation4], 0
    // Predicated region
    $region2: #{dcat_forward.8} parent=1 // pred_check
      _
    $region3: #{dcat_forward.8} parent=1 // pred_check_branch
      %18 = sbr.rel (0) target = $region5
    $region4: #{dcat_forward.8} parent=1 // pred_region
      %s20 = ssub.s32 256, 256
      %21 = vsyncadd [#allocation3], %s20
      %s23 = sshll.u32 [#allocation2], 4
      %s24 = int_to_ptr.vmem [resolvable:$true] %s23
      %26 = dma.hbm_to_vmem [thread:$0]  %s0, 256, %s24, [#allocation3]
    $region5: #{dcat_forward.8} parent=1 // pred_fallthru
      _
    // Predicated region
    $region6: #{dcat_forward.8} parent=1 // pred_check
      _
    $region7: #{dcat_forward.8} parent=1 // pred_check_branch
      %28 = sbr.rel (0) target = $region9
    $region8: #{dcat_forward.8} parent=1 // pred_region
      %s30 = ssub.s32 4096, 4096
      %31 = vsyncadd [#allocation6], %s30
      %s32 = sshll.u32 [#allocation5], 4
      %s33 = int_to_ptr.vmem [resolvable:$true] %s32
      %38 = dma.hbm_to_vmem [thread:$0]  %s1, 4096, %s33, [#allocation6], 64, 64, 4
    $region9: #{dcat_forward.8} parent=1 // pred_fallthru
      _
    // Predicated region
    $region10: #{dcat_forward.8} parent=1 // pred_check
      _
    $region11: #{dcat_forward.8} parent=1 // pred_check_branch
      %40 = sbr.rel (0) target = $region13
    $region12: #{dcat_forward.8} parent=1 // pred_region
      %s42 = ssub.s32 16, 16
      %43 = vsyncadd [#allocation6], %s42
      %s45 = sshll.u32 [#allocation7], 4
      %s46 = int_to_ptr.vmem [resolvable:$true] %s45
      %48 = dma.hbm_to_vmem [thread:$0]  %s2, 16, %s46, [#allocation6]
    $region13: #{dcat_forward.8} parent=1 // pred_fallthru
      _
    // Predicated region
    $region14: #{dcat_forward.8} parent=1 // pred_check
      _
    $region15: #{dcat_forward.8} parent=1 // pred_check_branch
      %50 = sbr.rel (0) target = $region17
    $region16: #{dcat_forward.8} parent=1 // pred_region
      %s52 = ssub.s32 16, 16
      %53 = vsyncadd [#allocation9], %s52
      %s55 = sshll.u32 [#allocation8], 4
      %s56 = int_to_ptr.vmem [resolvable:$true] %s55
      %58 = dma.hbm_to_vmem [thread:$0]  %s3, 16, %s56, [#allocation9]
    $region17: #{dcat_forward.8} parent=1 // pred_fallthru
      _
    // Predicated region
    $region18: #{dcat_forward.8} parent=1 // pred_check
      _
    $region19: #{dcat_forward.8} parent=1 // pred_check_branch
      %60 = sbr.rel (0) target = $region21
    $region20: #{dcat_forward.8} parent=1 // pred_region
      %s62 = ssub.s32 16, 16
      %63 = vsyncadd [#allocation9], %s62
      %s65 = sshll.u32 [#allocation10], 4
      %s66 = int_to_ptr.vmem [resolvable:$true] %s65
      %68 = dma.hbm_to_vmem [thread:$0]  %s4, 16, %s66, [#allocation9]
    $region21: #{dcat_forward.8} parent=1 // pred_fallthru
      _
    // Predicated region
    $region22: #{dcat_forward.8} parent=1 // pred_check
      _
    $region23: #{dcat_forward.8} parent=1 // pred_check_branch
      %70 = sbr.rel (0) target = $region25
    $region24: #{dcat_forward.8} parent=1 // pred_region
      %s72 = ssub.s32 64, 64
      %73 = vsyncadd [#allocation12], %s72
      %s75 = sshll.u32 [#allocation11], 4
      %s76 = int_to_ptr.vmem [resolvable:$true] %s75
      %78 = dma.hbm_to_vmem [thread:$0]  %s5, 64, %s76, [#allocation12]
    $region25: #{dcat_forward.8} parent=1 // pred_fallthru
      _
    // Predicated region
    $region26: #{dcat_forward.8} parent=1 // pred_check
      _
    $region27: #{dcat_forward.8} parent=1 // pred_check_branch
      %80 = sbr.rel (0) target = $region29
    $region28: #{dcat_forward.8} parent=1 // pred_region
      %s82 = ssub.s32 16, 16
      %83 = vsyncadd [#allocation12], %s82
      %s85 = sshll.u32 [#allocation13], 4
      %s86 = int_to_ptr.vmem [resolvable:$true] %s85
      %88 = dma.hbm_to_vmem [thread:$0]  %s6, 16, %s86, [#allocation12]
    $region29: #{dcat_forward.8} parent=1 // pred_fallthru
      _
    // Predicated region
    $region30: #{dcat_forward.8} parent=1 // pred_check
      _
    $region31: #{dcat_forward.8} parent=1 // pred_check_branch
      %90 = sbr.rel (0) target = $region33
    $region32: #{dcat_forward.8} parent=1 // pred_region
      %91 = dma.done [#allocation3], 256
    $region33: #{dcat_forward.8} parent=1 // pred_fallthru
      _
    // Predicated region
    $region34: #{dcat_forward.8} parent=1 // pred_check
      _
    $region35: #{dcat_forward.8} parent=1 // pred_check_branch
      %93 = sbr.rel (0) target = $region37
    $region36: #{dcat_forward.8} parent=1 // pred_region
      %94 = dma.done [#allocation6], 4096
    $region37: #{dcat_forward.8} parent=1 // pred_fallthru
      _
    // Predicated region
    $region38: #{dcat_forward.8} parent=1 // pred_check
      _
    $region39: #{dcat_forward.8} parent=1 // pred_check_branch
      %96 = sbr.rel (0) target = $region41
    $region40: #{dcat_forward.8} parent=1 // pred_region
      %97 = dma.done [#allocation6], 16
    $region41: #{dcat_forward.8} parent=1 // pred_fallthru
      _
    // Predicated region
    $region42: #{dcat_forward.8} parent=1 // pred_check
      _
    $region43: #{dcat_forward.8} parent=1 // pred_check_branch
      %99 = sbr.rel (0) target = $region45
    $region44: #{dcat_forward.8} parent=1 // pred_region
      %100 = dma.done [#allocation9], 16
    $region45: #{dcat_forward.8} parent=1 // pred_fallthru
      _
    // Predicated region
    $region46: #{dcat_forward.8} parent=1 // pred_check
      _
    $region47: #{dcat_forward.8} parent=1 // pred_check_branch
      %102 = sbr.rel (0) target = $region49
    $region48: #{dcat_forward.8} parent=1 // pred_region
      %103 = dma.done [#allocation9], 16
    $region49: #{dcat_forward.8} parent=1 // pred_fallthru
      _
    // Predicated region
    $region50: #{dcat_forward.8} parent=1 // pred_check
      _
    $region51: #{dcat_forward.8} parent=1 // pred_check_branch
      %105 = sbr.rel (0) target = $region53
    $region52: #{dcat_forward.8} parent=1 // pred_region
      %106 = dma.done [#allocation12], 64
    $region53: #{dcat_forward.8} parent=1 // pred_fallthru
      _
    // Predicated region
    $region54: #{dcat_forward.8} parent=1 // pred_check
      _
    $region55: #{dcat_forward.8} parent=1 // pred_check_branch
      %108 = sbr.rel (0) target = $region57
    $region56: #{dcat_forward.8} parent=1 // pred_region
      %109 = dma.done [#allocation12], 16
    $region57: #{dcat_forward.8} parent=1 // pred_fallthru
      _
    %v111 = vld [vmem:[#allocation2] sm:$0xff]
    %v112 = vld [vmem:[#allocation2 + $0x8] sm:$0xff]
    %v113 = vld [vmem:[#allocation5] sm:$0xf]
    %v114 = vld [vmem:[#allocation5 + $0x4] sm:$0xf]
    %v115 = vld [vmem:[#allocation5 + $0x8] sm:$0xf]
    %v116 = vld [vmem:[#allocation5 + $0xc] sm:$0xf]
    %v117 = vld [vmem:[#allocation5 + $0x10] sm:$0xf]
    %v118 = vld [vmem:[#allocation5 + $0x14] sm:$0xf]
    %v119 = vld [vmem:[#allocation5 + $0x18] sm:$0xf]
    %v120 = vld [vmem:[#allocation5 + $0x1c] sm:$0xf]
    %v121 = vld [vmem:[#allocation5 + $0x20] sm:$0xf]
    %v122 = vld [vmem:[#allocation5 + $0x24] sm:$0xf]
    %v123 = vld [vmem:[#allocation5 + $0x28] sm:$0xf]
    %v124 = vld [vmem:[#allocation5 + $0x2c] sm:$0xf]
    %v125 = vld [vmem:[#allocation5 + $0x30] sm:$0xf]
    %v126 = vld [vmem:[#allocation5 + $0x34] sm:$0xf]
    %v127 = vld [vmem:[#allocation5 + $0x38] sm:$0xf]
    %v128 = vld [vmem:[#allocation5 + $0x3c] sm:$0xf]
    %v129 = vld [vmem:[#allocation5 + $0x40] sm:$0xf]
    %v130 = vld [vmem:[#allocation5 + $0x44] sm:$0xf]
    %v131 = vld [vmem:[#allocation5 + $0x48] sm:$0xf]
    %v132 = vld [vmem:[#allocation5 + $0x4c] sm:$0xf]
    %v133 = vld [vmem:[#allocation5 + $0x50] sm:$0xf]
    %v134 = vld [vmem:[#allocation5 + $0x54] sm:$0xf]
    %v135 = vld [vmem:[#allocation5 + $0x58] sm:$0xf]
    %v136 = vld [vmem:[#allocation5 + $0x5c] sm:$0xf]
    %v137 = vld [vmem:[#allocation5 + $0x60] sm:$0xf]
    %v138 = vld [vmem:[#allocation5 + $0x64] sm:$0xf]
    %v139 = vld [vmem:[#allocation5 + $0x68] sm:$0xf]
    %v140 = vld [vmem:[#allocation5 + $0x6c] sm:$0xf]
    %v141 = vld [vmem:[#allocation5 + $0x70] sm:$0xf]
    %v142 = vld [vmem:[#allocation5 + $0x74] sm:$0xf]
    %v143 = vld [vmem:[#allocation5 + $0x78] sm:$0xf]
    %v144 = vld [vmem:[#allocation5 + $0x7c] sm:$0xf]
    %v145 = vld [vmem:[#allocation5 + $0x80] sm:$0xf]
    %v146 = vld [vmem:[#allocation5 + $0x84] sm:$0xf]
    %v147 = vld [vmem:[#allocation5 + $0x88] sm:$0xf]
    %v148 = vld [vmem:[#allocation5 + $0x8c] sm:$0xf]
    %v149 = vld [vmem:[#allocation5 + $0x90] sm:$0xf]
    %v150 = vld [vmem:[#allocation5 + $0x94] sm:$0xf]
    %v151 = vld [vmem:[#allocation5 + $0x98] sm:$0xf]
    %v152 = vld [vmem:[#allocation5 + $0x9c] sm:$0xf]
    %v153 = vld [vmem:[#allocation5 + $0xa0] sm:$0xf]
    %v154 = vld [vmem:[#allocation5 + $0xa4] sm:$0xf]
    %v155 = vld [vmem:[#allocation5 + $0xa8] sm:$0xf]
    %v156 = vld [vmem:[#allocation5 + $0xac] sm:$0xf]
    %v157 = vld [vmem:[#allocation5 + $0xb0] sm:$0xf]
    %v158 = vld [vmem:[#allocation5 + $0xb4] sm:$0xf]
    %v159 = vld [vmem:[#allocation5 + $0xb8] sm:$0xf]
    %v160 = vld [vmem:[#allocation5 + $0xbc] sm:$0xf]
    %v161 = vld [vmem:[#allocation5 + $0xc0] sm:$0xf]
    %v162 = vld [vmem:[#allocation5 + $0xc4] sm:$0xf]
    %v163 = vld [vmem:[#allocation5 + $0xc8] sm:$0xf]
    %v164 = vld [vmem:[#allocation5 + $0xcc] sm:$0xf]
    %v165 = vld [vmem:[#allocation5 + $0xd0] sm:$0xf]
    %v166 = vld [vmem:[#allocation5 + $0xd4] sm:$0xf]
    %v167 = vld [vmem:[#allocation5 + $0xd8] sm:$0xf]
    %v168 = vld [vmem:[#allocation5 + $0xdc] sm:$0xf]
    %v169 = vld [vmem:[#allocation5 + $0xe0] sm:$0xf]
    %v170 = vld [vmem:[#allocation5 + $0xe4] sm:$0xf]
    %v171 = vld [vmem:[#allocation5 + $0xe8] sm:$0xf]
    %v172 = vld [vmem:[#allocation5 + $0xec] sm:$0xf]
    %v173 = vld [vmem:[#allocation5 + $0xf0] sm:$0xf]
    %v174 = vld [vmem:[#allocation5 + $0xf4] sm:$0xf]
    %v175 = vld [vmem:[#allocation5 + $0xf8] sm:$0xf]
    %v176 = vld [vmem:[#allocation5 + $0xfc] sm:$0xf]
    %v177 = vld [vmem:[#allocation7] sm:$0x1]
    %v179 = vlaneseq
    %v180 = vshrl.u32 %v179, 7
    %v181 = vsub.s32 0, %v180
    %v182 = vrot.slane %v177, %v181
    %v186 = vunpack.c.l.b16 %v111
    %v187 = vunpack.c.h.b16 %v111
    %v188 = vunpack.c.l.b16 %v112
    %v189 = vunpack.c.h.b16 %v112
    %v190 = vpack.c.b16 %v186, %v186
    %v191 = vpack.c.b16 %v187, %v187
    %v192 = vpack.c.b16 %v188, %v188
    %v193 = vpack.c.b16 %v189, %v189
    %v262 = vunpack.c.l.b16 %v113
    %v263 = vunpack.c.l.b16 %v114
    %v264 = vunpack.c.l.b16 %v115
    %v265 = vunpack.c.l.b16 %v116
    %v266 = vunpack.c.l.b16 %v117
    %v267 = vunpack.c.l.b16 %v118
    %v268 = vunpack.c.l.b16 %v119
    %v269 = vunpack.c.l.b16 %v120
    %v270 = vunpack.c.l.b16 %v121
    %v271 = vunpack.c.l.b16 %v122
    %v272 = vunpack.c.l.b16 %v123
    %v273 = vunpack.c.l.b16 %v124
    %v274 = vunpack.c.l.b16 %v125
    %v275 = vunpack.c.l.b16 %v126
    %v276 = vunpack.c.l.b16 %v127
    %v277 = vunpack.c.l.b16 %v128
    %v278 = vunpack.c.l.b16 %v129
    %v279 = vunpack.c.l.b16 %v130
    %v280 = vunpack.c.l.b16 %v131
    %v281 = vunpack.c.l.b16 %v132
    %v282 = vunpack.c.l.b16 %v133
    %v283 = vunpack.c.l.b16 %v134
    %v284 = vunpack.c.l.b16 %v135
    %v285 = vunpack.c.l.b16 %v136
    %v286 = vunpack.c.l.b16 %v137
    %v287 = vunpack.c.l.b16 %v138
    %v288 = vunpack.c.l.b16 %v139
    %v289 = vunpack.c.l.b16 %v140
    %v290 = vunpack.c.l.b16 %v141
    %v291 = vunpack.c.l.b16 %v142
    %v292 = vunpack.c.l.b16 %v143
    %v293 = vunpack.c.l.b16 %v144
    %v294 = vunpack.c.l.b16 %v145
    %v295 = vunpack.c.l.b16 %v146
    %v296 = vunpack.c.l.b16 %v147
    %v297 = vunpack.c.l.b16 %v148
    %v298 = vunpack.c.l.b16 %v149
    %v299 = vunpack.c.l.b16 %v150
    %v300 = vunpack.c.l.b16 %v151
    %v301 = vunpack.c.l.b16 %v152
    %v302 = vunpack.c.l.b16 %v153
    %v303 = vunpack.c.l.b16 %v154
    %v304 = vunpack.c.l.b16 %v155
    %v305 = vunpack.c.l.b16 %v156
    %v306 = vunpack.c.l.b16 %v157
    %v307 = vunpack.c.l.b16 %v158
    %v308 = vunpack.c.l.b16 %v159
    %v309 = vunpack.c.l.b16 %v160
    %v310 = vunpack.c.l.b16 %v161
    %v311 = vunpack.c.l.b16 %v162
    %v312 = vunpack.c.l.b16 %v163
    %v313 = vunpack.c.l.b16 %v164
    %v314 = vunpack.c.l.b16 %v165
    %v315 = vunpack.c.l.b16 %v166
    %v316 = vunpack.c.l.b16 %v167
    %v317 = vunpack.c.l.b16 %v168
    %v318 = vunpack.c.l.b16 %v169
    %v319 = vunpack.c.l.b16 %v170
    %v320 = vunpack.c.l.b16 %v171
    %v321 = vunpack.c.l.b16 %v172
    %v322 = vunpack.c.l.b16 %v173
    %v323 = vunpack.c.l.b16 %v174
    %v324 = vunpack.c.l.b16 %v175
    %v325 = vunpack.c.l.b16 %v176
    %v326 = vpack.c.b16 %v263, %v262
    %v327 = vpack.c.b16 %v265, %v264
    %v328 = vpack.c.b16 %v267, %v266
    %v329 = vpack.c.b16 %v269, %v268
    %v330 = vpack.c.b16 %v271, %v270
    %v331 = vpack.c.b16 %v273, %v272
    %v332 = vpack.c.b16 %v275, %v274
    %v333 = vpack.c.b16 %v277, %v276
    %v334 = vpack.c.b16 %v279, %v278
    %v335 = vpack.c.b16 %v281, %v280
    %v336 = vpack.c.b16 %v283, %v282
    %v337 = vpack.c.b16 %v285, %v284
    %v338 = vpack.c.b16 %v287, %v286
    %v339 = vpack.c.b16 %v289, %v288
    %v340 = vpack.c.b16 %v291, %v290
    %v341 = vpack.c.b16 %v293, %v292
    %v342 = vpack.c.b16 %v295, %v294
    %v343 = vpack.c.b16 %v297, %v296
    %v344 = vpack.c.b16 %v299, %v298
    %v345 = vpack.c.b16 %v301, %v300
    %v346 = vpack.c.b16 %v303, %v302
    %v347 = vpack.c.b16 %v305, %v304
    %v348 = vpack.c.b16 %v307, %v306
    %v349 = vpack.c.b16 %v309, %v308
    %v350 = vpack.c.b16 %v311, %v310
    %v351 = vpack.c.b16 %v313, %v312
    %v352 = vpack.c.b16 %v315, %v314
    %v353 = vpack.c.b16 %v317, %v316
    %v354 = vpack.c.b16 %v319, %v318
    %v355 = vpack.c.b16 %v321, %v320
    %v356 = vpack.c.b16 %v323, %v322
    %v357 = vpack.c.b16 %v325, %v324
    %390 = vmatprep.subr.bf16.mxu0 0
    %391 = vmatpush1.bf16.msra.mxu0 %v326
    %392 = vmatprep.subr.bf16.mxu0 0
    %393 = vmatpush1.bf16.msra.mxu0 %v327
    %394 = vmatprep.subr.bf16.mxu0 0
    %395 = vmatpush1.bf16.msra.mxu0 %v328
    %396 = vmatprep.subr.bf16.mxu0 0
    %397 = vmatpush1.bf16.msra.mxu0 %v329
    %398 = vmatprep.subr.bf16.mxu0 0
    %399 = vmatpush1.bf16.msra.mxu0 %v330
    %400 = vmatprep.subr.bf16.mxu0 0
    %401 = vmatpush1.bf16.msra.mxu0 %v331
    %402 = vmatprep.subr.bf16.mxu0 0
    %403 = vmatpush1.bf16.msra.mxu0 %v332
    %404 = vmatprep.subr.bf16.mxu0 0
    %405 = vmatpush1.bf16.msra.mxu0 %v333
    %406 = vmatprep.subr.bf16.mxu0 0
    %407 = vmatpush1.bf16.msra.mxu0 %v334
    %408 = vmatprep.subr.bf16.mxu0 0
    %409 = vmatpush1.bf16.msra.mxu0 %v335
    %410 = vmatprep.subr.bf16.mxu0 0
    %411 = vmatpush1.bf16.msra.mxu0 %v336
    %412 = vmatprep.subr.bf16.mxu0 0
    %413 = vmatpush1.bf16.msra.mxu0 %v337
    %414 = vmatprep.subr.bf16.mxu0 0
    %415 = vmatpush1.bf16.msra.mxu0 %v338
    %416 = vmatprep.subr.bf16.mxu0 0
    %417 = vmatpush1.bf16.msra.mxu0 %v339
    %418 = vmatprep.subr.bf16.mxu0 0
    %419 = vmatpush1.bf16.msra.mxu0 %v340
    %420 = vmatprep.subr.bf16.mxu0 0
    %421 = vmatpush1.bf16.msra.mxu0 %v341
    %422 = vmatprep.mubr.bf16.mxu0 %v191
    %423 = vmatmul.mubr.bf16.gmra.mrb[0].mxu0 %v190
    %v424 = vpop.f32.mrb[0].mxu0
    %v425 = vadd.f32 %v182, %v424
    %v426 = vpop.f32.mrb[0].mxu0
    %v427 = vpop.f32.mrb[0].mxu0
    %v428 = vpop.f32.mrb[0].mxu0
    %429 = vdwg.mxu0
    %430 = vmatprep.subr.bf16.mxu0 0
    %431 = vmatpush1.bf16.msra.mxu0 %v342
    %432 = vmatprep.subr.bf16.mxu0 0
    %433 = vmatpush1.bf16.msra.mxu0 %v343
    %434 = vmatprep.subr.bf16.mxu0 0
    %435 = vmatpush1.bf16.msra.mxu0 %v344
    %436 = vmatprep.subr.bf16.mxu0 0
    %437 = vmatpush1.bf16.msra.mxu0 %v345
    %438 = vmatprep.subr.bf16.mxu0 0
    %439 = vmatpush1.bf16.msra.mxu0 %v346
    %440 = vmatprep.subr.bf16.mxu0 0
    %441 = vmatpush1.bf16.msra.mxu0 %v347
    %442 = vmatprep.subr.bf16.mxu0 0
    %443 = vmatpush1.bf16.msra.mxu0 %v348
    %444 = vmatprep.subr.bf16.mxu0 0
    %445 = vmatpush1.bf16.msra.mxu0 %v349
    %446 = vmatprep.subr.bf16.mxu0 0
    %447 = vmatpush1.bf16.msra.mxu0 %v350
    %448 = vmatprep.subr.bf16.mxu0 0
    %449 = vmatpush1.bf16.msra.mxu0 %v351
    %450 = vmatprep.subr.bf16.mxu0 0
    %451 = vmatpush1.bf16.msra.mxu0 %v352
    %452 = vmatprep.subr.bf16.mxu0 0
    %453 = vmatpush1.bf16.msra.mxu0 %v353
    %454 = vmatprep.subr.bf16.mxu0 0
    %455 = vmatpush1.bf16.msra.mxu0 %v354
    %456 = vmatprep.subr.bf16.mxu0 0
    %457 = vmatpush1.bf16.msra.mxu0 %v355
    %458 = vmatprep.subr.bf16.mxu0 0
    %459 = vmatpush1.bf16.msra.mxu0 %v356
    %460 = vmatprep.subr.bf16.mxu0 0
    %461 = vmatpush1.bf16.msra.mxu0 %v357
    %462 = vmatprep.mubr.bf16.mxu0 %v193
    %463 = vmatmul.mubr.bf16.gmra.mrb[0].mxu0 %v192
    %v464 = vpop.f32.mrb[0].mxu0
    %v465 = vadd.f32 %v425, %v464
    %v466 = vpop.f32.mrb[0].mxu0
    %v467 = vpop.f32.mrb[0].mxu0
    %v468 = vpop.f32.mrb[0].mxu0
    %469 = vdwg.mxu0
    %vm470 = vcmask 64512
    %v471 = vsel %vm470, %v465, 0.0
    %472 = vadd.xlane.f32.xlu0 %v471
    %v473 = vpop.xlane.xlu0 %472
    %v474 = vrcp.pop 8.0
    %v475 = vmul.f32 %v473, %v474
    %v476 = vmul.f32 %v465, %v465
    %v477 = vsel %vm470, %v476, 0.0
    %478 = vadd.xlane.f32.xlu0 %v477
    %v479 = vpop.xlane.xlu0 %478
    %v480 = vmul.f32 %v479, %v474
    %v481 = vmul.f32 %v475, %v475
    %v482 = vsub.f32 %v480, %v481
    %v483 = vmax.f32 %v482, 0.0
    %v484 = vsub.f32 %v465, %v475
    %v485 = vadd.f32 %v483, 1e-05
    %v486 = vrsqrt.pop %v485
    %v487 = vmul.f32 %v484, %v486
    %v488 = vld [vmem:[#allocation8] sm:$0x1]
    %v490 = vlaneseq
    %v491 = vshrl.u32 %v490, 7
    %v492 = vsub.s32 0, %v491
    %v493 = vrot.slane %v488, %v492
    %v495 = vmul.f32 %v487, %v493
    %v496 = vld [vmem:[#allocation10] sm:$0x1]
    %v498 = vlaneseq
    %v499 = vshrl.u32 %v498, 7
    %v500 = vsub.s32 0, %v499
    %v501 = vrot.slane %v496, %v500
    %v503 = vadd.f32 %v495, %v501
    %v504 = vadd.f32 %v503, %v465
    %v505 = vpack.c.bf16 %v504, %v504
    %v506 = vld [vmem:[#allocation11] sm:$0xf]
    %v507 = vld [vmem:[#allocation13] sm:$0x1]
    %v509 = vlaneseq
    %v510 = vshrl.u32 %v509, 7
    %v511 = vsub.s32 0, %v510
    %v512 = vrot.slane %v507, %v511
    %v515 = vsel %vm470, %v505, 0
    %vm517 = vcmask 1043456
    %v519 = vsel %vm517, %v506, 0
    %521 = vmatprep.subr.bf16.mxu0 0
    %522 = vmatpush1.bf16.msra.mxu0 %v519
    %523 = vmatprep.subr.bf16.mxu0 0
    %524 = vmatpush1.bf16.msra.mxu0 0
    %525 = vmatprep.subr.bf16.mxu0 0
    %526 = vmatpush1.bf16.msra.mxu0 0
    %527 = vmatprep.subr.bf16.mxu0 0
    %528 = vmatpush1.bf16.msra.mxu0 0
    %529 = vmatprep.subr.bf16.mxu0 0
    %530 = vmatpush1.bf16.msra.mxu0 0
    %531 = vmatprep.subr.bf16.mxu0 0
    %532 = vmatpush1.bf16.msra.mxu0 0
    %533 = vmatprep.subr.bf16.mxu0 0
    %534 = vmatpush1.bf16.msra.mxu0 0
    %535 = vmatprep.subr.bf16.mxu0 0
    %536 = vmatpush1.bf16.msra.mxu0 0
    %537 = vmatprep.subr.bf16.mxu0 0
    %538 = vmatpush1.bf16.msra.mxu0 0
    %539 = vmatprep.subr.bf16.mxu0 0
    %540 = vmatpush1.bf16.msra.mxu0 0
    %541 = vmatprep.subr.bf16.mxu0 0
    %542 = vmatpush1.bf16.msra.mxu0 0
    %543 = vmatprep.subr.bf16.mxu0 0
    %544 = vmatpush1.bf16.msra.mxu0 0
    %545 = vmatprep.subr.bf16.mxu0 0
    %546 = vmatpush1.bf16.msra.mxu0 0
    %547 = vmatprep.subr.bf16.mxu0 0
    %548 = vmatpush1.bf16.msra.mxu0 0
    %549 = vmatprep.subr.bf16.mxu0 0
    %550 = vmatpush1.bf16.msra.mxu0 0
    %551 = vmatprep.subr.bf16.mxu0 0
    %552 = vmatpush1.bf16.msra.mxu0 0
    %553 = vmatprep.mubr.bf16.mxu0 0
    %554 = vmatmul.mubr.bf16.gmra.mrb[0].mxu0 %v515
    %v555 = vpop.f32.mrb[0].mxu0
    %v556 = vadd.f32 %v512, %v555
    %v557 = vpop.f32.mrb[0].mxu0
    %v558 = vpop.f32.mrb[0].mxu0
    %v559 = vpop.f32.mrb[0].mxu0
    %560 = vdwg.mxu0
    %561 = vst.msk [vmem:[#allocation14] sm:$0xff] %vm470, %v556
    // Predicated region
    $region58: #{dcat_forward.8} parent=1 // pred_check
      _
    $region59: #{dcat_forward.8} parent=1 // pred_check_branch
      %563 = sbr.rel (0) target = $region61
    $region60: #{dcat_forward.8} parent=1 // pred_region
      %s565 = ssub.s32 128, 128
      %566 = vsyncadd [#allocation4], %s565
      %s568 = sshll.u32 [#allocation14], 4
      %s569 = int_to_ptr.vmem [resolvable:$true] %s568
      %571 = dma.vmem_to_hbm [thread:$0]  %s569, 128, %s7, [#allocation4]
    $region61: #{dcat_forward.8} parent=1 // pred_fallthru
      _
    // Predicated region
    $region62: #{dcat_forward.8} parent=1 // pred_check
      _
    $region63: #{dcat_forward.8} parent=1 // pred_check_branch
      %573 = sbr.rel (0) target = $region65
    $region64: #{dcat_forward.8} parent=1 // pred_region
      %574 = dma.done [#allocation4], 128
    $region65: #{dcat_forward.8} parent=1 // pred_fallthru
      _
    %575 = vsyncpa [#allocation3], 1
    %576 = vsyncpa [#allocation6], 1
    %577 = vsyncpa [#allocation9], 1
    %578 = vsyncpa [#allocation12], 1
    %579 = vsyncpa [#allocation4], 1

// kernel: dcat_forward.10
$region0: #{dcat_forward.10}
  #allocation0 [shape = 'u32[]', space=smem, size = 0x4, offset = 0x4, fixed_abs, tag = 'smem constant byte address 0x4 - core index']
  #allocation1 [shape = 'u32[144,128]{1,0:T(1,128)}', space=vmem, size = 0x12000, scoped, tag = 'internal scratch']
  %s0 = inlined_call_operand.hbm [shape: bf16[8,256], index: 0, kind: input, shape index: {}]
  %s1 = inlined_call_operand.hbm [shape: bf16[256,16], index: 1, kind: input, shape index: {}]
  %s2 = inlined_call_operand.hbm [shape: f32[1,16], index: 2, kind: input, shape index: {}]
  %s3 = inlined_call_operand.hbm [shape: f32[1,16], index: 3, kind: input, shape index: {}]
  %s4 = inlined_call_operand.hbm [shape: f32[1,16], index: 4, kind: input, shape index: {}]
  %s5 = inlined_call_operand.hbm [shape: bf16[16,16], index: 5, kind: input, shape index: {}]
  %s6 = inlined_call_operand.hbm [shape: f32[1,16], index: 6, kind: input, shape index: {}]
  %s7 = inlined_call_operand.hbm [shape: f32[8,16], index: 7, kind: output, shape index: {}]
  %s8 = sld [smem:[#allocation0]]
  $region66: #{dcat_forward.10} parent=0
    _
  %s10 = ssub.s32 1, %s8
  %s11 = scalar_select 0, %s10, %s8
  $region1: #{dcat_forward.10} parent=0
    #allocation2 [shape = 'u8[4096]{0}', space=vmem, size = 0x1000, scoped, tag = 'input window, operand 0, single buffered']
    #allocation3 [shape = 's32[1]{0}', space=sflag, size = 0x4, scoped, tag = 'scoped memory for dcat_forward.10']
    #allocation4 [shape = 's32[1]{0}', space=sflag, size = 0x4, scoped, tag = 'scoped memory for dcat_forward.10']
    #allocation5 [shape = 'u8[65536]{0}', space=vmem, size = 0x10000, scoped, tag = 'input window, operand 1, single buffered']
    #allocation6 [shape = 's32[1]{0}', space=sflag, size = 0x4, scoped, tag = 'scoped memory for dcat_forward.10']
    #allocation7 [shape = 'u8[512]{0}', space=vmem, size = 0x400, scoped, tag = 'input window, operand 2, single buffered']
    #allocation8 [shape = 'u8[512]{0}', space=vmem, size = 0x400, scoped, tag = 'input window, operand 3, single buffered']
    #allocation9 [shape = 's32[1]{0}', space=sflag, size = 0x4, scoped, tag = 'scoped memory for dcat_forward.10']
    #allocation10 [shape = 'u8[512]{0}', space=vmem, size = 0x400, scoped, tag = 'input window, operand 4, single buffered']
    #allocation11 [shape = 'u8[4096]{0}', space=vmem, size = 0x1000, scoped, tag = 'input window, operand 5, single buffered']
    #allocation12 [shape = 's32[1]{0}', space=sflag, size = 0x4, scoped, tag = 'scoped memory for dcat_forward.10']
    #allocation13 [shape = 'u8[512]{0}', space=vmem, size = 0x400, scoped, tag = 'input window, operand 6, single buffered']
    #allocation14 [shape = 'u8[4096]{0}', space=vmem, size = 0x1000, scoped, tag = 'output window, operand 0, single buffered']
    %12 = vsyncpa [#allocation3], 0
    %13 = vsyncpa [#allocation6], 0
    %14 = vsyncpa [#allocation9], 0
    %15 = vsyncpa [#allocation12], 0
    %16 = vsyncpa [#allocation4], 0
    // Predicated region
    $region2: #{dcat_forward.10} parent=1 // pred_check
      _
    $region3: #{dcat_forward.10} parent=1 // pred_check_branch
      %18 = sbr.rel (0) target = $region5
    $region4: #{dcat_forward.10} parent=1 // pred_region
      %s20 = ssub.s32 128, 128
      %21 = vsyncadd [#allocation3], %s20
      %s23 = sshll.u32 [#allocation2], 4
      %s24 = int_to_ptr.vmem [resolvable:$true] %s23
      %26 = dma.hbm_to_vmem [thread:$0]  %s0, 128, %s24, [#allocation3]
    $region5: #{dcat_forward.10} parent=1 // pred_fallthru
      _
    // Predicated region
    $region6: #{dcat_forward.10} parent=1 // pred_check
      _
    $region7: #{dcat_forward.10} parent=1 // pred_check_branch
      %28 = sbr.rel (0) target = $region9
    $region8: #{dcat_forward.10} parent=1 // pred_region
      %s30 = ssub.s32 2048, 2048
      %31 = vsyncadd [#allocation6], %s30
      %s32 = sshll.u32 [#allocation5], 4
      %s33 = int_to_ptr.vmem [resolvable:$true] %s32
      %38 = dma.hbm_to_vmem [thread:$0]  %s1, 2048, %s33, [#allocation6], 64, 64, 4
    $region9: #{dcat_forward.10} parent=1 // pred_fallthru
      _
    // Predicated region
    $region10: #{dcat_forward.10} parent=1 // pred_check
      _
    $region11: #{dcat_forward.10} parent=1 // pred_check_branch
      %40 = sbr.rel (0) target = $region13
    $region12: #{dcat_forward.10} parent=1 // pred_region
      %s42 = ssub.s32 16, 16
      %43 = vsyncadd [#allocation6], %s42
      %s45 = sshll.u32 [#allocation7], 4
      %s46 = int_to_ptr.vmem [resolvable:$true] %s45
      %48 = dma.hbm_to_vmem [thread:$0]  %s2, 16, %s46, [#allocation6]
    $region13: #{dcat_forward.10} parent=1 // pred_fallthru
      _
    // Predicated region
    $region14: #{dcat_forward.10} parent=1 // pred_check
      _
    $region15: #{dcat_forward.10} parent=1 // pred_check_branch
      %50 = sbr.rel (0) target = $region17
    $region16: #{dcat_forward.10} parent=1 // pred_region
      %s52 = ssub.s32 16, 16
      %53 = vsyncadd [#allocation9], %s52
      %s55 = sshll.u32 [#allocation8], 4
      %s56 = int_to_ptr.vmem [resolvable:$true] %s55
      %58 = dma.hbm_to_vmem [thread:$0]  %s3, 16, %s56, [#allocation9]
    $region17: #{dcat_forward.10} parent=1 // pred_fallthru
      _
    // Predicated region
    $region18: #{dcat_forward.10} parent=1 // pred_check
      _
    $region19: #{dcat_forward.10} parent=1 // pred_check_branch
      %60 = sbr.rel (0) target = $region21
    $region20: #{dcat_forward.10} parent=1 // pred_region
      %s62 = ssub.s32 16, 16
      %63 = vsyncadd [#allocation9], %s62
      %s65 = sshll.u32 [#allocation10], 4
      %s66 = int_to_ptr.vmem [resolvable:$true] %s65
      %68 = dma.hbm_to_vmem [thread:$0]  %s4, 16, %s66, [#allocation9]
    $region21: #{dcat_forward.10} parent=1 // pred_fallthru
      _
    // Predicated region
    $region22: #{dcat_forward.10} parent=1 // pred_check
      _
    $region23: #{dcat_forward.10} parent=1 // pred_check_branch
      %70 = sbr.rel (0) target = $region25
    $region24: #{dcat_forward.10} parent=1 // pred_region
      %s72 = ssub.s32 128, 128
      %73 = vsyncadd [#allocation12], %s72
      %s74 = sshll.u32 [#allocation11], 4
      %s75 = int_to_ptr.vmem [resolvable:$true] %s74
      %80 = dma.hbm_to_vmem [thread:$0]  %s5, 128, %s75, [#allocation12], 64, 64, 4
    $region25: #{dcat_forward.10} parent=1 // pred_fallthru
      _
    // Predicated region
    $region26: #{dcat_forward.10} parent=1 // pred_check
      _
    $region27: #{dcat_forward.10} parent=1 // pred_check_branch
      %82 = sbr.rel (0) target = $region29
    $region28: #{dcat_forward.10} parent=1 // pred_region
      %s84 = ssub.s32 16, 16
      %85 = vsyncadd [#allocation12], %s84
      %s87 = sshll.u32 [#allocation13], 4
      %s88 = int_to_ptr.vmem [resolvable:$true] %s87
      %90 = dma.hbm_to_vmem [thread:$0]  %s6, 16, %s88, [#allocation12]
    $region29: #{dcat_forward.10} parent=1 // pred_fallthru
      _
    // Predicated region
    $region30: #{dcat_forward.10} parent=1 // pred_check
      _
    $region31: #{dcat_forward.10} parent=1 // pred_check_branch
      %92 = sbr.rel (0) target = $region33
    $region32: #{dcat_forward.10} parent=1 // pred_region
      %93 = dma.done [#allocation3], 128
    $region33: #{dcat_forward.10} parent=1 // pred_fallthru
      _
    // Predicated region
    $region34: #{dcat_forward.10} parent=1 // pred_check
      _
    $region35: #{dcat_forward.10} parent=1 // pred_check_branch
      %95 = sbr.rel (0) target = $region37
    $region36: #{dcat_forward.10} parent=1 // pred_region
      %96 = dma.done [#allocation6], 2048
    $region37: #{dcat_forward.10} parent=1 // pred_fallthru
      _
    // Predicated region
    $region38: #{dcat_forward.10} parent=1 // pred_check
      _
    $region39: #{dcat_forward.10} parent=1 // pred_check_branch
      %98 = sbr.rel (0) target = $region41
    $region40: #{dcat_forward.10} parent=1 // pred_region
      %99 = dma.done [#allocation6], 16
    $region41: #{dcat_forward.10} parent=1 // pred_fallthru
      _
    // Predicated region
    $region42: #{dcat_forward.10} parent=1 // pred_check
      _
    $region43: #{dcat_forward.10} parent=1 // pred_check_branch
      %101 = sbr.rel (0) target = $region45
    $region44: #{dcat_forward.10} parent=1 // pred_region
      %102 = dma.done [#allocation9], 16
    $region45: #{dcat_forward.10} parent=1 // pred_fallthru
      _
    // Predicated region
    $region46: #{dcat_forward.10} parent=1 // pred_check
      _
    $region47: #{dcat_forward.10} parent=1 // pred_check_branch
      %104 = sbr.rel (0) target = $region49
    $region48: #{dcat_forward.10} parent=1 // pred_region
      %105 = dma.done [#allocation9], 16
    $region49: #{dcat_forward.10} parent=1 // pred_fallthru
      _
    // Predicated region
    $region50: #{dcat_forward.10} parent=1 // pred_check
      _
    $region51: #{dcat_forward.10} parent=1 // pred_check_branch
      %107 = sbr.rel (0) target = $region53
    $region52: #{dcat_forward.10} parent=1 // pred_region
      %108 = dma.done [#allocation12], 128
    $region53: #{dcat_forward.10} parent=1 // pred_fallthru
      _
    // Predicated region
    $region54: #{dcat_forward.10} parent=1 // pred_check
      _
    $region55: #{dcat_forward.10} parent=1 // pred_check_branch
      %110 = sbr.rel (0) target = $region57
    $region56: #{dcat_forward.10} parent=1 // pred_region
      %111 = dma.done [#allocation12], 16
    $region57: #{dcat_forward.10} parent=1 // pred_fallthru
      _
    %v113 = vld [vmem:[#allocation2] sm:$0xff]
    %v114 = vld [vmem:[#allocation5] sm:$0xf]
    %v115 = vld [vmem:[#allocation5 + $0x4] sm:$0xf]
    %v116 = vld [vmem:[#allocation5 + $0x8] sm:$0xf]
    %v117 = vld [vmem:[#allocation5 + $0xc] sm:$0xf]
    %v118 = vld [vmem:[#allocation5 + $0x10] sm:$0xf]
    %v119 = vld [vmem:[#allocation5 + $0x14] sm:$0xf]
    %v120 = vld [vmem:[#allocation5 + $0x18] sm:$0xf]
    %v121 = vld [vmem:[#allocation5 + $0x1c] sm:$0xf]
    %v122 = vld [vmem:[#allocation5 + $0x20] sm:$0xf]
    %v123 = vld [vmem:[#allocation5 + $0x24] sm:$0xf]
    %v124 = vld [vmem:[#allocation5 + $0x28] sm:$0xf]
    %v125 = vld [vmem:[#allocation5 + $0x2c] sm:$0xf]
    %v126 = vld [vmem:[#allocation5 + $0x30] sm:$0xf]
    %v127 = vld [vmem:[#allocation5 + $0x34] sm:$0xf]
    %v128 = vld [vmem:[#allocation5 + $0x38] sm:$0xf]
    %v129 = vld [vmem:[#allocation5 + $0x3c] sm:$0xf]
    %v130 = vld [vmem:[#allocation5 + $0x40] sm:$0xf]
    %v131 = vld [vmem:[#allocation5 + $0x44] sm:$0xf]
    %v132 = vld [vmem:[#allocation5 + $0x48] sm:$0xf]
    %v133 = vld [vmem:[#allocation5 + $0x4c] sm:$0xf]
    %v134 = vld [vmem:[#allocation5 + $0x50] sm:$0xf]
    %v135 = vld [vmem:[#allocation5 + $0x54] sm:$0xf]
    %v136 = vld [vmem:[#allocation5 + $0x58] sm:$0xf]
    %v137 = vld [vmem:[#allocation5 + $0x5c] sm:$0xf]
    %v138 = vld [vmem:[#allocation5 + $0x60] sm:$0xf]
    %v139 = vld [vmem:[#allocation5 + $0x64] sm:$0xf]
    %v140 = vld [vmem:[#allocation5 + $0x68] sm:$0xf]
    %v141 = vld [vmem:[#allocation5 + $0x6c] sm:$0xf]
    %v142 = vld [vmem:[#allocation5 + $0x70] sm:$0xf]
    %v143 = vld [vmem:[#allocation5 + $0x74] sm:$0xf]
    %v144 = vld [vmem:[#allocation5 + $0x78] sm:$0xf]
    %v145 = vld [vmem:[#allocation5 + $0x7c] sm:$0xf]
    %v146 = vld [vmem:[#allocation7] sm:$0x1]
    %v148 = vlaneseq
    %v149 = vshrl.u32 %v148, 7
    %v150 = vsub.s32 0, %v149
    %v151 = vrot.slane %v146, %v150
    %v154 = vunpack.c.l.b16 %v113
    %v155 = vunpack.c.h.b16 %v113
    %v156 = vpack.c.b16 %v154, %v154
    %v157 = vpack.c.b16 %v155, %v155
    %v192 = vunpack.c.l.b16 %v114
    %v193 = vunpack.c.l.b16 %v115
    %v194 = vunpack.c.l.b16 %v116
    %v195 = vunpack.c.l.b16 %v117
    %v196 = vunpack.c.l.b16 %v118
    %v197 = vunpack.c.l.b16 %v119
    %v198 = vunpack.c.l.b16 %v120
    %v199 = vunpack.c.l.b16 %v121
    %v200 = vunpack.c.l.b16 %v122
    %v201 = vunpack.c.l.b16 %v123
    %v202 = vunpack.c.l.b16 %v124
    %v203 = vunpack.c.l.b16 %v125
    %v204 = vunpack.c.l.b16 %v126
    %v205 = vunpack.c.l.b16 %v127
    %v206 = vunpack.c.l.b16 %v128
    %v207 = vunpack.c.l.b16 %v129
    %v208 = vunpack.c.l.b16 %v130
    %v209 = vunpack.c.l.b16 %v131
    %v210 = vunpack.c.l.b16 %v132
    %v211 = vunpack.c.l.b16 %v133
    %v212 = vunpack.c.l.b16 %v134
    %v213 = vunpack.c.l.b16 %v135
    %v214 = vunpack.c.l.b16 %v136
    %v215 = vunpack.c.l.b16 %v137
    %v216 = vunpack.c.l.b16 %v138
    %v217 = vunpack.c.l.b16 %v139
    %v218 = vunpack.c.l.b16 %v140
    %v219 = vunpack.c.l.b16 %v141
    %v220 = vunpack.c.l.b16 %v142
    %v221 = vunpack.c.l.b16 %v143
    %v222 = vunpack.c.l.b16 %v144
    %v223 = vunpack.c.l.b16 %v145
    %v224 = vpack.c.b16 %v193, %v192
    %v225 = vpack.c.b16 %v195, %v194
    %v226 = vpack.c.b16 %v197, %v196
    %v227 = vpack.c.b16 %v199, %v198
    %v228 = vpack.c.b16 %v201, %v200
    %v229 = vpack.c.b16 %v203, %v202
    %v230 = vpack.c.b16 %v205, %v204
    %v231 = vpack.c.b16 %v207, %v206
    %v232 = vpack.c.b16 %v209, %v208
    %v233 = vpack.c.b16 %v211, %v210
    %v234 = vpack.c.b16 %v213, %v212
    %v235 = vpack.c.b16 %v215, %v214
    %v236 = vpack.c.b16 %v217, %v216
    %v237 = vpack.c.b16 %v219, %v218
    %v238 = vpack.c.b16 %v221, %v220
    %v239 = vpack.c.b16 %v223, %v222
    %256 = vmatprep.subr.bf16.mxu0 0
    %257 = vmatpush1.bf16.msra.mxu0 %v224
    %258 = vmatprep.subr.bf16.mxu0 0
    %259 = vmatpush1.bf16.msra.mxu0 %v225
    %260 = vmatprep.subr.bf16.mxu0 0
    %261 = vmatpush1.bf16.msra.mxu0 %v226
    %262 = vmatprep.subr.bf16.mxu0 0
    %263 = vmatpush1.bf16.msra.mxu0 %v227
    %264 = vmatprep.subr.bf16.mxu0 0
    %265 = vmatpush1.bf16.msra.mxu0 %v228
    %266 = vmatprep.subr.bf16.mxu0 0
    %267 = vmatpush1.bf16.msra.mxu0 %v229
    %268 = vmatprep.subr.bf16.mxu0 0
    %269 = vmatpush1.bf16.msra.mxu0 %v230
    %270 = vmatprep.subr.bf16.mxu0 0
    %271 = vmatpush1.bf16.msra.mxu0 %v231
    %272 = vmatprep.subr.bf16.mxu0 0
    %273 = vmatpush1.bf16.msra.mxu0 %v232
    %274 = vmatprep.subr.bf16.mxu0 0
    %275 = vmatpush1.bf16.msra.mxu0 %v233
    %276 = vmatprep.subr.bf16.mxu0 0
    %277 = vmatpush1.bf16.msra.mxu0 %v234
    %278 = vmatprep.subr.bf16.mxu0 0
    %279 = vmatpush1.bf16.msra.mxu0 %v235
    %280 = vmatprep.subr.bf16.mxu0 0
    %281 = vmatpush1.bf16.msra.mxu0 %v236
    %282 = vmatprep.subr.bf16.mxu0 0
    %283 = vmatpush1.bf16.msra.mxu0 %v237
    %284 = vmatprep.subr.bf16.mxu0 0
    %285 = vmatpush1.bf16.msra.mxu0 %v238
    %286 = vmatprep.subr.bf16.mxu0 0
    %287 = vmatpush1.bf16.msra.mxu0 %v239
    %288 = vmatprep.mubr.bf16.mxu0 %v157
    %289 = vmatmul.mubr.bf16.gmra.mrb[0].mxu0 %v156
    %v290 = vpop.f32.mrb[0].mxu0
    %v291 = vadd.f32 %v151, %v290
    %v292 = vpop.f32.mrb[0].mxu0
    %v293 = vpop.f32.mrb[0].mxu0
    %v294 = vpop.f32.mrb[0].mxu0
    %295 = vdwg.mxu0
    %vm296 = vcmask 130048
    %v297 = vsel %vm296, %v291, 0.0
    %298 = vadd.xlane.f32.xlu0 %v297
    %v299 = vpop.xlane.xlu0 %298
    %v300 = vrcp.pop 16.0
    %v301 = vmul.f32 %v299, %v300
    %v302 = vmul.f32 %v291, %v291
    %v303 = vsel %vm296, %v302, 0.0
    %304 = vadd.xlane.f32.xlu0 %v303
    %v305 = vpop.xlane.xlu0 %304
    %v306 = vmul.f32 %v305, %v300
    %v307 = vmul.f32 %v301, %v301
    %v308 = vsub.f32 %v306, %v307
    %v309 = vmax.f32 %v308, 0.0
    %v310 = vsub.f32 %v291, %v301
    %v311 = vadd.f32 %v309, 1e-05
    %v312 = vrsqrt.pop %v311
    %v313 = vmul.f32 %v310, %v312
    %v314 = vld [vmem:[#allocation8] sm:$0x1]
    %v316 = vlaneseq
    %v317 = vshrl.u32 %v316, 7
    %v318 = vsub.s32 0, %v317
    %v319 = vrot.slane %v314, %v318
    %v321 = vmul.f32 %v313, %v319
    %v322 = vld [vmem:[#allocation10] sm:$0x1]
    %v324 = vlaneseq
    %v325 = vshrl.u32 %v324, 7
    %v326 = vsub.s32 0, %v325
    %v327 = vrot.slane %v322, %v326
    %v329 = vadd.f32 %v321, %v327
    %v330 = vadd.f32 %v329, %v291
    %v331 = vpack.c.bf16 %v330, %v330
    %v332 = vld [vmem:[#allocation11] sm:$0xf]
    %v333 = vld [vmem:[#allocation11 + $0x4] sm:$0xf]
    %v334 = vld [vmem:[#allocation13] sm:$0x1]
    %v336 = vlaneseq
    %v337 = vshrl.u32 %v336, 7
    %v338 = vsub.s32 0, %v337
    %v339 = vrot.slane %v334, %v338
    %v343 = vunpack.c.l.b16 %v332
    %v344 = vunpack.c.l.b16 %v333
    %v345 = vpack.c.b16 %v344, %v343
    %v348 = vsel %vm296, %v331, 0
    %350 = vmatprep.subr.bf16.mxu0 0
    %351 = vmatpush1.bf16.msra.mxu0 %v345
    %352 = vmatprep.subr.bf16.mxu0 0
    %353 = vmatpush1.bf16.msra.mxu0 0
    %354 = vmatprep.subr.bf16.mxu0 0
    %355 = vmatpush1.bf16.msra.mxu0 0
    %356 = vmatprep.subr.bf16.mxu0 0
    %357 = vmatpush1.bf16.msra.mxu0 0
    %358 = vmatprep.subr.bf16.mxu0 0
    %359 = vmatpush1.bf16.msra.mxu0 0
    %360 = vmatprep.subr.bf16.mxu0 0
    %361 = vmatpush1.bf16.msra.mxu0 0
    %362 = vmatprep.subr.bf16.mxu0 0
    %363 = vmatpush1.bf16.msra.mxu0 0
    %364 = vmatprep.subr.bf16.mxu0 0
    %365 = vmatpush1.bf16.msra.mxu0 0
    %366 = vmatprep.subr.bf16.mxu0 0
    %367 = vmatpush1.bf16.msra.mxu0 0
    %368 = vmatprep.subr.bf16.mxu0 0
    %369 = vmatpush1.bf16.msra.mxu0 0
    %370 = vmatprep.subr.bf16.mxu0 0
    %371 = vmatpush1.bf16.msra.mxu0 0
    %372 = vmatprep.subr.bf16.mxu0 0
    %373 = vmatpush1.bf16.msra.mxu0 0
    %374 = vmatprep.subr.bf16.mxu0 0
    %375 = vmatpush1.bf16.msra.mxu0 0
    %376 = vmatprep.subr.bf16.mxu0 0
    %377 = vmatpush1.bf16.msra.mxu0 0
    %378 = vmatprep.subr.bf16.mxu0 0
    %379 = vmatpush1.bf16.msra.mxu0 0
    %380 = vmatprep.subr.bf16.mxu0 0
    %381 = vmatpush1.bf16.msra.mxu0 0
    %382 = vmatprep.mubr.bf16.mxu0 0
    %383 = vmatmul.mubr.bf16.gmra.mrb[0].mxu0 %v348
    %v384 = vpop.f32.mrb[0].mxu0
    %v385 = vadd.f32 %v339, %v384
    %v386 = vpop.f32.mrb[0].mxu0
    %v387 = vpop.f32.mrb[0].mxu0
    %v388 = vpop.f32.mrb[0].mxu0
    %389 = vdwg.mxu0
    %390 = vst.msk [vmem:[#allocation14] sm:$0xff] %vm296, %v385
    // Predicated region
    $region58: #{dcat_forward.10} parent=1 // pred_check
      _
    $region59: #{dcat_forward.10} parent=1 // pred_check_branch
      %392 = sbr.rel (0) target = $region61
    $region60: #{dcat_forward.10} parent=1 // pred_region
      %s394 = ssub.s32 128, 128
      %395 = vsyncadd [#allocation4], %s394
      %s397 = sshll.u32 [#allocation14], 4
      %s398 = int_to_ptr.vmem [resolvable:$true] %s397
      %400 = dma.vmem_to_hbm [thread:$0]  %s398, 128, %s7, [#allocation4]
    $region61: #{dcat_forward.10} parent=1 // pred_fallthru
      _
    // Predicated region
    $region62: #{dcat_forward.10} parent=1 // pred_check
      _
    $region63: #{dcat_forward.10} parent=1 // pred_check_branch
      %402 = sbr.rel (0) target = $region65
    $region64: #{dcat_forward.10} parent=1 // pred_region
      %403 = dma.done [#allocation4], 128
    $region65: #{dcat_forward.10} parent=1 // pred_fallthru
      _
    %404 = vsyncpa [#allocation3], 1
    %405 = vsyncpa [#allocation6], 1
    %406 = vsyncpa [#allocation9], 1
    %407 = vsyncpa [#allocation12], 1
    %408 = vsyncpa [#allocation4], 1

// kernel: dcat_forward.11
$region0: #{dcat_forward.11}
  #allocation0 [shape = 'u32[]', space=smem, size = 0x4, offset = 0x4, fixed_abs, tag = 'smem constant byte address 0x4 - core index']
  #allocation1 [shape = 'u32[144,128]{1,0:T(1,128)}', space=vmem, size = 0x12000, scoped, tag = 'internal scratch']
  %s0 = inlined_call_operand.hbm [shape: f32[2,16,4], index: 0, kind: input, shape index: {}]
  %s1 = inlined_call_operand.hbm [shape: f32[4,64], index: 1, kind: input, shape index: {}]
  %s2 = inlined_call_operand.hbm [shape: f32[2,16,64], index: 2, kind: input, shape index: {}]
  %s3 = inlined_call_operand.hbm [shape: f32[2,16,64], index: 3, kind: output, shape index: {}]
  %s4 = sld [smem:[#allocation0]]
  $region57: #{dcat_forward.11} parent=0
    _
  %s6 = ssub.s32 1, %s4
  %s7 = scalar_select 0, %s6, %s4
  $region1: #{dcat_forward.11} parent=0
    #allocation2 [shape = 'u8[16384]{0}', space=vmem, size = 0x4000, scoped, tag = 'input window, operand 0']
    #allocation3 [shape = 's32[2]{0}', space=sflag, size = 0x8, scoped, tag = 'scoped memory for dcat_forward.11']
    #allocation4 [shape = 's32[2]{0}', space=sflag, size = 0x8, scoped, tag = 'scoped memory for dcat_forward.11']
    #allocation5 [shape = 'u8[2048]{0}', space=vmem, size = 0x800, scoped, tag = 'input window, operand 1, single buffered']
    #allocation6 [shape = 's32[1]{0}', space=sflag, size = 0x4, scoped, tag = 'scoped memory for dcat_forward.11']
    #allocation7 [shape = 'u8[16384]{0}', space=vmem, size = 0x4000, scoped, tag = 'input window, operand 2']
    #allocation8 [shape = 'u8[16384]{0}', space=vmem, size = 0x4000, scoped, tag = 'output window, operand 0']
    %8 = vsyncpa [#allocation3], 0
    %s9 = scalar_lea.sflag [#allocation3], 1
    %10 = vsyncpa %s9, 0
    %11 = vsyncpa [#allocation6], 0
    %12 = vsyncpa [#allocation4], 0
    %s13 = scalar_lea.sflag [#allocation4], 1
    %14 = vsyncpa %s13, 0
    loop: start=0, step=1, limit=4
    $region2: #{dcat_forward.11} parent=1 // loop_pre_header
      _
    $region3: #{dcat_forward.11} parent=1 // loop_header
      %s16 = sphi 0, %s20
      %p17 = scmp.ge.s32.totalorder %s16, 4
      %s23 = sphi 0, %s35
      %s24 = sphi 0, %s31
      %s25 = sphi 0, %s23
      %s26 = sphi 0, %s24
      %s27 = sphi 0, %s25
      %s28 = sphi 0, %s26
      %s38 = sphi 0, %s40
      %s41 = sphi 0, %s38
      %s42 = sphi 0, %s41
      %s58 = sphi 0, %s42
      %s64 = sphi 0, %s66
      %s67 = sphi 0, %s64
      %s68 = sphi 0, %s67
      %s84 = sphi 0, %s68
      %s92 = sphi 0, %s94
      %s95 = sphi 0, %s92
      %s96 = sphi 0, %s95
      %s112 = sphi 0, %s96
      %s120 = sphi 0, %s122
      %s123 = sphi 0, %s120
      %s124 = sphi 0, %s123
      %s140 = sphi 0, %s124
    $region4: #{dcat_forward.11} parent=1 // loop_header_branch
      %19 = sbr.rel (%p17) target = $region8
    $region5: #{dcat_forward.11} parent=1 // loop_body
      %s21 = ssub.s32 %s16, 1
      %s22 = ssub.s32 %s16, 2
      %s29 = sadd.s32 1, %s24
      %p30 = scmp.ge.s32.totalorder %s29, 2
      %s31 = scalar_select %p30, 0, %s29
      %s32 = sadd.s32 1, %s23
      %s33 = scalar_select %p30, %s32, %s23
      %p34 = scmp.ge.s32.totalorder %s33, 1
      %s35 = scalar_select %p34, 0, %s33
      %s36 = ssub.s32 %s24, %s31
      %p37 = scmp.eq.s32.totalorder %s36, 0
      %s39 = sadd.s32 %s38, 1
      %s40 = scalar_select %p37, %s38, %s39
      %p43 = pneg %p37
      %p44 = scmp.eq.s32.totalorder %s16, 1
      %p45 = por %p43, %p44
      %p46 = scmp.ne.s32.totalorder %s38, %s41
      %p47 = scmp.eq.s32.totalorder %s16, 0
      %p48 = por %p46, %p47
      %p49 = scmp.ne.s32.totalorder %s38, %s41
      %p50 = scmp.eq.s32.totalorder %s21, 1
      %p51 = por %p49, %p50
      %p52 = scmp.ne.s32.totalorder %s41, %s42
      %p53 = scmp.eq.s32.totalorder %s21, 0
      %p54 = por %p52, %p53
      %p55 = scmp.ne.s32.totalorder %s41, %s42
      %p56 = scmp.eq.s32.totalorder %s22, 1
      %p57 = por %p55, %p56
      %p59 = scmp.ne.s32.totalorder %s42, %s58
      %p60 = scmp.eq.s32.totalorder %s22, 0
      %p61 = por %p59, %p60
      %s62 = ssub.s32 %s23, %s35
      %p63 = scmp.eq.s32.totalorder %s62, 0
      %s65 = sadd.s32 %s64, 1
      %s66 = scalar_select %p63, %s64, %s65
      %p69 = pneg %p63
      %p70 = scmp.eq.s32.totalorder %s16, 1
      %p71 = por %p69, %p70
      %p72 = scmp.ne.s32.totalorder %s64, %s67
      %p73 = scmp.eq.s32.totalorder %s16, 0
      %p74 = por %p72, %p73
      %p75 = scmp.ne.s32.totalorder %s64, %s67
      %p76 = scmp.eq.s32.totalorder %s21, 1
      %p77 = por %p75, %p76
      %p78 = scmp.ne.s32.totalorder %s67, %s68
      %p79 = scmp.eq.s32.totalorder %s21, 0
      %p80 = por %p78, %p79
      %p81 = scmp.ne.s32.totalorder %s67, %s68
      %p82 = scmp.eq.s32.totalorder %s22, 1
      %p83 = por %p81, %p82
      %p85 = scmp.ne.s32.totalorder %s68, %s84
      %p86 = scmp.eq.s32.totalorder %s22, 0
      %p87 = por %p85, %p86
      %s88 = ssub.s32 %s24, %s31
      %s89 = ssub.s32 %s23, %s35
      %s90 = sor.u32 %s88, %s89
      %p91 = scmp.eq.s32.totalorder %s90, 0
      %s93 = sadd.s32 %s92, 1
      %s94 = scalar_select %p91, %s92, %s93
      %p97 = pneg %p91
      %p98 = scmp.eq.s32.totalorder %s16, 1
      %p99 = por %p97, %p98
      %p100 = scmp.ne.s32.totalorder %s92, %s95
      %p101 = scmp.eq.s32.totalorder %s16, 0
      %p102 = por %p100, %p101
      %p103 = scmp.ne.s32.totalorder %s92, %s95
      %p104 = scmp.eq.s32.totalorder %s21, 1
      %p105 = por %p103, %p104
      %p106 = scmp.ne.s32.totalorder %s95, %s96
      %p107 = scmp.eq.s32.totalorder %s21, 0
      %p108 = por %p106, %p107
      %p109 = scmp.ne.s32.totalorder %s95, %s96
      %p110 = scmp.eq.s32.totalorder %s22, 1
      %p111 = por %p109, %p110
      %p113 = scmp.ne.s32.totalorder %s96, %s112
      %p114 = scmp.eq.s32.totalorder %s22, 0
      %p115 = por %p113, %p114
      %s116 = ssub.s32 %s24, %s31
      %s117 = ssub.s32 %s23, %s35
      %s118 = sor.u32 %s116, %s117
      %p119 = scmp.eq.s32.totalorder %s118, 0
      %s121 = sadd.s32 %s120, 1
      %s122 = scalar_select %p119, %s120, %s121
      %p125 = pneg %p119
      %p126 = scmp.eq.s32.totalorder %s16, 1
      %p127 = por %p125, %p126
      %p128 = scmp.ne.s32.totalorder %s120, %s123
      %p129 = scmp.eq.s32.totalorder %s16, 0
      %p130 = por %p128, %p129
      %p131 = scmp.ne.s32.totalorder %s120, %s123
      %p132 = scmp.eq.s32.totalorder %s21, 1
      %p133 = por %p131, %p132
      %p134 = scmp.ne.s32.totalorder %s123, %s124
      %p135 = scmp.eq.s32.totalorder %s21, 0
      %p136 = por %p134, %p135
      %p137 = scmp.ne.s32.totalorder %s123, %s124
      %p138 = scmp.eq.s32.totalorder %s22, 1
      %p139 = por %p137, %p138
      %p141 = scmp.ne.s32.totalorder %s124, %s140
      %p142 = scmp.eq.s32.totalorder %s22, 0
      %p143 = por %p141, %p142
      %p144 = scmp.le.s32.totalorder 1, %s16
      %p145 = scmp.lt.s32.totalorder %s16, 3
      %p146 = pnand %p144, %p145
      %p147 = pneg %p146
      // Predicated region
      $region9: #{dcat_forward.11} parent=5 // pred_check
        _
      $region10: #{dcat_forward.11} parent=5 // pred_check_branch
        %149 = sbr.rel (%p146) target = $region12
      $region11: #{dcat_forward.11} parent=5 // pred_region
        %s150 = ssub.s32 %s16, 1
        // Predicated region
        $region13: #{dcat_forward.11} parent=11 // pred_check
          %p151 = pneg %p80
        $region14: #{dcat_forward.11} parent=11 // pred_check_branch
          %153 = sbr.rel (%p151) target = $region16
        $region15: #{dcat_forward.11} parent=11 // pred_region
          %s155 = ssub.s32 64, 64
          %156 = vsyncadd [#allocation6], %s155
          %s157 = smul.addr %s25, 64
          %s158 = scalar_lea.hbm %s1, %s157
          %s160 = sshll.u32 [#allocation5], 4
          %s161 = int_to_ptr.vmem [resolvable:$true] %s160
          %163 = dma.hbm_to_vmem [thread:$0]  %s158, 64, %s161, [#allocation6]
        $region16: #{dcat_forward.11} parent=11 // pred_fallthru
          _
      $region12: #{dcat_forward.11} parent=5 // pred_fallthru
        _
      %p164 = scmp.lt.s32.totalorder %s16, 2
      // Predicated region
      $region17: #{dcat_forward.11} parent=5 // pred_check
        %p165 = pneg %p164
      $region18: #{dcat_forward.11} parent=5 // pred_check_branch
        %167 = sbr.rel (%p165) target = $region20
      $region19: #{dcat_forward.11} parent=5 // pred_region
        // Predicated region
        $region21: #{dcat_forward.11} parent=19 // pred_check
          %p168 = pneg %p48
        $region22: #{dcat_forward.11} parent=19 // pred_check_branch
          %170 = sbr.rel (%p168) target = $region24
        $region23: #{dcat_forward.11} parent=19 // pred_region
          %s171 = sand.u32 %s16, 1
          %s172 = scalar_lea.sflag [#allocation3], %s171
          %s173 = sand.u32 %s38, 1
          %s174 = smul.addr %s173, 16
          %s175 = scalar_lea.vmem [#allocation2], %s174
          %s177 = ssub.s32 256, 256
          %178 = vsyncadd %s172, %s177
          %s179 = smul.addr %s24, 2
          %s180 = smul.addr %s179, 128
          %s181 = scalar_lea.hbm %s0, %s180
          %s182 = sshll.u32 %s175, 4
          %s183 = int_to_ptr.vmem [resolvable:$true] %s182
          %188 = dma.hbm_to_vmem [thread:$0]  %s181, 256, %s183, %s172, 128, 128, 8
        $region24: #{dcat_forward.11} parent=19 // pred_fallthru
          _
        // Predicated region
        $region25: #{dcat_forward.11} parent=19 // pred_check
          %p189 = pneg %p102
        $region26: #{dcat_forward.11} parent=19 // pred_check_branch
          %191 = sbr.rel (%p189) target = $region28
        $region27: #{dcat_forward.11} parent=19 // pred_region
          %s192 = sand.u32 %s16, 1
          %s193 = scalar_lea.sflag [#allocation3], %s192
          %s194 = sand.u32 %s92, 1
          %s195 = smul.addr %s194, 16
          %s196 = scalar_lea.vmem [#allocation7], %s195
          %s198 = ssub.s32 256, 256
          %199 = vsyncadd %s193, %s198
          %s200 = smul.addr %s24, 2
          %s201 = sadd.s32 %s23, %s200
          %s202 = smul.addr %s201, 128
          %s203 = scalar_lea.hbm %s2, %s202
          %s204 = sshll.u32 %s196, 4
          %s205 = int_to_ptr.vmem [resolvable:$true] %s204
          %210 = dma.hbm_to_vmem [thread:$0]  %s203, 256, %s205, %s193, 128, 128, 8
        $region28: #{dcat_forward.11} parent=19 // pred_fallthru
          _
      $region20: #{dcat_forward.11} parent=5 // pred_fallthru
        _
      %p211 = scmp.le.s32.totalorder 1, %s16
      %p212 = scmp.lt.s32.totalorder %s16, 3
      %p213 = pnand %p211, %p212
      %p214 = pneg %p213
      // Predicated region
      $region29: #{dcat_forward.11} parent=5 // pred_check
        _
      $region30: #{dcat_forward.11} parent=5 // pred_check_branch
        %216 = sbr.rel (%p213) target = $region32
      $region31: #{dcat_forward.11} parent=5 // pred_region
        %s217 = ssub.s32 %s16, 1
        %s218 = sand.u32 %s21, 1
        %s219 = scalar_lea.sflag [#allocation3], %s218
        %s220 = sand.u32 %s41, 1
        %s221 = smul.addr %s220, 16
        %s222 = scalar_lea.vmem [#allocation2], %s221
        // Predicated region
        $region33: #{dcat_forward.11} parent=31 // pred_check
          %p223 = pneg %p54
        $region34: #{dcat_forward.11} parent=31 // pred_check_branch
          %225 = sbr.rel (%p223) target = $region36
        $region35: #{dcat_forward.11} parent=31 // pred_region
          %226 = dma.done %s219, 256
        $region36: #{dcat_forward.11} parent=31 // pred_fallthru
          _
        // Predicated region
        $region37: #{dcat_forward.11} parent=31 // pred_check
          %p227 = pneg %p80
        $region38: #{dcat_forward.11} parent=31 // pred_check_branch
          %229 = sbr.rel (%p227) target = $region40
        $region39: #{dcat_forward.11} parent=31 // pred_region
          %230 = dma.done [#allocation6], 64
        $region40: #{dcat_forward.11} parent=31 // pred_fallthru
          _
        %s231 = sand.u32 %s21, 1
        %s232 = scalar_lea.sflag [#allocation3], %s231
        %s233 = sand.u32 %s95, 1
        %s234 = smul.addr %s233, 16
        %s235 = scalar_lea.vmem [#allocation7], %s234
        // Predicated region
        $region41: #{dcat_forward.11} parent=31 // pred_check
          %p236 = pneg %p108
        $region42: #{dcat_forward.11} parent=31 // pred_check_branch
          %238 = sbr.rel (%p236) target = $region44
        $region43: #{dcat_forward.11} parent=31 // pred_region
          %239 = dma.done %s232, 256
        $region44: #{dcat_forward.11} parent=31 // pred_fallthru
          _
        %s240 = sand.u32 %s21, 1
        %s241 = scalar_lea.sflag [#allocation3], %s240
        %s242 = sand.u32 %s41, 1
        %s243 = smul.addr %s242, 16
        %s244 = scalar_lea.vmem [#allocation2], %s243
        %p245 = pneg %p54
        %p246 = pneg %p51
        %p247 = pneg %p80
        %p248 = pneg %p77
        %s249 = sand.u32 %s21, 1
        %s250 = scalar_lea.sflag [#allocation3], %s249
        %s251 = sand.u32 %s95, 1
        %s252 = smul.addr %s251, 16
        %s253 = scalar_lea.vmem [#allocation7], %s252
        %p254 = pneg %p108
        %p255 = pneg %p105
        %p256 = pneg %p136
        %p257 = pneg %p133
        %s258 = sand.u32 %s123, 1
        %s259 = scalar_lea.sflag [#allocation4], %s258
        %s260 = sand.u32 %s123, 1
        %s261 = smul.addr %s260, 16
        %s262 = scalar_lea.vmem [#allocation8], %s261
        %v263 = vld [vmem:[%s222] sm:$0xff]
        %v264 = vld [vmem:[%s222 + $0x8] sm:$0xff]
        %v265 = vld [vmem:[#allocation5] sm:$0xf]
        %vm266 = vcmask 31744
        %v268 = vsel %vm266, %v263, 0
        %v271 = vsel %vm266, %v264, 0
        %vm273 = vcmask 1043456
        %v275 = vsel %vm273, %v265, 0
        %277 = vmatprep.subr.mxu0 0.0
        %278 = vmatpush1.msra.mxu0 %v275
        %279 = vmatprep.subr.mxu0 0.0
        %280 = vmatpush1.msra.mxu0 0.0
        %281 = vmatprep.subr.mxu0 0.0
        %282 = vmatpush1.msra.mxu0 0.0
        %283 = vmatprep.subr.mxu0 0.0
        %284 = vmatpush1.msra.mxu0 0.0
        %285 = vmatprep.subr.mxu0 0.0
        %286 = vmatpush1.msra.mxu0 0.0
        %287 = vmatprep.subr.mxu0 0.0
        %288 = vmatpush1.msra.mxu0 0.0
        %289 = vmatprep.subr.mxu0 0.0
        %290 = vmatpush1.msra.mxu0 0.0
        %291 = vmatprep.subr.mxu0 0.0
        %292 = vmatpush1.msra.mxu0 0.0
        %293 = vmatprep.subr.mxu0 0.0
        %294 = vmatpush1.msra.mxu0 0.0
        %295 = vmatprep.subr.mxu0 0.0
        %296 = vmatpush1.msra.mxu0 0.0
        %297 = vmatprep.subr.mxu0 0.0
        %298 = vmatpush1.msra.mxu0 0.0
        %299 = vmatprep.subr.mxu0 0.0
        %300 = vmatpush1.msra.mxu0 0.0
        %301 = vmatprep.subr.mxu0 0.0
        %302 = vmatpush1.msra.mxu0 0.0
        %303 = vmatprep.subr.mxu0 0.0
        %304 = vmatpush1.msra.mxu0 0.0
        %305 = vmatprep.subr.mxu0 0.0
        %306 = vmatpush1.msra.mxu0 0.0
        %307 = vmatprep.subr.mxu0 0.0
        %308 = vmatpush1.msra.mxu0 0.0
        %309 = vmatprep.subr.mxu0 0.0
        %310 = vmatpush1.msra.mxu0 0.0
        %311 = vmatprep.subr.mxu0 0.0
        %312 = vmatpush1.msra.mxu0 0.0
        %313 = vmatprep.subr.mxu0 0.0
        %314 = vmatpush1.msra.mxu0 0.0
        %315 = vmatprep.subr.mxu0 0.0
        %316 = vmatpush1.msra.mxu0 0.0
        %317 = vmatprep.subr.mxu0 0.0
        %318 = vmatpush1.msra.mxu0 0.0
        %319 = vmatprep.subr.mxu0 0.0
        %320 = vmatpush1.msra.mxu0 0.0
        %321 = vmatprep.subr.mxu0 0.0
        %322 = vmatpush1.msra.mxu0 0.0
        %323 = vmatprep.subr.mxu0 0.0
        %324 = vmatpush1.msra.mxu0 0.0
        %325 = vmatprep.subr.mxu0 0.0
        %326 = vmatpush1.msra.mxu0 0.0
        %327 = vmatprep.subr.mxu0 0.0
        %328 = vmatpush1.msra.mxu0 0.0
        %329 = vmatprep.subr.mxu0 0.0
        %330 = vmatpush1.msra.mxu0 0.0
        %331 = vmatprep.subr.mxu0 0.0
        %332 = vmatpush1.msra.mxu0 0.0
        %333 = vmatprep.subr.mxu0 0.0
        %334 = vmatpush1.msra.mxu0 0.0
        %335 = vmatprep.subr.mxu0 0.0
        %336 = vmatpush1.msra.mxu0 0.0
        %337 = vmatprep.subr.mxu0 0.0
        %338 = vmatpush1.msra.mxu0 0.0
        %339 = vmatprep.subr.mxu0 0.0
        %340 = vmatpush1.msra.mxu0 0.0
        %341 = vmatprep.mubr.f32.mxu0 0.0
        %342 = vmatmul.mubr.f32.gmra.mrb[0].mxu0 %v268
        %v343 = vpop.f32.mrb[0].mxu0
        %v344 = vadd.f32 0.0, %v343
        %v345 = vpop.f32.mrb[0].mxu0
        %346 = vmatprep.mubr.f32.mxu0 0.0
        %347 = vmatmul.mubr.f32.gmra.mrb[0].mxu0 %v271
        %v348 = vpop.f32.mrb[0].mxu0
        %v349 = vadd.f32 0.0, %v348
        %v350 = vpop.f32.mrb[0].mxu0
        %351 = vdwg.mxu0
        %v352 = vld [vmem:[%s235] sm:$0xff]
        %v353 = vld [vmem:[%s235 + $0x8] sm:$0xff]
        %v354 = vmax.f32 %v344, 0.0
        %v355 = vmax.f32 %v349, 0.0
        %v356 = vadd.f32 %v352, %v354
        %v357 = vadd.f32 %v353, %v355
        %vm358 = vcmask 523264
        %359 = vst.msk [vmem:[%s262] sm:$0xff] %vm358, %v356
        %360 = vst.msk [vmem:[%s262 + $0x8] sm:$0xff] %vm358, %v357
        %s361 = sand.u32 %s123, 1
        %s362 = scalar_lea.sflag [#allocation4], %s361
        %s363 = sand.u32 %s123, 1
        %s364 = smul.addr %s363, 16
        %s365 = scalar_lea.vmem [#allocation8], %s364
        // Predicated region
        $region45: #{dcat_forward.11} parent=31 // pred_check
          %p366 = pneg %p133
        $region46: #{dcat_forward.11} parent=31 // pred_check_branch
          %368 = sbr.rel (%p366) target = $region48
        $region47: #{dcat_forward.11} parent=31 // pred_region
          %s370 = ssub.s32 256, 256
          %371 = vsyncadd %s362, %s370
          %s372 = smul.addr %s26, 2
          %s373 = sadd.s32 %s25, %s372
          %s374 = smul.addr %s373, 128
          %s375 = scalar_lea.hbm %s3, %s374
          %s376 = sshll.u32 %s365, 4
          %s377 = int_to_ptr.vmem [resolvable:$true] %s376
          %382 = dma.vmem_to_hbm [thread:$0]  %s377, 256, %s375, %s362, 128, 128, 8
        $region48: #{dcat_forward.11} parent=31 // pred_fallthru
          _
      $region32: #{dcat_forward.11} parent=5 // pred_fallthru
        _
      %p383 = scmp.le.s32.totalorder 2, %s16
      // Predicated region
      $region49: #{dcat_forward.11} parent=5 // pred_check
        %p384 = pneg %p383
      $region50: #{dcat_forward.11} parent=5 // pred_check_branch
        %386 = sbr.rel (%p384) target = $region52
      $region51: #{dcat_forward.11} parent=5 // pred_region
        %s387 = ssub.s32 %s16, 2
        // Predicated region
        $region53: #{dcat_forward.11} parent=51 // pred_check
          %p388 = pneg %p139
        $region54: #{dcat_forward.11} parent=51 // pred_check_branch
          %390 = sbr.rel (%p388) target = $region56
        $region55: #{dcat_forward.11} parent=51 // pred_region
          %s391 = sand.u32 %s124, 1
          %s392 = scalar_lea.sflag [#allocation4], %s391
          %s393 = sand.u32 %s124, 1
          %s394 = smul.addr %s393, 16
          %s395 = scalar_lea.vmem [#allocation8], %s394
          %396 = dma.done %s392, 256
        $region56: #{dcat_forward.11} parent=51 // pred_fallthru
          _
      $region52: #{dcat_forward.11} parent=5 // pred_fallthru
        _
    $region6: #{dcat_forward.11} parent=1 // loop_footer
      %s20 = sadd.s32 1, %s16
    $region7: #{dcat_forward.11} parent=1 // loop_footer_branch
      %15 = sbr.rel target = $region3
    $region8: #{dcat_forward.11} parent=1 // loop_exit
      _
    %397 = vsyncpa [#allocation3], 1
    %s398 = scalar_lea.sflag [#allocation3], 1
    %399 = vsyncpa %s398, 1
    %400 = vsyncpa [#allocation6], 1
    %401 = vsyncpa [#allocation4], 1
    %s402 = scalar_lea.sflag [#allocation4], 1
    %403 = vsyncpa %s402, 1

// kernel: dcat_forward.12
$region0: #{dcat_forward.12}
  #allocation0 [shape = 'u32[]', space=smem, size = 0x4, offset = 0x4, fixed_abs, tag = 'smem constant byte address 0x4 - core index']
  #allocation1 [shape = 'u32[144,128]{1,0:T(1,128)}', space=vmem, size = 0x12000, scoped, tag = 'internal scratch']
  %s0 = inlined_call_operand.hbm [shape: bf16[8,128], index: 0, kind: input, shape index: {}]
  %s1 = inlined_call_operand.hbm [shape: bf16[128,32], index: 1, kind: input, shape index: {}]
  %s2 = inlined_call_operand.hbm [shape: f32[1,32], index: 2, kind: input, shape index: {}]
  %s3 = inlined_call_operand.hbm [shape: f32[1,32], index: 3, kind: input, shape index: {}]
  %s4 = inlined_call_operand.hbm [shape: f32[1,32], index: 4, kind: input, shape index: {}]
  %s5 = inlined_call_operand.hbm [shape: bf16[32,32], index: 5, kind: input, shape index: {}]
  %s6 = inlined_call_operand.hbm [shape: f32[1,32], index: 6, kind: input, shape index: {}]
  %s7 = inlined_call_operand.hbm [shape: f32[8,32], index: 7, kind: output, shape index: {}]
  %s8 = sld [smem:[#allocation0]]
  $region66: #{dcat_forward.12} parent=0
    _
  %s10 = ssub.s32 1, %s8
  %s11 = scalar_select 0, %s10, %s8
  $region1: #{dcat_forward.12} parent=0
    #allocation2 [shape = 'u8[2048]{0}', space=vmem, size = 0x800, scoped, tag = 'input window, operand 0, single buffered']
    #allocation3 [shape = 's32[1]{0}', space=sflag, size = 0x4, scoped, tag = 'scoped memory for dcat_forward.12']
    #allocation4 [shape = 's32[1]{0}', space=sflag, size = 0x4, scoped, tag = 'scoped memory for dcat_forward.12']
    #allocation5 [shape = 'u8[32768]{0}', space=vmem, size = 0x8000, scoped, tag = 'input window, operand 1, single buffered']
    #allocation6 [shape = 's32[1]{0}', space=sflag, size = 0x4, scoped, tag = 'scoped memory for dcat_forward.12']
    #allocation7 [shape = 'u8[512]{0}', space=vmem, size = 0x400, scoped, tag = 'input window, operand 2, single buffered']
    #allocation8 [shape = 'u8[512]{0}', space=vmem, size = 0x400, scoped, tag = 'input window, operand 3, single buffered']
    #allocation9 [shape = 's32[1]{0}', space=sflag, size = 0x4, scoped, tag = 'scoped memory for dcat_forward.12']
    #allocation10 [shape = 'u8[512]{0}', space=vmem, size = 0x400, scoped, tag = 'input window, operand 4, single buffered']
    #allocation11 [shape = 'u8[8192]{0}', space=vmem, size = 0x2000, scoped, tag = 'input window, operand 5, single buffered']
    #allocation12 [shape = 's32[1]{0}', space=sflag, size = 0x4, scoped, tag = 'scoped memory for dcat_forward.12']
    #allocation13 [shape = 'u8[512]{0}', space=vmem, size = 0x400, scoped, tag = 'input window, operand 6, single buffered']
    #allocation14 [shape = 'u8[4096]{0}', space=vmem, size = 0x1000, scoped, tag = 'output window, operand 0, single buffered']
    %12 = vsyncpa [#allocation3], 0
    %13 = vsyncpa [#allocation6], 0
    %14 = vsyncpa [#allocation9], 0
    %15 = vsyncpa [#allocation12], 0
    %16 = vsyncpa [#allocation4], 0
    // Predicated region
    $region2: #{dcat_forward.12} parent=1 // pred_check
      _
    $region3: #{dcat_forward.12} parent=1 // pred_check_branch
      %18 = sbr.rel (0) target = $region5
    $region4: #{dcat_forward.12} parent=1 // pred_region
      %s20 = ssub.s32 64, 64
      %21 = vsyncadd [#allocation3], %s20
      %s23 = sshll.u32 [#allocation2], 4
      %s24 = int_to_ptr.vmem [resolvable:$true] %s23
      %26 = dma.hbm_to_vmem [thread:$0]  %s0, 64, %s24, [#allocation3]
    $region5: #{dcat_forward.12} parent=1 // pred_fallthru
      _
    // Predicated region
    $region6: #{dcat_forward.12} parent=1 // pred_check
      _
    $region7: #{dcat_forward.12} parent=1 // pred_check_branch
      %28 = sbr.rel (0) target = $region9
    $region8: #{dcat_forward.12} parent=1 // pred_region
      %s30 = ssub.s32 1024, 1024
      %31 = vsyncadd [#allocation6], %s30
      %s32 = sshll.u32 [#allocation5], 4
      %s33 = int_to_ptr.vmem [resolvable:$true] %s32
      %38 = dma.hbm_to_vmem [thread:$0]  %s1, 1024, %s33, [#allocation6], 64, 64, 4
    $region9: #{dcat_forward.12} parent=1 // pred_fallthru
      _
    // Predicated region
    $region10: #{dcat_forward.12} parent=1 // pred_check
      _
    $region11: #{dcat_forward.12} parent=1 // pred_check_branch
      %40 = sbr.rel (0) target = $region13
    $region12: #{dcat_forward.12} parent=1 // pred_region
      %s42 = ssub.s32 16, 16
      %43 = vsyncadd [#allocation6], %s42
      %s45 = sshll.u32 [#allocation7], 4
      %s46 = int_to_ptr.vmem [resolvable:$true] %s45
      %48 = dma.hbm_to_vmem [thread:$0]  %s2, 16, %s46, [#allocation6]
    $region13: #{dcat_forward.12} parent=1 // pred_fallthru
      _
    // Predicated region
    $region14: #{dcat_forward.12} parent=1 // pred_check
      _
    $region15: #{dcat_forward.12} parent=1 // pred_check_branch
      %50 = sbr.rel (0) target = $region17
    $region16: #{dcat_forward.12} parent=1 // pred_region
      %s52 = ssub.s32 16, 16
      %53 = vsyncadd [#allocation9], %s52
      %s55 = sshll.u32 [#allocation8], 4
      %s56 = int_to_ptr.vmem [resolvable:$true] %s55
      %58 = dma.hbm_to_vmem [thread:$0]  %s3, 16, %s56, [#allocation9]
    $region17: #{dcat_forward.12} parent=1 // pred_fallthru
      _
    // Predicated region
    $region18: #{dcat_forward.12} parent=1 // pred_check
      _
    $region19: #{dcat_forward.12} parent=1 // pred_check_branch
      %60 = sbr.rel (0) target = $region21
    $region20: #{dcat_forward.12} parent=1 // pred_region
      %s62 = ssub.s32 16, 16
      %63 = vsyncadd [#allocation9], %s62
      %s65 = sshll.u32 [#allocation10], 4
      %s66 = int_to_ptr.vmem [resolvable:$true] %s65
      %68 = dma.hbm_to_vmem [thread:$0]  %s4, 16, %s66, [#allocation9]
    $region21: #{dcat_forward.12} parent=1 // pred_fallthru
      _
    // Predicated region
    $region22: #{dcat_forward.12} parent=1 // pred_check
      _
    $region23: #{dcat_forward.12} parent=1 // pred_check_branch
      %70 = sbr.rel (0) target = $region25
    $region24: #{dcat_forward.12} parent=1 // pred_region
      %s72 = ssub.s32 256, 256
      %73 = vsyncadd [#allocation12], %s72
      %s74 = sshll.u32 [#allocation11], 4
      %s75 = int_to_ptr.vmem [resolvable:$true] %s74
      %80 = dma.hbm_to_vmem [thread:$0]  %s5, 256, %s75, [#allocation12], 64, 64, 4
    $region25: #{dcat_forward.12} parent=1 // pred_fallthru
      _
    // Predicated region
    $region26: #{dcat_forward.12} parent=1 // pred_check
      _
    $region27: #{dcat_forward.12} parent=1 // pred_check_branch
      %82 = sbr.rel (0) target = $region29
    $region28: #{dcat_forward.12} parent=1 // pred_region
      %s84 = ssub.s32 16, 16
      %85 = vsyncadd [#allocation12], %s84
      %s87 = sshll.u32 [#allocation13], 4
      %s88 = int_to_ptr.vmem [resolvable:$true] %s87
      %90 = dma.hbm_to_vmem [thread:$0]  %s6, 16, %s88, [#allocation12]
    $region29: #{dcat_forward.12} parent=1 // pred_fallthru
      _
    // Predicated region
    $region30: #{dcat_forward.12} parent=1 // pred_check
      _
    $region31: #{dcat_forward.12} parent=1 // pred_check_branch
      %92 = sbr.rel (0) target = $region33
    $region32: #{dcat_forward.12} parent=1 // pred_region
      %93 = dma.done [#allocation3], 64
    $region33: #{dcat_forward.12} parent=1 // pred_fallthru
      _
    // Predicated region
    $region34: #{dcat_forward.12} parent=1 // pred_check
      _
    $region35: #{dcat_forward.12} parent=1 // pred_check_branch
      %95 = sbr.rel (0) target = $region37
    $region36: #{dcat_forward.12} parent=1 // pred_region
      %96 = dma.done [#allocation6], 1024
    $region37: #{dcat_forward.12} parent=1 // pred_fallthru
      _
    // Predicated region
    $region38: #{dcat_forward.12} parent=1 // pred_check
      _
    $region39: #{dcat_forward.12} parent=1 // pred_check_branch
      %98 = sbr.rel (0) target = $region41
    $region40: #{dcat_forward.12} parent=1 // pred_region
      %99 = dma.done [#allocation6], 16
    $region41: #{dcat_forward.12} parent=1 // pred_fallthru
      _
    // Predicated region
    $region42: #{dcat_forward.12} parent=1 // pred_check
      _
    $region43: #{dcat_forward.12} parent=1 // pred_check_branch
      %101 = sbr.rel (0) target = $region45
    $region44: #{dcat_forward.12} parent=1 // pred_region
      %102 = dma.done [#allocation9], 16
    $region45: #{dcat_forward.12} parent=1 // pred_fallthru
      _
    // Predicated region
    $region46: #{dcat_forward.12} parent=1 // pred_check
      _
    $region47: #{dcat_forward.12} parent=1 // pred_check_branch
      %104 = sbr.rel (0) target = $region49
    $region48: #{dcat_forward.12} parent=1 // pred_region
      %105 = dma.done [#allocation9], 16
    $region49: #{dcat_forward.12} parent=1 // pred_fallthru
      _
    // Predicated region
    $region50: #{dcat_forward.12} parent=1 // pred_check
      _
    $region51: #{dcat_forward.12} parent=1 // pred_check_branch
      %107 = sbr.rel (0) target = $region53
    $region52: #{dcat_forward.12} parent=1 // pred_region
      %108 = dma.done [#allocation12], 256
    $region53: #{dcat_forward.12} parent=1 // pred_fallthru
      _
    // Predicated region
    $region54: #{dcat_forward.12} parent=1 // pred_check
      _
    $region55: #{dcat_forward.12} parent=1 // pred_check_branch
      %110 = sbr.rel (0) target = $region57
    $region56: #{dcat_forward.12} parent=1 // pred_region
      %111 = dma.done [#allocation12], 16
    $region57: #{dcat_forward.12} parent=1 // pred_fallthru
      _
    %v113 = vld [vmem:[#allocation2] sm:$0xf]
    %v114 = vld [vmem:[#allocation5] sm:$0xf]
    %v115 = vld [vmem:[#allocation5 + $0x4] sm:$0xf]
    %v116 = vld [vmem:[#allocation5 + $0x8] sm:$0xf]
    %v117 = vld [vmem:[#allocation5 + $0xc] sm:$0xf]
    %v118 = vld [vmem:[#allocation5 + $0x10] sm:$0xf]
    %v119 = vld [vmem:[#allocation5 + $0x14] sm:$0xf]
    %v120 = vld [vmem:[#allocation5 + $0x18] sm:$0xf]
    %v121 = vld [vmem:[#allocation5 + $0x1c] sm:$0xf]
    %v122 = vld [vmem:[#allocation5 + $0x20] sm:$0xf]
    %v123 = vld [vmem:[#allocation5 + $0x24] sm:$0xf]
    %v124 = vld [vmem:[#allocation5 + $0x28] sm:$0xf]
    %v125 = vld [vmem:[#allocation5 + $0x2c] sm:$0xf]
    %v126 = vld [vmem:[#allocation5 + $0x30] sm:$0xf]
    %v127 = vld [vmem:[#allocation5 + $0x34] sm:$0xf]
    %v128 = vld [vmem:[#allocation5 + $0x38] sm:$0xf]
    %v129 = vld [vmem:[#allocation5 + $0x3c] sm:$0xf]
    %v130 = vld [vmem:[#allocation7] sm:$0x1]
    %v132 = vlaneseq
    %v133 = vshrl.u32 %v132, 7
    %v134 = vsub.s32 0, %v133
    %v135 = vrot.slane %v130, %v134
    %v153 = vunpack.c.l.b16 %v114
    %v154 = vunpack.c.l.b16 %v115
    %v155 = vunpack.c.l.b16 %v116
    %v156 = vunpack.c.l.b16 %v117
    %v157 = vunpack.c.l.b16 %v118
    %v158 = vunpack.c.l.b16 %v119
    %v159 = vunpack.c.l.b16 %v120
    %v160 = vunpack.c.l.b16 %v121
    %v161 = vunpack.c.l.b16 %v122
    %v162 = vunpack.c.l.b16 %v123
    %v163 = vunpack.c.l.b16 %v124
    %v164 = vunpack.c.l.b16 %v125
    %v165 = vunpack.c.l.b16 %v126
    %v166 = vunpack.c.l.b16 %v127
    %v167 = vunpack.c.l.b16 %v128
    %v168 = vunpack.c.l.b16 %v129
    %v169 = vpack.c.b16 %v154, %v153
    %v170 = vpack.c.b16 %v156, %v155
    %v171 = vpack.c.b16 %v158, %v157
    %v172 = vpack.c.b16 %v160, %v159
    %v173 = vpack.c.b16 %v162, %v161
    %v174 = vpack.c.b16 %v164, %v163
    %v175 = vpack.c.b16 %v166, %v165
    %v176 = vpack.c.b16 %v168, %v167
    %185 = vmatprep.subr.bf16.mxu0 0
    %186 = vmatpush1.bf16.msra.mxu0 %v169
    %187 = vmatprep.subr.bf16.mxu0 0
    %188 = vmatpush1.bf16.msra.mxu0 %v170
    %189 = vmatprep.subr.bf16.mxu0 0
    %190 = vmatpush1.bf16.msra.mxu0 %v171
    %191 = vmatprep.subr.bf16.mxu0 0
    %192 = vmatpush1.bf16.msra.mxu0 %v172
    %193 = vmatprep.subr.bf16.mxu0 0
    %194 = vmatpush1.bf16.msra.mxu0 %v173
    %195 = vmatprep.subr.bf16.mxu0 0
    %196 = vmatpush1.bf16.msra.mxu0 %v174
    %197 = vmatprep.subr.bf16.mxu0 0
    %198 = vmatpush1.bf16.msra.mxu0 %v175
    %199 = vmatprep.subr.bf16.mxu0 0
    %200 = vmatpush1.bf16.msra.mxu0 %v176
    %201 = vmatprep.subr.bf16.mxu0 0
    %202 = vmatpush1.bf16.msra.mxu0 0
    %203 = vmatprep.subr.bf16.mxu0 0
    %204 = vmatpush1.bf16.msra.mxu0 0
    %205 = vmatprep.subr.bf16.mxu0 0
    %206 = vmatpush1.bf16.msra.mxu0 0
    %207 = vmatprep.subr.bf16.mxu0 0
    %208 = vmatpush1.bf16.msra.mxu0 0
    %209 = vmatprep.subr.bf16.mxu0 0
    %210 = vmatpush1.bf16.msra.mxu0 0
    %211 = vmatprep.subr.bf16.mxu0 0
    %212 = vmatpush1.bf16.msra.mxu0 0
    %213 = vmatprep.subr.bf16.mxu0 0
    %214 = vmatpush1.bf16.msra.mxu0 0
    %215 = vmatprep.subr.bf16.mxu0 0
    %216 = vmatpush1.bf16.msra.mxu0 0
    %217 = vmatprep.mubr.bf16.mxu0 0
    %218 = vmatmul.mubr.bf16.gmra.mrb[0].mxu0 %v113
    %v219 = vpop.f32.mrb[0].mxu0
    %v220 = vadd.f32 %v135, %v219
    %v221 = vpop.f32.mrb[0].mxu0
    %v222 = vpop.f32.mrb[0].mxu0
    %v223 = vpop.f32.mrb[0].mxu0
    %224 = vdwg.mxu0
    %vm225 = vcmask 261120
    %v226 = vsel %vm225, %v220, 0.0
    %227 = vadd.xlane.f32.xlu0 %v226
    %v228 = vpop.xlane.xlu0 %227
    %v229 = vrcp.pop 32.0
    %v230 = vmul.f32 %v228, %v229
    %v231 = vmul.f32 %v220, %v220
    %v232 = vsel %vm225, %v231, 0.0
    %233 = vadd.xlane.f32.xlu0 %v232
    %v234 = vpop.xlane.xlu0 %233
    %v235 = vmul.f32 %v234, %v229
    %v236 = vmul.f32 %v230, %v230
    %v237 = vsub.f32 %v235, %v236
    %v238 = vmax.f32 %v237, 0.0
    %v239 = vsub.f32 %v220, %v230
    %v240 = vadd.f32 %v238, 1e-05
    %v241 = vrsqrt.pop %v240
    %v242 = vmul.f32 %v239, %v241
    %v243 = vld [vmem:[#allocation8] sm:$0x1]
    %v245 = vlaneseq
    %v246 = vshrl.u32 %v245, 7
    %v247 = vsub.s32 0, %v246
    %v248 = vrot.slane %v243, %v247
    %v250 = vmul.f32 %v242, %v248
    %v251 = vld [vmem:[#allocation10] sm:$0x1]
    %v253 = vlaneseq
    %v254 = vshrl.u32 %v253, 7
    %v255 = vsub.s32 0, %v254
    %v256 = vrot.slane %v251, %v255
    %v258 = vadd.f32 %v250, %v256
    %v259 = vadd.f32 %v258, %v220
    %v260 = vpack.c.bf16 %v259, %v259
    %v261 = vld [vmem:[#allocation11] sm:$0xf]
    %v262 = vld [vmem:[#allocation11 + $0x4] sm:$0xf]
    %v263 = vld [vmem:[#allocation11 + $0x8] sm:$0xf]
    %v264 = vld [vmem:[#allocation11 + $0xc] sm:$0xf]
    %v265 = vld [vmem:[#allocation13] sm:$0x1]
    %v267 = vlaneseq
    %v268 = vshrl.u32 %v267, 7
    %v269 = vsub.s32 0, %v268
    %v270 = vrot.slane %v265, %v269
    %v276 = vunpack.c.l.b16 %v261
    %v277 = vunpack.c.l.b16 %v262
    %v278 = vunpack.c.l.b16 %v263
    %v279 = vunpack.c.l.b16 %v264
    %v280 = vpack.c.b16 %v277, %v276
    %v281 = vpack.c.b16 %v279, %v278
    %v285 = vsel %vm225, %v260, 0
    %287 = vmatprep.subr.bf16.mxu0 0
    %288 = vmatpush1.bf16.msra.mxu0 %v280
    %289 = vmatprep.subr.bf16.mxu0 0
    %290 = vmatpush1.bf16.msra.mxu0 %v281
    %291 = vmatprep.subr.bf16.mxu0 0
    %292 = vmatpush1.bf16.msra.mxu0 0
    %293 = vmatprep.subr.bf16.mxu0 0
    %294 = vmatpush1.bf16.msra.mxu0 0
    %295 = vmatprep.subr.bf16.mxu0 0
    %296 = vmatpush1.bf16.msra.mxu0 0
    %297 = vmatprep.subr.bf16.mxu0 0
    %298 = vmatpush1.bf16.msra.mxu0 0
    %299 = vmatprep.subr.bf16.mxu0 0
    %300 = vmatpush1.bf16.msra.mxu0 0
    %301 = vmatprep.subr.bf16.mxu0 0
    %302 = vmatpush1.bf16.msra.mxu0 0
    %303 = vmatprep.subr.bf16.mxu0 0
    %304 = vmatpush1.bf16.msra.mxu0 0
    %305 = vmatprep.subr.bf16.mxu0 0
    %306 = vmatpush1.bf16.msra.mxu0 0
    %307 = vmatprep.subr.bf16.mxu0 0
    %308 = vmatpush1.bf16.msra.mxu0 0
    %309 = vmatprep.subr.bf16.mxu0 0
    %310 = vmatpush1.bf16.msra.mxu0 0
    %311 = vmatprep.subr.bf16.mxu0 0
    %312 = vmatpush1.bf16.msra.mxu0 0
    %313 = vmatprep.subr.bf16.mxu0 0
    %314 = vmatpush1.bf16.msra.mxu0 0
    %315 = vmatprep.subr.bf16.mxu0 0
    %316 = vmatpush1.bf16.msra.mxu0 0
    %317 = vmatprep.subr.bf16.mxu0 0
    %318 = vmatpush1.bf16.msra.mxu0 0
    %319 = vmatprep.mubr.bf16.mxu0 0
    %320 = vmatmul.mubr.bf16.gmra.mrb[0].mxu0 %v285
    %v321 = vpop.f32.mrb[0].mxu0
    %v322 = vadd.f32 %v270, %v321
    %v323 = vpop.f32.mrb[0].mxu0
    %v324 = vpop.f32.mrb[0].mxu0
    %v325 = vpop.f32.mrb[0].mxu0
    %326 = vdwg.mxu0
    %327 = vst.msk [vmem:[#allocation14] sm:$0xff] %vm225, %v322
    // Predicated region
    $region58: #{dcat_forward.12} parent=1 // pred_check
      _
    $region59: #{dcat_forward.12} parent=1 // pred_check_branch
      %329 = sbr.rel (0) target = $region61
    $region60: #{dcat_forward.12} parent=1 // pred_region
      %s331 = ssub.s32 128, 128
      %332 = vsyncadd [#allocation4], %s331
      %s334 = sshll.u32 [#allocation14], 4
      %s335 = int_to_ptr.vmem [resolvable:$true] %s334
      %337 = dma.vmem_to_hbm [thread:$0]  %s335, 128, %s7, [#allocation4]
    $region61: #{dcat_forward.12} parent=1 // pred_fallthru
      _
    // Predicated region
    $region62: #{dcat_forward.12} parent=1 // pred_check
      _
    $region63: #{dcat_forward.12} parent=1 // pred_check_branch
      %339 = sbr.rel (0) target = $region65
    $region64: #{dcat_forward.12} parent=1 // pred_region
      %340 = dma.done [#allocation4], 128
    $region65: #{dcat_forward.12} parent=1 // pred_fallthru
      _
    %341 = vsyncpa [#allocation3], 1
    %342 = vsyncpa [#allocation6], 1
    %343 = vsyncpa [#allocation9], 1
    %344 = vsyncpa [#allocation12], 1
    %345 = vsyncpa [#allocation4], 1

// kernel: dcat_forward.13
$region0: #{dcat_forward.13}
  #allocation0 [shape = 'u32[]', space=smem, size = 0x4, offset = 0x4, fixed_abs, tag = 'smem constant byte address 0x4 - core index']
  #allocation1 [shape = 'u32[144,128]{1,0:T(1,128)}', space=vmem, size = 0x12000, scoped, tag = 'internal scratch']
  %s0 = inlined_call_operand.hbm [shape: f32[2,32,4], index: 0, kind: input, shape index: {}]
  %s1 = inlined_call_operand.hbm [shape: f32[4,16], index: 1, kind: input, shape index: {}]
  %s2 = inlined_call_operand.hbm [shape: f32[2,32,16], index: 2, kind: input, shape index: {}]
  %s3 = inlined_call_operand.hbm [shape: f32[2,32,16], index: 3, kind: output, shape index: {}]
  %s4 = sld [smem:[#allocation0]]
  $region57: #{dcat_forward.13} parent=0
    _
  %s6 = ssub.s32 1, %s4
  %s7 = scalar_select 0, %s6, %s4
  $region1: #{dcat_forward.13} parent=0
    #allocation2 [shape = 'u8[32768]{0}', space=vmem, size = 0x8000, scoped, tag = 'input window, operand 0']
    #allocation3 [shape = 's32[2]{0}', space=sflag, size = 0x8, scoped, tag = 'scoped memory for dcat_forward.13']
    #allocation4 [shape = 's32[2]{0}', space=sflag, size = 0x8, scoped, tag = 'scoped memory for dcat_forward.13']
    #allocation5 [shape = 'u8[2048]{0}', space=vmem, size = 0x800, scoped, tag = 'input window, operand 1, single buffered']
    #allocation6 [shape = 's32[1]{0}', space=sflag, size = 0x4, scoped, tag = 'scoped memory for dcat_forward.13']
    #allocation7 [shape = 'u8[32768]{0}', space=vmem, size = 0x8000, scoped, tag = 'input window, operand 2']
    #allocation8 [shape = 'u8[32768]{0}', space=vmem, size = 0x8000, scoped, tag = 'output window, operand 0']
    %8 = vsyncpa [#allocation3], 0
    %s9 = scalar_lea.sflag [#allocation3], 1
    %10 = vsyncpa %s9, 0
    %11 = vsyncpa [#allocation6], 0
    %12 = vsyncpa [#allocation4], 0
    %s13 = scalar_lea.sflag [#allocation4], 1
    %14 = vsyncpa %s13, 0
    loop: start=0, step=1, limit=4
    $region2: #{dcat_forward.13} parent=1 // loop_pre_header
      _
    $region3: #{dcat_forward.13} parent=1 // loop_header
      %s16 = sphi 0, %s20
      %p17 = scmp.ge.s32.totalorder %s16, 4
      %s23 = sphi 0, %s35
      %s24 = sphi 0, %s31
      %s25 = sphi 0, %s23
      %s26 = sphi 0, %s24
      %s27 = sphi 0, %s25
      %s28 = sphi 0, %s26
      %s38 = sphi 0, %s40
      %s41 = sphi 0, %s38
      %s42 = sphi 0, %s41
      %s58 = sphi 0, %s42
      %s64 = sphi 0, %s66
      %s67 = sphi 0, %s64
      %s68 = sphi 0, %s67
      %s84 = sphi 0, %s68
      %s92 = sphi 0, %s94
      %s95 = sphi 0, %s92
      %s96 = sphi 0, %s95
      %s112 = sphi 0, %s96
      %s120 = sphi 0, %s122
      %s123 = sphi 0, %s120
      %s124 = sphi 0, %s123
      %s140 = sphi 0, %s124
    $region4: #{dcat_forward.13} parent=1 // loop_header_branch
      %19 = sbr.rel (%p17) target = $region8
    $region5: #{dcat_forward.13} parent=1 // loop_body
      %s21 = ssub.s32 %s16, 1
      %s22 = ssub.s32 %s16, 2
      %s29 = sadd.s32 1, %s24
      %p30 = scmp.ge.s32.totalorder %s29, 2
      %s31 = scalar_select %p30, 0, %s29
      %s32 = sadd.s32 1, %s23
      %s33 = scalar_select %p30, %s32, %s23
      %p34 = scmp.ge.s32.totalorder %s33, 1
      %s35 = scalar_select %p34, 0, %s33
      %s36 = ssub.s32 %s24, %s31
      %p37 = scmp.eq.s32.totalorder %s36, 0
      %s39 = sadd.s32 %s38, 1
      %s40 = scalar_select %p37, %s38, %s39
      %p43 = pneg %p37
      %p44 = scmp.eq.s32.totalorder %s16, 1
      %p45 = por %p43, %p44
      %p46 = scmp.ne.s32.totalorder %s38, %s41
      %p47 = scmp.eq.s32.totalorder %s16, 0
      %p48 = por %p46, %p47
      %p49 = scmp.ne.s32.totalorder %s38, %s41
      %p50 = scmp.eq.s32.totalorder %s21, 1
      %p51 = por %p49, %p50
      %p52 = scmp.ne.s32.totalorder %s41, %s42
      %p53 = scmp.eq.s32.totalorder %s21, 0
      %p54 = por %p52, %p53
      %p55 = scmp.ne.s32.totalorder %s41, %s42
      %p56 = scmp.eq.s32.totalorder %s22, 1
      %p57 = por %p55, %p56
      %p59 = scmp.ne.s32.totalorder %s42, %s58
      %p60 = scmp.eq.s32.totalorder %s22, 0
      %p61 = por %p59, %p60
      %s62 = ssub.s32 %s23, %s35
      %p63 = scmp.eq.s32.totalorder %s62, 0
      %s65 = sadd.s32 %s64, 1
      %s66 = scalar_select %p63, %s64, %s65
      %p69 = pneg %p63
      %p70 = scmp.eq.s32.totalorder %s16, 1
      %p71 = por %p69, %p70
      %p72 = scmp.ne.s32.totalorder %s64, %s67
      %p73 = scmp.eq.s32.totalorder %s16, 0
      %p74 = por %p72, %p73
      %p75 = scmp.ne.s32.totalorder %s64, %s67
      %p76 = scmp.eq.s32.totalorder %s21, 1
      %p77 = por %p75, %p76
      %p78 = scmp.ne.s32.totalorder %s67, %s68
      %p79 = scmp.eq.s32.totalorder %s21, 0
      %p80 = por %p78, %p79
      %p81 = scmp.ne.s32.totalorder %s67, %s68
      %p82 = scmp.eq.s32.totalorder %s22, 1
      %p83 = por %p81, %p82
      %p85 = scmp.ne.s32.totalorder %s68, %s84
      %p86 = scmp.eq.s32.totalorder %s22, 0
      %p87 = por %p85, %p86
      %s88 = ssub.s32 %s24, %s31
      %s89 = ssub.s32 %s23, %s35
      %s90 = sor.u32 %s88, %s89
      %p91 = scmp.eq.s32.totalorder %s90, 0
      %s93 = sadd.s32 %s92, 1
      %s94 = scalar_select %p91, %s92, %s93
      %p97 = pneg %p91
      %p98 = scmp.eq.s32.totalorder %s16, 1
      %p99 = por %p97, %p98
      %p100 = scmp.ne.s32.totalorder %s92, %s95
      %p101 = scmp.eq.s32.totalorder %s16, 0
      %p102 = por %p100, %p101
      %p103 = scmp.ne.s32.totalorder %s92, %s95
      %p104 = scmp.eq.s32.totalorder %s21, 1
      %p105 = por %p103, %p104
      %p106 = scmp.ne.s32.totalorder %s95, %s96
      %p107 = scmp.eq.s32.totalorder %s21, 0
      %p108 = por %p106, %p107
      %p109 = scmp.ne.s32.totalorder %s95, %s96
      %p110 = scmp.eq.s32.totalorder %s22, 1
      %p111 = por %p109, %p110
      %p113 = scmp.ne.s32.totalorder %s96, %s112
      %p114 = scmp.eq.s32.totalorder %s22, 0
      %p115 = por %p113, %p114
      %s116 = ssub.s32 %s24, %s31
      %s117 = ssub.s32 %s23, %s35
      %s118 = sor.u32 %s116, %s117
      %p119 = scmp.eq.s32.totalorder %s118, 0
      %s121 = sadd.s32 %s120, 1
      %s122 = scalar_select %p119, %s120, %s121
      %p125 = pneg %p119
      %p126 = scmp.eq.s32.totalorder %s16, 1
      %p127 = por %p125, %p126
      %p128 = scmp.ne.s32.totalorder %s120, %s123
      %p129 = scmp.eq.s32.totalorder %s16, 0
      %p130 = por %p128, %p129
      %p131 = scmp.ne.s32.totalorder %s120, %s123
      %p132 = scmp.eq.s32.totalorder %s21, 1
      %p133 = por %p131, %p132
      %p134 = scmp.ne.s32.totalorder %s123, %s124
      %p135 = scmp.eq.s32.totalorder %s21, 0
      %p136 = por %p134, %p135
      %p137 = scmp.ne.s32.totalorder %s123, %s124
      %p138 = scmp.eq.s32.totalorder %s22, 1
      %p139 = por %p137, %p138
      %p141 = scmp.ne.s32.totalorder %s124, %s140
      %p142 = scmp.eq.s32.totalorder %s22, 0
      %p143 = por %p141, %p142
      %p144 = scmp.le.s32.totalorder 1, %s16
      %p145 = scmp.lt.s32.totalorder %s16, 3
      %p146 = pnand %p144, %p145
      %p147 = pneg %p146
      // Predicated region
      $region9: #{dcat_forward.13} parent=5 // pred_check
        _
      $region10: #{dcat_forward.13} parent=5 // pred_check_branch
        %149 = sbr.rel (%p146) target = $region12
      $region11: #{dcat_forward.13} parent=5 // pred_region
        %s150 = ssub.s32 %s16, 1
        // Predicated region
        $region13: #{dcat_forward.13} parent=11 // pred_check
          %p151 = pneg %p80
        $region14: #{dcat_forward.13} parent=11 // pred_check_branch
          %153 = sbr.rel (%p151) target = $region16
        $region15: #{dcat_forward.13} parent=11 // pred_region
          %s155 = ssub.s32 64, 64
          %156 = vsyncadd [#allocation6], %s155
          %s157 = smul.addr %s25, 64
          %s158 = scalar_lea.hbm %s1, %s157
          %s160 = sshll.u32 [#allocation5], 4
          %s161 = int_to_ptr.vmem [resolvable:$true] %s160
          %163 = dma.hbm_to_vmem [thread:$0]  %s158, 64, %s161, [#allocation6]
        $region16: #{dcat_forward.13} parent=11 // pred_fallthru
          _
      $region12: #{dcat_forward.13} parent=5 // pred_fallthru
        _
      %p164 = scmp.lt.s32.totalorder %s16, 2
      // Predicated region
      $region17: #{dcat_forward.13} parent=5 // pred_check
        %p165 = pneg %p164
      $region18: #{dcat_forward.13} parent=5 // pred_check_branch
        %167 = sbr.rel (%p165) target = $region20
      $region19: #{dcat_forward.13} parent=5 // pred_region
        // Predicated region
        $region21: #{dcat_forward.13} parent=19 // pred_check
          %p168 = pneg %p48
        $region22: #{dcat_forward.13} parent=19 // pred_check_branch
          %170 = sbr.rel (%p168) target = $region24
        $region23: #{dcat_forward.13} parent=19 // pred_region
          %s171 = sand.u32 %s16, 1
          %s172 = scalar_lea.sflag [#allocation3], %s171
          %s173 = sand.u32 %s38, 1
          %s174 = smul.addr %s173, 32
          %s175 = scalar_lea.vmem [#allocation2], %s174
          %s177 = ssub.s32 512, 512
          %178 = vsyncadd %s172, %s177
          %s179 = smul.addr %s24, 4
          %s180 = smul.addr %s179, 128
          %s181 = scalar_lea.hbm %s0, %s180
          %s182 = sshll.u32 %s175, 4
          %s183 = int_to_ptr.vmem [resolvable:$true] %s182
          %188 = dma.hbm_to_vmem [thread:$0]  %s181, 512, %s183, %s172, 128, 128, 8
        $region24: #{dcat_forward.13} parent=19 // pred_fallthru
          _
        // Predicated region
        $region25: #{dcat_forward.13} parent=19 // pred_check
          %p189 = pneg %p102
        $region26: #{dcat_forward.13} parent=19 // pred_check_branch
          %191 = sbr.rel (%p189) target = $region28
        $region27: #{dcat_forward.13} parent=19 // pred_region
          %s192 = sand.u32 %s16, 1
          %s193 = scalar_lea.sflag [#allocation3], %s192
          %s194 = sand.u32 %s92, 1
          %s195 = smul.addr %s194, 32
          %s196 = scalar_lea.vmem [#allocation7], %s195
          %s198 = ssub.s32 512, 512
          %199 = vsyncadd %s193, %s198
          %s200 = smul.addr %s24, 4
          %s201 = sadd.s32 %s23, %s200
          %s202 = smul.addr %s201, 128
          %s203 = scalar_lea.hbm %s2, %s202
          %s204 = sshll.u32 %s196, 4
          %s205 = int_to_ptr.vmem [resolvable:$true] %s204
          %210 = dma.hbm_to_vmem [thread:$0]  %s203, 512, %s205, %s193, 128, 128, 8
        $region28: #{dcat_forward.13} parent=19 // pred_fallthru
          _
      $region20: #{dcat_forward.13} parent=5 // pred_fallthru
        _
      %p211 = scmp.le.s32.totalorder 1, %s16
      %p212 = scmp.lt.s32.totalorder %s16, 3
      %p213 = pnand %p211, %p212
      %p214 = pneg %p213
      // Predicated region
      $region29: #{dcat_forward.13} parent=5 // pred_check
        _
      $region30: #{dcat_forward.13} parent=5 // pred_check_branch
        %216 = sbr.rel (%p213) target = $region32
      $region31: #{dcat_forward.13} parent=5 // pred_region
        %s217 = ssub.s32 %s16, 1
        %s218 = sand.u32 %s21, 1
        %s219 = scalar_lea.sflag [#allocation3], %s218
        %s220 = sand.u32 %s41, 1
        %s221 = smul.addr %s220, 32
        %s222 = scalar_lea.vmem [#allocation2], %s221
        // Predicated region
        $region33: #{dcat_forward.13} parent=31 // pred_check
          %p223 = pneg %p54
        $region34: #{dcat_forward.13} parent=31 // pred_check_branch
          %225 = sbr.rel (%p223) target = $region36
        $region35: #{dcat_forward.13} parent=31 // pred_region
          %226 = dma.done %s219, 512
        $region36: #{dcat_forward.13} parent=31 // pred_fallthru
          _
        // Predicated region
        $region37: #{dcat_forward.13} parent=31 // pred_check
          %p227 = pneg %p80
        $region38: #{dcat_forward.13} parent=31 // pred_check_branch
          %229 = sbr.rel (%p227) target = $region40
        $region39: #{dcat_forward.13} parent=31 // pred_region
          %230 = dma.done [#allocation6], 64
        $region40: #{dcat_forward.13} parent=31 // pred_fallthru
          _
        %s231 = sand.u32 %s21, 1
        %s232 = scalar_lea.sflag [#allocation3], %s231
        %s233 = sand.u32 %s95, 1
        %s234 = smul.addr %s233, 32
        %s235 = scalar_lea.vmem [#allocation7], %s234
        // Predicated region
        $region41: #{dcat_forward.13} parent=31 // pred_check
          %p236 = pneg %p108
        $region42: #{dcat_forward.13} parent=31 // pred_check_branch
          %238 = sbr.rel (%p236) target = $region44
        $region43: #{dcat_forward.13} parent=31 // pred_region
          %239 = dma.done %s232, 512
        $region44: #{dcat_forward.13} parent=31 // pred_fallthru
          _
        %s240 = sand.u32 %s21, 1
        %s241 = scalar_lea.sflag [#allocation3], %s240
        %s242 = sand.u32 %s41, 1
        %s243 = smul.addr %s242, 32
        %s244 = scalar_lea.vmem [#allocation2], %s243
        %p245 = pneg %p54
        %p246 = pneg %p51
        %p247 = pneg %p80
        %p248 = pneg %p77
        %s249 = sand.u32 %s21, 1
        %s250 = scalar_lea.sflag [#allocation3], %s249
        %s251 = sand.u32 %s95, 1
        %s252 = smul.addr %s251, 32
        %s253 = scalar_lea.vmem [#allocation7], %s252
        %p254 = pneg %p108
        %p255 = pneg %p105
        %p256 = pneg %p136
        %p257 = pneg %p133
        %s258 = sand.u32 %s123, 1
        %s259 = scalar_lea.sflag [#allocation4], %s258
        %s260 = sand.u32 %s123, 1
        %s261 = smul.addr %s260, 32
        %s262 = scalar_lea.vmem [#allocation8], %s261
        %v263 = vld [vmem:[%s222] sm:$0xff]
        %v264 = vld [vmem:[%s222 + $0x8] sm:$0xff]
        %v265 = vld [vmem:[%s222 + $0x10] sm:$0xff]
        %v266 = vld [vmem:[%s222 + $0x18] sm:$0xff]
        %v267 = vld [vmem:[#allocation5] sm:$0xf]
        %vm268 = vcmask 31744
        %v270 = vsel %vm268, %v263, 0
        %v273 = vsel %vm268, %v264, 0
        %v276 = vsel %vm268, %v265, 0
        %v279 = vsel %vm268, %v266, 0
        %vm281 = vcmask 1043456
        %v283 = vsel %vm281, %v267, 0
        %285 = vmatprep.subr.mxu0 0.0
        %286 = vmatpush1.msra.mxu0 %v283
        %287 = vmatprep.subr.mxu0 0.0
        %288 = vmatpush1.msra.mxu0 0.0
        %289 = vmatprep.subr.mxu0 0.0
        %290 = vmatpush1.msra.mxu0 0.0
        %291 = vmatprep.subr.mxu0 0.0
        %292 = vmatpush1.msra.mxu0 0.0
        %293 = vmatprep.subr.mxu0 0.0
        %294 = vmatpush1.msra.mxu0 0.0
        %295 = vmatprep.subr.mxu0 0.0
        %296 = vmatpush1.msra.mxu0 0.0
        %297 = vmatprep.subr.mxu0 0.0
        %298 = vmatpush1.msra.mxu0 0.0
        %299 = vmatprep.subr.mxu0 0.0
        %300 = vmatpush1.msra.mxu0 0.0
        %301 = vmatprep.subr.mxu0 0.0
        %302 = vmatpush1.msra.mxu0 0.0
        %303 = vmatprep.subr.mxu0 0.0
        %304 = vmatpush1.msra.mxu0 0.0
        %305 = vmatprep.subr.mxu0 0.0
        %306 = vmatpush1.msra.mxu0 0.0
        %307 = vmatprep.subr.mxu0 0.0
        %308 = vmatpush1.msra.mxu0 0.0
        %309 = vmatprep.subr.mxu0 0.0
        %310 = vmatpush1.msra.mxu0 0.0
        %311 = vmatprep.subr.mxu0 0.0
        %312 = vmatpush1.msra.mxu0 0.0
        %313 = vmatprep.subr.mxu0 0.0
        %314 = vmatpush1.msra.mxu0 0.0
        %315 = vmatprep.subr.mxu0 0.0
        %316 = vmatpush1.msra.mxu0 0.0
        %317 = vmatprep.subr.mxu0 0.0
        %318 = vmatpush1.msra.mxu0 0.0
        %319 = vmatprep.subr.mxu0 0.0
        %320 = vmatpush1.msra.mxu0 0.0
        %321 = vmatprep.subr.mxu0 0.0
        %322 = vmatpush1.msra.mxu0 0.0
        %323 = vmatprep.subr.mxu0 0.0
        %324 = vmatpush1.msra.mxu0 0.0
        %325 = vmatprep.subr.mxu0 0.0
        %326 = vmatpush1.msra.mxu0 0.0
        %327 = vmatprep.subr.mxu0 0.0
        %328 = vmatpush1.msra.mxu0 0.0
        %329 = vmatprep.subr.mxu0 0.0
        %330 = vmatpush1.msra.mxu0 0.0
        %331 = vmatprep.subr.mxu0 0.0
        %332 = vmatpush1.msra.mxu0 0.0
        %333 = vmatprep.subr.mxu0 0.0
        %334 = vmatpush1.msra.mxu0 0.0
        %335 = vmatprep.subr.mxu0 0.0
        %336 = vmatpush1.msra.mxu0 0.0
        %337 = vmatprep.subr.mxu0 0.0
        %338 = vmatpush1.msra.mxu0 0.0
        %339 = vmatprep.subr.mxu0 0.0
        %340 = vmatpush1.msra.mxu0 0.0
        %341 = vmatprep.subr.mxu0 0.0
        %342 = vmatpush1.msra.mxu0 0.0
        %343 = vmatprep.subr.mxu0 0.0
        %344 = vmatpush1.msra.mxu0 0.0
        %345 = vmatprep.subr.mxu0 0.0
        %346 = vmatpush1.msra.mxu0 0.0
        %347 = vmatprep.subr.mxu0 0.0
        %348 = vmatpush1.msra.mxu0 0.0
        %349 = vmatprep.mubr.f32.mxu0 0.0
        %350 = vmatmul.mubr.f32.gmra.mrb[0].mxu0 %v270
        %v351 = vpop.f32.mrb[0].mxu0
        %v352 = vadd.f32 0.0, %v351
        %v353 = vpop.f32.mrb[0].mxu0
        %354 = vmatprep.mubr.f32.mxu0 0.0
        %355 = vmatmul.mubr.f32.gmra.mrb[0].mxu0 %v273
        %v356 = vpop.f32.mrb[0].mxu0
        %v357 = vadd.f32 0.0, %v356
        %v358 = vpop.f32.mrb[0].mxu0
        %359 = vmatprep.mubr.f32.mxu0 0.0
        %360 = vmatmul.mubr.f32.gmra.mrb[0].mxu0 %v276
        %v361 = vpop.f32.mrb[0].mxu0
        %v362 = vadd.f32 0.0, %v361
        %v363 = vpop.f32.mrb[0].mxu0
        %364 = vmatprep.mubr.f32.mxu0 0.0
        %365 = vmatmul.mubr.f32.gmra.mrb[0].mxu0 %v279
        %v366 = vpop.f32.mrb[0].mxu0
        %v367 = vadd.f32 0.0, %v366
        %v368 = vpop.f32.mrb[0].mxu0
        %369 = vdwg.mxu0
        %v370 = vld [vmem:[%s235] sm:$0xff]
        %v371 = vld [vmem:[%s235 + $0x8] sm:$0xff]
        %v372 = vld [vmem:[%s235 + $0x10] sm:$0xff]
        %v373 = vld [vmem:[%s235 + $0x18] sm:$0xff]
        %v374 = vmax.f32 %v352, 0.0
        %v375 = vmax.f32 %v357, 0.0
        %v376 = vmax.f32 %v362, 0.0
        %v377 = vmax.f32 %v367, 0.0
        %v378 = vadd.f32 %v370, %v374
        %v379 = vadd.f32 %v371, %v375
        %v380 = vadd.f32 %v372, %v376
        %v381 = vadd.f32 %v373, %v377
        %vm382 = vcmask 130048
        %383 = vst.msk [vmem:[%s262] sm:$0xff] %vm382, %v378
        %384 = vst.msk [vmem:[%s262 + $0x8] sm:$0xff] %vm382, %v379
        %385 = vst.msk [vmem:[%s262 + $0x10] sm:$0xff] %vm382, %v380
        %386 = vst.msk [vmem:[%s262 + $0x18] sm:$0xff] %vm382, %v381
        %s387 = sand.u32 %s123, 1
        %s388 = scalar_lea.sflag [#allocation4], %s387
        %s389 = sand.u32 %s123, 1
        %s390 = smul.addr %s389, 32
        %s391 = scalar_lea.vmem [#allocation8], %s390
        // Predicated region
        $region45: #{dcat_forward.13} parent=31 // pred_check
          %p392 = pneg %p133
        $region46: #{dcat_forward.13} parent=31 // pred_check_branch
          %394 = sbr.rel (%p392) target = $region48
        $region47: #{dcat_forward.13} parent=31 // pred_region
          %s396 = ssub.s32 512, 512
          %397 = vsyncadd %s388, %s396
          %s398 = smul.addr %s26, 4
          %s399 = sadd.s32 %s25, %s398
          %s400 = smul.addr %s399, 128
          %s401 = scalar_lea.hbm %s3, %s400
          %s402 = sshll.u32 %s391, 4
          %s403 = int_to_ptr.vmem [resolvable:$true] %s402
          %408 = dma.vmem_to_hbm [thread:$0]  %s403, 512, %s401, %s388, 128, 128, 8
        $region48: #{dcat_forward.13} parent=31 // pred_fallthru
          _
      $region32: #{dcat_forward.13} parent=5 // pred_fallthru
        _
      %p409 = scmp.le.s32.totalorder 2, %s16
      // Predicated region
      $region49: #{dcat_forward.13} parent=5 // pred_check
        %p410 = pneg %p409
      $region50: #{dcat_forward.13} parent=5 // pred_check_branch
        %412 = sbr.rel (%p410) target = $region52
      $region51: #{dcat_forward.13} parent=5 // pred_region
        %s413 = ssub.s32 %s16, 2
        // Predicated region
        $region53: #{dcat_forward.13} parent=51 // pred_check
          %p414 = pneg %p139
        $region54: #{dcat_forward.13} parent=51 // pred_check_branch
          %416 = sbr.rel (%p414) target = $region56
        $region55: #{dcat_forward.13} parent=51 // pred_region
          %s417 = sand.u32 %s124, 1
          %s418 = scalar_lea.sflag [#allocation4], %s417
          %s419 = sand.u32 %s124, 1
          %s420 = smul.addr %s419, 32
          %s421 = scalar_lea.vmem [#allocation8], %s420
          %422 = dma.done %s418, 512
        $region56: #{dcat_forward.13} parent=51 // pred_fallthru
          _
      $region52: #{dcat_forward.13} parent=5 // pred_fallthru
        _
    $region6: #{dcat_forward.13} parent=1 // loop_footer
      %s20 = sadd.s32 1, %s16
    $region7: #{dcat_forward.13} parent=1 // loop_footer_branch
      %15 = sbr.rel target = $region3
    $region8: #{dcat_forward.13} parent=1 // loop_exit
      _
    %423 = vsyncpa [#allocation3], 1
    %s424 = scalar_lea.sflag [#allocation3], 1
    %425 = vsyncpa %s424, 1
    %426 = vsyncpa [#allocation6], 1
    %427 = vsyncpa [#allocation4], 1
    %s428 = scalar_lea.sflag [#allocation4], 1
    %429 = vsyncpa %s428, 1

// kernel: dcat_forward.14
$region0: #{dcat_forward.14}
  #allocation0 [shape = 'u32[]', space=smem, size = 0x4, offset = 0x4, fixed_abs, tag = 'smem constant byte address 0x4 - core index']
  #allocation1 [shape = 'u32[144,128]{1,0:T(1,128)}', space=vmem, size = 0x12000, scoped, tag = 'internal scratch']
  %s0 = inlined_call_operand.hbm [shape: bf16[8,64], index: 0, kind: input, shape index: {}]
  %s1 = inlined_call_operand.hbm [shape: bf16[64,64], index: 1, kind: input, shape index: {}]
  %s2 = inlined_call_operand.hbm [shape: f32[1,64], index: 2, kind: input, shape index: {}]
  %s3 = inlined_call_operand.hbm [shape: f32[1,64], index: 3, kind: input, shape index: {}]
  %s4 = inlined_call_operand.hbm [shape: f32[1,64], index: 4, kind: input, shape index: {}]
  %s5 = inlined_call_operand.hbm [shape: bf16[64,64], index: 5, kind: input, shape index: {}]
  %s6 = inlined_call_operand.hbm [shape: f32[1,64], index: 6, kind: input, shape index: {}]
  %s7 = inlined_call_operand.hbm [shape: f32[8,64], index: 7, kind: output, shape index: {}]
  %s8 = sld [smem:[#allocation0]]
  $region66: #{dcat_forward.14} parent=0
    _
  %s10 = ssub.s32 1, %s8
  %s11 = scalar_select 0, %s10, %s8
  $region1: #{dcat_forward.14} parent=0
    #allocation2 [shape = 'u8[2048]{0}', space=vmem, size = 0x800, scoped, tag = 'input window, operand 0, single buffered']
    #allocation3 [shape = 's32[1]{0}', space=sflag, size = 0x4, scoped, tag = 'scoped memory for dcat_forward.14']
    #allocation4 [shape = 's32[1]{0}', space=sflag, size = 0x4, scoped, tag = 'scoped memory for dcat_forward.14']
    #allocation5 [shape = 'u8[16384]{0}', space=vmem, size = 0x4000, scoped, tag = 'input window, operand 1, single buffered']
    #allocation6 [shape = 's32[1]{0}', space=sflag, size = 0x4, scoped, tag = 'scoped memory for dcat_forward.14']
    #allocation7 [shape = 'u8[512]{0}', space=vmem, size = 0x400, scoped, tag = 'input window, operand 2, single buffered']
    #allocation8 [shape = 'u8[512]{0}', space=vmem, size = 0x400, scoped, tag = 'input window, operand 3, single buffered']
    #allocation9 [shape = 's32[1]{0}', space=sflag, size = 0x4, scoped, tag = 'scoped memory for dcat_forward.14']
    #allocation10 [shape = 'u8[512]{0}', space=vmem, size = 0x400, scoped, tag = 'input window, operand 4, single buffered']
    #allocation11 [shape = 'u8[16384]{0}', space=vmem, size = 0x4000, scoped, tag = 'input window, operand 5, single buffered']
    #allocation12 [shape = 's32[1]{0}', space=sflag, size = 0x4, scoped, tag = 'scoped memory for dcat_forward.14']
    #allocation13 [shape = 'u8[512]{0}', space=vmem, size = 0x400, scoped, tag = 'input window, operand 6, single buffered']
    #allocation14 [shape = 'u8[4096]{0}', space=vmem, size = 0x1000, scoped, tag = 'output window, operand 0, single buffered']
    %12 = vsyncpa [#allocation3], 0
    %13 = vsyncpa [#allocation6], 0
    %14 = vsyncpa [#allocation9], 0
    %15 = vsyncpa [#allocation12], 0
    %16 = vsyncpa [#allocation4], 0
    // Predicated region
    $region2: #{dcat_forward.14} parent=1 // pred_check
      _
    $region3: #{dcat_forward.14} parent=1 // pred_check_branch
      %18 = sbr.rel (0) target = $region5
    $region4: #{dcat_forward.14} parent=1 // pred_region
      %s20 = ssub.s32 64, 64
      %21 = vsyncadd [#allocation3], %s20
      %s23 = sshll.u32 [#allocation2], 4
      %s24 = int_to_ptr.vmem [resolvable:$true] %s23
      %26 = dma.hbm_to_vmem [thread:$0]  %s0, 64, %s24, [#allocation3]
    $region5: #{dcat_forward.14} parent=1 // pred_fallthru
      _
    // Predicated region
    $region6: #{dcat_forward.14} parent=1 // pred_check
      _
    $region7: #{dcat_forward.14} parent=1 // pred_check_branch
      %28 = sbr.rel (0) target = $region9
    $region8: #{dcat_forward.14} parent=1 // pred_region
      %s30 = ssub.s32 512, 512
      %31 = vsyncadd [#allocation6], %s30
      %s32 = sshll.u32 [#allocation5], 4
      %s33 = int_to_ptr.vmem [resolvable:$true] %s32
      %38 = dma.hbm_to_vmem [thread:$0]  %s1, 512, %s33, [#allocation6], 64, 64, 4
    $region9: #{dcat_forward.14} parent=1 // pred_fallthru
      _
    // Predicated region
    $region10: #{dcat_forward.14} parent=1 // pred_check
      _
    $region11: #{dcat_forward.14} parent=1 // pred_check_branch
      %40 = sbr.rel (0) target = $region13
    $region12: #{dcat_forward.14} parent=1 // pred_region
      %s42 = ssub.s32 16, 16
      %43 = vsyncadd [#allocation6], %s42
      %s45 = sshll.u32 [#allocation7], 4
      %s46 = int_to_ptr.vmem [resolvable:$true] %s45
      %48 = dma.hbm_to_vmem [thread:$0]  %s2, 16, %s46, [#allocation6]
    $region13: #{dcat_forward.14} parent=1 // pred_fallthru
      _
    // Predicated region
    $region14: #{dcat_forward.14} parent=1 // pred_check
      _
    $region15: #{dcat_forward.14} parent=1 // pred_check_branch
      %50 = sbr.rel (0) target = $region17
    $region16: #{dcat_forward.14} parent=1 // pred_region
      %s52 = ssub.s32 16, 16
      %53 = vsyncadd [#allocation9], %s52
      %s55 = sshll.u32 [#allocation8], 4
      %s56 = int_to_ptr.vmem [resolvable:$true] %s55
      %58 = dma.hbm_to_vmem [thread:$0]  %s3, 16, %s56, [#allocation9]
    $region17: #{dcat_forward.14} parent=1 // pred_fallthru
      _
    // Predicated region
    $region18: #{dcat_forward.14} parent=1 // pred_check
      _
    $region19: #{dcat_forward.14} parent=1 // pred_check_branch
      %60 = sbr.rel (0) target = $region21
    $region20: #{dcat_forward.14} parent=1 // pred_region
      %s62 = ssub.s32 16, 16
      %63 = vsyncadd [#allocation9], %s62
      %s65 = sshll.u32 [#allocation10], 4
      %s66 = int_to_ptr.vmem [resolvable:$true] %s65
      %68 = dma.hbm_to_vmem [thread:$0]  %s4, 16, %s66, [#allocation9]
    $region21: #{dcat_forward.14} parent=1 // pred_fallthru
      _
    // Predicated region
    $region22: #{dcat_forward.14} parent=1 // pred_check
      _
    $region23: #{dcat_forward.14} parent=1 // pred_check_branch
      %70 = sbr.rel (0) target = $region25
    $region24: #{dcat_forward.14} parent=1 // pred_region
      %s72 = ssub.s32 512, 512
      %73 = vsyncadd [#allocation12], %s72
      %s74 = sshll.u32 [#allocation11], 4
      %s75 = int_to_ptr.vmem [resolvable:$true] %s74
      %80 = dma.hbm_to_vmem [thread:$0]  %s5, 512, %s75, [#allocation12], 64, 64, 4
    $region25: #{dcat_forward.14} parent=1 // pred_fallthru
      _
    // Predicated region
    $region26: #{dcat_forward.14} parent=1 // pred_check
      _
    $region27: #{dcat_forward.14} parent=1 // pred_check_branch
      %82 = sbr.rel (0) target = $region29
    $region28: #{dcat_forward.14} parent=1 // pred_region
      %s84 = ssub.s32 16, 16
      %85 = vsyncadd [#allocation12], %s84
      %s87 = sshll.u32 [#allocation13], 4
      %s88 = int_to_ptr.vmem [resolvable:$true] %s87
      %90 = dma.hbm_to_vmem [thread:$0]  %s6, 16, %s88, [#allocation12]
    $region29: #{dcat_forward.14} parent=1 // pred_fallthru
      _
    // Predicated region
    $region30: #{dcat_forward.14} parent=1 // pred_check
      _
    $region31: #{dcat_forward.14} parent=1 // pred_check_branch
      %92 = sbr.rel (0) target = $region33
    $region32: #{dcat_forward.14} parent=1 // pred_region
      %93 = dma.done [#allocation3], 64
    $region33: #{dcat_forward.14} parent=1 // pred_fallthru
      _
    // Predicated region
    $region34: #{dcat_forward.14} parent=1 // pred_check
      _
    $region35: #{dcat_forward.14} parent=1 // pred_check_branch
      %95 = sbr.rel (0) target = $region37
    $region36: #{dcat_forward.14} parent=1 // pred_region
      %96 = dma.done [#allocation6], 512
    $region37: #{dcat_forward.14} parent=1 // pred_fallthru
      _
    // Predicated region
    $region38: #{dcat_forward.14} parent=1 // pred_check
      _
    $region39: #{dcat_forward.14} parent=1 // pred_check_branch
      %98 = sbr.rel (0) target = $region41
    $region40: #{dcat_forward.14} parent=1 // pred_region
      %99 = dma.done [#allocation6], 16
    $region41: #{dcat_forward.14} parent=1 // pred_fallthru
      _
    // Predicated region
    $region42: #{dcat_forward.14} parent=1 // pred_check
      _
    $region43: #{dcat_forward.14} parent=1 // pred_check_branch
      %101 = sbr.rel (0) target = $region45
    $region44: #{dcat_forward.14} parent=1 // pred_region
      %102 = dma.done [#allocation9], 16
    $region45: #{dcat_forward.14} parent=1 // pred_fallthru
      _
    // Predicated region
    $region46: #{dcat_forward.14} parent=1 // pred_check
      _
    $region47: #{dcat_forward.14} parent=1 // pred_check_branch
      %104 = sbr.rel (0) target = $region49
    $region48: #{dcat_forward.14} parent=1 // pred_region
      %105 = dma.done [#allocation9], 16
    $region49: #{dcat_forward.14} parent=1 // pred_fallthru
      _
    // Predicated region
    $region50: #{dcat_forward.14} parent=1 // pred_check
      _
    $region51: #{dcat_forward.14} parent=1 // pred_check_branch
      %107 = sbr.rel (0) target = $region53
    $region52: #{dcat_forward.14} parent=1 // pred_region
      %108 = dma.done [#allocation12], 512
    $region53: #{dcat_forward.14} parent=1 // pred_fallthru
      _
    // Predicated region
    $region54: #{dcat_forward.14} parent=1 // pred_check
      _
    $region55: #{dcat_forward.14} parent=1 // pred_check_branch
      %110 = sbr.rel (0) target = $region57
    $region56: #{dcat_forward.14} parent=1 // pred_region
      %111 = dma.done [#allocation12], 16
    $region57: #{dcat_forward.14} parent=1 // pred_fallthru
      _
    %v113 = vld [vmem:[#allocation2] sm:$0xf]
    %v114 = vld [vmem:[#allocation5] sm:$0xf]
    %v115 = vld [vmem:[#allocation5 + $0x4] sm:$0xf]
    %v116 = vld [vmem:[#allocation5 + $0x8] sm:$0xf]
    %v117 = vld [vmem:[#allocation5 + $0xc] sm:$0xf]
    %v118 = vld [vmem:[#allocation5 + $0x10] sm:$0xf]
    %v119 = vld [vmem:[#allocation5 + $0x14] sm:$0xf]
    %v120 = vld [vmem:[#allocation5 + $0x18] sm:$0xf]
    %v121 = vld [vmem:[#allocation5 + $0x1c] sm:$0xf]
    %v122 = vld [vmem:[#allocation7] sm:$0x1]
    %v124 = vlaneseq
    %v125 = vshrl.u32 %v124, 7
    %v126 = vsub.s32 0, %v125
    %v127 = vrot.slane %v122, %v126
    %v137 = vunpack.c.l.b16 %v114
    %v138 = vunpack.c.l.b16 %v115
    %v139 = vunpack.c.l.b16 %v116
    %v140 = vunpack.c.l.b16 %v117
    %v141 = vunpack.c.l.b16 %v118
    %v142 = vunpack.c.l.b16 %v119
    %v143 = vunpack.c.l.b16 %v120
    %v144 = vunpack.c.l.b16 %v121
    %v145 = vpack.c.b16 %v138, %v137
    %v146 = vpack.c.b16 %v140, %v139
    %v147 = vpack.c.b16 %v142, %v141
    %v148 = vpack.c.b16 %v144, %v143
    %vm153 = vcmask 523264
    %v155 = vsel %vm153, %v113, 0
    %157 = vmatprep.subr.bf16.mxu0 0
    %158 = vmatpush1.bf16.msra.mxu0 %v145
    %159 = vmatprep.subr.bf16.mxu0 0
    %160 = vmatpush1.bf16.msra.mxu0 %v146
    %161 = vmatprep.subr.bf16.mxu0 0
    %162 = vmatpush1.bf16.msra.mxu0 %v147
    %163 = vmatprep.subr.bf16.mxu0 0
    %164 = vmatpush1.bf16.msra.mxu0 %v148
    %165 = vmatprep.subr.bf16.mxu0 0
    %166 = vmatpush1.bf16.msra.mxu0 0
    %167 = vmatprep.subr.bf16.mxu0 0
    %168 = vmatpush1.bf16.msra.mxu0 0
    %169 = vmatprep.subr.bf16.mxu0 0
    %170 = vmatpush1.bf16.msra.mxu0 0
    %171 = vmatprep.subr.bf16.mxu0 0
    %172 = vmatpush1.bf16.msra.mxu0 0
    %173 = vmatprep.subr.bf16.mxu0 0
    %174 = vmatpush1.bf16.msra.mxu0 0
    %175 = vmatprep.subr.bf16.mxu0 0
    %176 = vmatpush1.bf16.msra.mxu0 0
    %177 = vmatprep.subr.bf16.mxu0 0
    %178 = vmatpush1.bf16.msra.mxu0 0
    %179 = vmatprep.subr.bf16.mxu0 0
    %180 = vmatpush1.bf16.msra.mxu0 0
    %181 = vmatprep.subr.bf16.mxu0 0
    %182 = vmatpush1.bf16.msra.mxu0 0
    %183 = vmatprep.subr.bf16.mxu0 0
    %184 = vmatpush1.bf16.msra.mxu0 0
    %185 = vmatprep.subr.bf16.mxu0 0
    %186 = vmatpush1.bf16.msra.mxu0 0
    %187 = vmatprep.subr.bf16.mxu0 0
    %188 = vmatpush1.bf16.msra.mxu0 0
    %189 = vmatprep.mubr.bf16.mxu0 0
    %190 = vmatmul.mubr.bf16.gmra.mrb[0].mxu0 %v155
    %v191 = vpop.f32.mrb[0].mxu0
    %v192 = vadd.f32 %v127, %v191
    %v193 = vpop.f32.mrb[0].mxu0
    %v194 = vpop.f32.mrb[0].mxu0
    %v195 = vpop.f32.mrb[0].mxu0
    %196 = vdwg.mxu0
    %v197 = vsel %vm153, %v192, 0.0
    %198 = vadd.xlane.f32.xlu0 %v197
    %v199 = vpop.xlane.xlu0 %198
    %v200 = vrcp.pop 64.0
    %v201 = vmul.f32 %v199, %v200
    %v202 = vmul.f32 %v192, %v192
    %v203 = vsel %vm153, %v202, 0.0
    %204 = vadd.xlane.f32.xlu0 %v203
    %v205 = vpop.xlane.xlu0 %204
    %v206 = vmul.f32 %v205, %v200
    %v207 = vmul.f32 %v201, %v201
    %v208 = vsub.f32 %v206, %v207
    %v209 = vmax.f32 %v208, 0.0
    %v210 = vsub.f32 %v192, %v201
    %v211 = vadd.f32 %v209, 1e-05
    %v212 = vrsqrt.pop %v211
    %v213 = vmul.f32 %v210, %v212
    %v214 = vld [vmem:[#allocation8] sm:$0x1]
    %v216 = vlaneseq
    %v217 = vshrl.u32 %v216, 7
    %v218 = vsub.s32 0, %v217
    %v219 = vrot.slane %v214, %v218
    %v221 = vmul.f32 %v213, %v219
    %v222 = vld [vmem:[#allocation10] sm:$0x1]
    %v224 = vlaneseq
    %v225 = vshrl.u32 %v224, 7
    %v226 = vsub.s32 0, %v225
    %v227 = vrot.slane %v222, %v226
    %v229 = vadd.f32 %v221, %v227
    %v230 = vadd.f32 %v229, %v192
    %v231 = vpack.c.bf16 %v230, %v230
    %v232 = vld [vmem:[#allocation11] sm:$0xf]
    %v233 = vld [vmem:[#allocation11 + $0x4] sm:$0xf]
    %v234 = vld [vmem:[#allocation11 + $0x8] sm:$0xf]
    %v235 = vld [vmem:[#allocation11 + $0xc] sm:$0xf]
    %v236 = vld [vmem:[#allocation11 + $0x10] sm:$0xf]
    %v237 = vld [vmem:[#allocation11 + $0x14] sm:$0xf]
    %v238 = vld [vmem:[#allocation11 + $0x18] sm:$0xf]
    %v239 = vld [vmem:[#allocation11 + $0x1c] sm:$0xf]
    %v240 = vld [vmem:[#allocation13] sm:$0x1]
    %v242 = vlaneseq
    %v243 = vshrl.u32 %v242, 7
    %v244 = vsub.s32 0, %v243
    %v245 = vrot.slane %v240, %v244
    %v255 = vunpack.c.l.b16 %v232
    %v256 = vunpack.c.l.b16 %v233
    %v257 = vunpack.c.l.b16 %v234
    %v258 = vunpack.c.l.b16 %v235
    %v259 = vunpack.c.l.b16 %v236
    %v260 = vunpack.c.l.b16 %v237
    %v261 = vunpack.c.l.b16 %v238
    %v262 = vunpack.c.l.b16 %v239
    %v263 = vpack.c.b16 %v256, %v255
    %v264 = vpack.c.b16 %v258, %v257
    %v265 = vpack.c.b16 %v260, %v259
    %v266 = vpack.c.b16 %v262, %v261
    %v272 = vsel %vm153, %v231, 0
    %274 = vmatprep.subr.bf16.mxu0 0
    %275 = vmatpush1.bf16.msra.mxu0 %v263
    %276 = vmatprep.subr.bf16.mxu0 0
    %277 = vmatpush1.bf16.msra.mxu0 %v264
    %278 = vmatprep.subr.bf16.mxu0 0
    %279 = vmatpush1.bf16.msra.mxu0 %v265
    %280 = vmatprep.subr.bf16.mxu0 0
    %281 = vmatpush1.bf16.msra.mxu0 %v266
    %282 = vmatprep.subr.bf16.mxu0 0
    %283 = vmatpush1.bf16.msra.mxu0 0
    %284 = vmatprep.subr.bf16.mxu0 0
    %285 = vmatpush1.bf16.msra.mxu0 0
    %286 = vmatprep.subr.bf16.mxu0 0
    %287 = vmatpush1.bf16.msra.mxu0 0
    %288 = vmatprep.subr.bf16.mxu0 0
    %289 = vmatpush1.bf16.msra.mxu0 0
    %290 = vmatprep.subr.bf16.mxu0 0
    %291 = vmatpush1.bf16.msra.mxu0 0
    %292 = vmatprep.subr.bf16.mxu0 0
    %293 = vmatpush1.bf16.msra.mxu0 0
    %294 = vmatprep.subr.bf16.mxu0 0
    %295 = vmatpush1.bf16.msra.mxu0 0
    %296 = vmatprep.subr.bf16.mxu0 0
    %297 = vmatpush1.bf16.msra.mxu0 0
    %298 = vmatprep.subr.bf16.mxu0 0
    %299 = vmatpush1.bf16.msra.mxu0 0
    %300 = vmatprep.subr.bf16.mxu0 0
    %301 = vmatpush1.bf16.msra.mxu0 0
    %302 = vmatprep.subr.bf16.mxu0 0
    %303 = vmatpush1.bf16.msra.mxu0 0
    %304 = vmatprep.subr.bf16.mxu0 0
    %305 = vmatpush1.bf16.msra.mxu0 0
    %306 = vmatprep.mubr.bf16.mxu0 0
    %307 = vmatmul.mubr.bf16.gmra.mrb[0].mxu0 %v272
    %v308 = vpop.f32.mrb[0].mxu0
    %v309 = vadd.f32 %v245, %v308
    %v310 = vpop.f32.mrb[0].mxu0
    %v311 = vpop.f32.mrb[0].mxu0
    %v312 = vpop.f32.mrb[0].mxu0
    %313 = vdwg.mxu0
    %314 = vst.msk [vmem:[#allocation14] sm:$0xff] %vm153, %v309
    // Predicated region
    $region58: #{dcat_forward.14} parent=1 // pred_check
      _
    $region59: #{dcat_forward.14} parent=1 // pred_check_branch
      %316 = sbr.rel (0) target = $region61
    $region60: #{dcat_forward.14} parent=1 // pred_region
      %s318 = ssub.s32 128, 128
      %319 = vsyncadd [#allocation4], %s318
      %s321 = sshll.u32 [#allocation14], 4
      %s322 = int_to_ptr.vmem [resolvable:$true] %s321
      %324 = dma.vmem_to_hbm [thread:$0]  %s322, 128, %s7, [#allocation4]
    $region61: #{dcat_forward.14} parent=1 // pred_fallthru
      _
    // Predicated region
    $region62: #{dcat_forward.14} parent=1 // pred_check
      _
    $region63: #{dcat_forward.14} parent=1 // pred_check_branch
      %326 = sbr.rel (0) target = $region65
    $region64: #{dcat_forward.14} parent=1 // pred_region
      %327 = dma.done [#allocation4], 128
    $region65: #{dcat_forward.14} parent=1 // pred_fallthru
      _
    %328 = vsyncpa [#allocation3], 1
    %329 = vsyncpa [#allocation6], 1
    %330 = vsyncpa [#allocation9], 1
    %331 = vsyncpa [#allocation12], 1
    %332 = vsyncpa [#allocation4], 1

// kernel: dcat_forward.15
$region0: #{dcat_forward.15}
  #allocation0 [shape = 'u32[]', space=smem, size = 0x4, offset = 0x4, fixed_abs, tag = 'smem constant byte address 0x4 - core index']
  #allocation1 [shape = 'u32[144,128]{1,0:T(1,128)}', space=vmem, size = 0x12000, scoped, tag = 'internal scratch']
  %s0 = inlined_call_operand.hbm [shape: f32[2,64,4], index: 0, kind: input, shape index: {}]
  %s1 = inlined_call_operand.hbm [shape: f32[4,4], index: 1, kind: input, shape index: {}]
  %s2 = inlined_call_operand.hbm [shape: f32[2,64,4], index: 2, kind: input, shape index: {}]
  %s3 = inlined_call_operand.hbm [shape: f32[2,64,4], index: 3, kind: output, shape index: {}]
  %s4 = sld [smem:[#allocation0]]
  $region57: #{dcat_forward.15} parent=0
    _
  %s6 = ssub.s32 1, %s4
  %s7 = scalar_select 0, %s6, %s4
  $region1: #{dcat_forward.15} parent=0
    #allocation2 [shape = 'u8[65536]{0}', space=vmem, size = 0x10000, scoped, tag = 'input window, operand 0']
    #allocation3 [shape = 's32[2]{0}', space=sflag, size = 0x8, scoped, tag = 'scoped memory for dcat_forward.15']
    #allocation4 [shape = 's32[2]{0}', space=sflag, size = 0x8, scoped, tag = 'scoped memory for dcat_forward.15']
    #allocation5 [shape = 'u8[2048]{0}', space=vmem, size = 0x800, scoped, tag = 'input window, operand 1, single buffered']
    #allocation6 [shape = 's32[1]{0}', space=sflag, size = 0x4, scoped, tag = 'scoped memory for dcat_forward.15']
    #allocation7 [shape = 'u8[65536]{0}', space=vmem, size = 0x10000, scoped, tag = 'input window, operand 2']
    #allocation8 [shape = 'u8[65536]{0}', space=vmem, size = 0x10000, scoped, tag = 'output window, operand 0']
    %8 = vsyncpa [#allocation3], 0
    %s9 = scalar_lea.sflag [#allocation3], 1
    %10 = vsyncpa %s9, 0
    %11 = vsyncpa [#allocation6], 0
    %12 = vsyncpa [#allocation4], 0
    %s13 = scalar_lea.sflag [#allocation4], 1
    %14 = vsyncpa %s13, 0
    loop: start=0, step=1, limit=4
    $region2: #{dcat_forward.15} parent=1 // loop_pre_header
      _
    $region3: #{dcat_forward.15} parent=1 // loop_header
      %s16 = sphi 0, %s20
      %p17 = scmp.ge.s32.totalorder %s16, 4
      %s23 = sphi 0, %s35
      %s24 = sphi 0, %s31
      %s25 = sphi 0, %s23
      %s26 = sphi 0, %s24
      %s27 = sphi 0, %s25
      %s28 = sphi 0, %s26
      %s38 = sphi 0, %s40
      %s41 = sphi 0, %s38
      %s42 = sphi 0, %s41
      %s58 = sphi 0, %s42
      %s64 = sphi 0, %s66
      %s67 = sphi 0, %s64
      %s68 = sphi 0, %s67
      %s84 = sphi 0, %s68
      %s92 = sphi 0, %s94
      %s95 = sphi 0, %s92
      %s96 = sphi 0, %s95
      %s112 = sphi 0, %s96
      %s120 = sphi 0, %s122
      %s123 = sphi 0, %s120
      %s124 = sphi 0, %s123
      %s140 = sphi 0, %s124
    $region4: #{dcat_forward.15} parent=1 // loop_header_branch
      %19 = sbr.rel (%p17) target = $region8
    $region5: #{dcat_forward.15} parent=1 // loop_body
      %s21 = ssub.s32 %s16, 1
      %s22 = ssub.s32 %s16, 2
      %s29 = sadd.s32 1, %s24
      %p30 = scmp.ge.s32.totalorder %s29, 2
      %s31 = scalar_select %p30, 0, %s29
      %s32 = sadd.s32 1, %s23
      %s33 = scalar_select %p30, %s32, %s23
      %p34 = scmp.ge.s32.totalorder %s33, 1
      %s35 = scalar_select %p34, 0, %s33
      %s36 = ssub.s32 %s24, %s31
      %p37 = scmp.eq.s32.totalorder %s36, 0
      %s39 = sadd.s32 %s38, 1
      %s40 = scalar_select %p37, %s38, %s39
      %p43 = pneg %p37
      %p44 = scmp.eq.s32.totalorder %s16, 1
      %p45 = por %p43, %p44
      %p46 = scmp.ne.s32.totalorder %s38, %s41
      %p47 = scmp.eq.s32.totalorder %s16, 0
      %p48 = por %p46, %p47
      %p49 = scmp.ne.s32.totalorder %s38, %s41
      %p50 = scmp.eq.s32.totalorder %s21, 1
      %p51 = por %p49, %p50
      %p52 = scmp.ne.s32.totalorder %s41, %s42
      %p53 = scmp.eq.s32.totalorder %s21, 0
      %p54 = por %p52, %p53
      %p55 = scmp.ne.s32.totalorder %s41, %s42
      %p56 = scmp.eq.s32.totalorder %s22, 1
      %p57 = por %p55, %p56
      %p59 = scmp.ne.s32.totalorder %s42, %s58
      %p60 = scmp.eq.s32.totalorder %s22, 0
      %p61 = por %p59, %p60
      %s62 = ssub.s32 %s23, %s35
      %p63 = scmp.eq.s32.totalorder %s62, 0
      %s65 = sadd.s32 %s64, 1
      %s66 = scalar_select %p63, %s64, %s65
      %p69 = pneg %p63
      %p70 = scmp.eq.s32.totalorder %s16, 1
      %p71 = por %p69, %p70
      %p72 = scmp.ne.s32.totalorder %s64, %s67
      %p73 = scmp.eq.s32.totalorder %s16, 0
      %p74 = por %p72, %p73
      %p75 = scmp.ne.s32.totalorder %s64, %s67
      %p76 = scmp.eq.s32.totalorder %s21, 1
      %p77 = por %p75, %p76
      %p78 = scmp.ne.s32.totalorder %s67, %s68
      %p79 = scmp.eq.s32.totalorder %s21, 0
      %p80 = por %p78, %p79
      %p81 = scmp.ne.s32.totalorder %s67, %s68
      %p82 = scmp.eq.s32.totalorder %s22, 1
      %p83 = por %p81, %p82
      %p85 = scmp.ne.s32.totalorder %s68, %s84
      %p86 = scmp.eq.s32.totalorder %s22, 0
      %p87 = por %p85, %p86
      %s88 = ssub.s32 %s24, %s31
      %s89 = ssub.s32 %s23, %s35
      %s90 = sor.u32 %s88, %s89
      %p91 = scmp.eq.s32.totalorder %s90, 0
      %s93 = sadd.s32 %s92, 1
      %s94 = scalar_select %p91, %s92, %s93
      %p97 = pneg %p91
      %p98 = scmp.eq.s32.totalorder %s16, 1
      %p99 = por %p97, %p98
      %p100 = scmp.ne.s32.totalorder %s92, %s95
      %p101 = scmp.eq.s32.totalorder %s16, 0
      %p102 = por %p100, %p101
      %p103 = scmp.ne.s32.totalorder %s92, %s95
      %p104 = scmp.eq.s32.totalorder %s21, 1
      %p105 = por %p103, %p104
      %p106 = scmp.ne.s32.totalorder %s95, %s96
      %p107 = scmp.eq.s32.totalorder %s21, 0
      %p108 = por %p106, %p107
      %p109 = scmp.ne.s32.totalorder %s95, %s96
      %p110 = scmp.eq.s32.totalorder %s22, 1
      %p111 = por %p109, %p110
      %p113 = scmp.ne.s32.totalorder %s96, %s112
      %p114 = scmp.eq.s32.totalorder %s22, 0
      %p115 = por %p113, %p114
      %s116 = ssub.s32 %s24, %s31
      %s117 = ssub.s32 %s23, %s35
      %s118 = sor.u32 %s116, %s117
      %p119 = scmp.eq.s32.totalorder %s118, 0
      %s121 = sadd.s32 %s120, 1
      %s122 = scalar_select %p119, %s120, %s121
      %p125 = pneg %p119
      %p126 = scmp.eq.s32.totalorder %s16, 1
      %p127 = por %p125, %p126
      %p128 = scmp.ne.s32.totalorder %s120, %s123
      %p129 = scmp.eq.s32.totalorder %s16, 0
      %p130 = por %p128, %p129
      %p131 = scmp.ne.s32.totalorder %s120, %s123
      %p132 = scmp.eq.s32.totalorder %s21, 1
      %p133 = por %p131, %p132
      %p134 = scmp.ne.s32.totalorder %s123, %s124
      %p135 = scmp.eq.s32.totalorder %s21, 0
      %p136 = por %p134, %p135
      %p137 = scmp.ne.s32.totalorder %s123, %s124
      %p138 = scmp.eq.s32.totalorder %s22, 1
      %p139 = por %p137, %p138
      %p141 = scmp.ne.s32.totalorder %s124, %s140
      %p142 = scmp.eq.s32.totalorder %s22, 0
      %p143 = por %p141, %p142
      %p144 = scmp.le.s32.totalorder 1, %s16
      %p145 = scmp.lt.s32.totalorder %s16, 3
      %p146 = pnand %p144, %p145
      %p147 = pneg %p146
      // Predicated region
      $region9: #{dcat_forward.15} parent=5 // pred_check
        _
      $region10: #{dcat_forward.15} parent=5 // pred_check_branch
        %149 = sbr.rel (%p146) target = $region12
      $region11: #{dcat_forward.15} parent=5 // pred_region
        %s150 = ssub.s32 %s16, 1
        // Predicated region
        $region13: #{dcat_forward.15} parent=11 // pred_check
          %p151 = pneg %p80
        $region14: #{dcat_forward.15} parent=11 // pred_check_branch
          %153 = sbr.rel (%p151) target = $region16
        $region15: #{dcat_forward.15} parent=11 // pred_region
          %s155 = ssub.s32 64, 64
          %156 = vsyncadd [#allocation6], %s155
          %s157 = smul.addr %s25, 64
          %s158 = scalar_lea.hbm %s1, %s157
          %s160 = sshll.u32 [#allocation5], 4
          %s161 = int_to_ptr.vmem [resolvable:$true] %s160
          %163 = dma.hbm_to_vmem [thread:$0]  %s158, 64, %s161, [#allocation6]
        $region16: #{dcat_forward.15} parent=11 // pred_fallthru
          _
      $region12: #{dcat_forward.15} parent=5 // pred_fallthru
        _
      %p164 = scmp.lt.s32.totalorder %s16, 2
      // Predicated region
      $region17: #{dcat_forward.15} parent=5 // pred_check
        %p165 = pneg %p164
      $region18: #{dcat_forward.15} parent=5 // pred_check_branch
        %167 = sbr.rel (%p165) target = $region20
      $region19: #{dcat_forward.15} parent=5 // pred_region
        // Predicated region
        $region21: #{dcat_forward.15} parent=19 // pred_check
          %p168 = pneg %p48
        $region22: #{dcat_forward.15} parent=19 // pred_check_branch
          %170 = sbr.rel (%p168) target = $region24
        $region23: #{dcat_forward.15} parent=19 // pred_region
          %s171 = sand.u32 %s16, 1
          %s172 = scalar_lea.sflag [#allocation3], %s171
          %s173 = sand.u32 %s38, 1
          %s174 = smul.addr %s173, 64
          %s175 = scalar_lea.vmem [#allocation2], %s174
          %s177 = ssub.s32 1024, 1024
          %178 = vsyncadd %s172, %s177
          %s179 = smul.addr %s24, 8
          %s180 = smul.addr %s179, 128
          %s181 = scalar_lea.hbm %s0, %s180
          %s182 = sshll.u32 %s175, 4
          %s183 = int_to_ptr.vmem [resolvable:$true] %s182
          %188 = dma.hbm_to_vmem [thread:$0]  %s181, 1024, %s183, %s172, 128, 128, 8
        $region24: #{dcat_forward.15} parent=19 // pred_fallthru
          _
        // Predicated region
        $region25: #{dcat_forward.15} parent=19 // pred_check
          %p189 = pneg %p102
        $region26: #{dcat_forward.15} parent=19 // pred_check_branch
          %191 = sbr.rel (%p189) target = $region28
        $region27: #{dcat_forward.15} parent=19 // pred_region
          %s192 = sand.u32 %s16, 1
          %s193 = scalar_lea.sflag [#allocation3], %s192
          %s194 = sand.u32 %s92, 1
          %s195 = smul.addr %s194, 64
          %s196 = scalar_lea.vmem [#allocation7], %s195
          %s198 = ssub.s32 1024, 1024
          %199 = vsyncadd %s193, %s198
          %s200 = smul.addr %s24, 8
          %s201 = sadd.s32 %s23, %s200
          %s202 = smul.addr %s201, 128
          %s203 = scalar_lea.hbm %s2, %s202
          %s204 = sshll.u32 %s196, 4
          %s205 = int_to_ptr.vmem [resolvable:$true] %s204
          %210 = dma.hbm_to_vmem [thread:$0]  %s203, 1024, %s205, %s193, 128, 128, 8
        $region28: #{dcat_forward.15} parent=19 // pred_fallthru
          _
      $region20: #{dcat_forward.15} parent=5 // pred_fallthru
        _
      %p211 = scmp.le.s32.totalorder 1, %s16
      %p212 = scmp.lt.s32.totalorder %s16, 3
      %p213 = pnand %p211, %p212
      %p214 = pneg %p213
      // Predicated region
      $region29: #{dcat_forward.15} parent=5 // pred_check
        _
      $region30: #{dcat_forward.15} parent=5 // pred_check_branch
        %216 = sbr.rel (%p213) target = $region32
      $region31: #{dcat_forward.15} parent=5 // pred_region
        %s217 = ssub.s32 %s16, 1
        %s218 = sand.u32 %s21, 1
        %s219 = scalar_lea.sflag [#allocation3], %s218
        %s220 = sand.u32 %s41, 1
        %s221 = smul.addr %s220, 64
        %s222 = scalar_lea.vmem [#allocation2], %s221
        // Predicated region
        $region33: #{dcat_forward.15} parent=31 // pred_check
          %p223 = pneg %p54
        $region34: #{dcat_forward.15} parent=31 // pred_check_branch
          %225 = sbr.rel (%p223) target = $region36
        $region35: #{dcat_forward.15} parent=31 // pred_region
          %226 = dma.done %s219, 1024
        $region36: #{dcat_forward.15} parent=31 // pred_fallthru
          _
        // Predicated region
        $region37: #{dcat_forward.15} parent=31 // pred_check
          %p227 = pneg %p80
        $region38: #{dcat_forward.15} parent=31 // pred_check_branch
          %229 = sbr.rel (%p227) target = $region40
        $region39: #{dcat_forward.15} parent=31 // pred_region
          %230 = dma.done [#allocation6], 64
        $region40: #{dcat_forward.15} parent=31 // pred_fallthru
          _
        %s231 = sand.u32 %s21, 1
        %s232 = scalar_lea.sflag [#allocation3], %s231
        %s233 = sand.u32 %s95, 1
        %s234 = smul.addr %s233, 64
        %s235 = scalar_lea.vmem [#allocation7], %s234
        // Predicated region
        $region41: #{dcat_forward.15} parent=31 // pred_check
          %p236 = pneg %p108
        $region42: #{dcat_forward.15} parent=31 // pred_check_branch
          %238 = sbr.rel (%p236) target = $region44
        $region43: #{dcat_forward.15} parent=31 // pred_region
          %239 = dma.done %s232, 1024
        $region44: #{dcat_forward.15} parent=31 // pred_fallthru
          _
        %s240 = sand.u32 %s21, 1
        %s241 = scalar_lea.sflag [#allocation3], %s240
        %s242 = sand.u32 %s41, 1
        %s243 = smul.addr %s242, 64
        %s244 = scalar_lea.vmem [#allocation2], %s243
        %p245 = pneg %p54
        %p246 = pneg %p51
        %p247 = pneg %p80
        %p248 = pneg %p77
        %s249 = sand.u32 %s21, 1
        %s250 = scalar_lea.sflag [#allocation3], %s249
        %s251 = sand.u32 %s95, 1
        %s252 = smul.addr %s251, 64
        %s253 = scalar_lea.vmem [#allocation7], %s252
        %p254 = pneg %p108
        %p255 = pneg %p105
        %p256 = pneg %p136
        %p257 = pneg %p133
        %s258 = sand.u32 %s123, 1
        %s259 = scalar_lea.sflag [#allocation4], %s258
        %s260 = sand.u32 %s123, 1
        %s261 = smul.addr %s260, 64
        %s262 = scalar_lea.vmem [#allocation8], %s261
        %v263 = vld [vmem:[%s222] sm:$0xff]
        %v264 = vld [vmem:[%s222 + $0x8] sm:$0xff]
        %v265 = vld [vmem:[%s222 + $0x10] sm:$0xff]
        %v266 = vld [vmem:[%s222 + $0x18] sm:$0xff]
        %v267 = vld [vmem:[%s222 + $0x20] sm:$0xff]
        %v268 = vld [vmem:[%s222 + $0x28] sm:$0xff]
        %v269 = vld [vmem:[%s222 + $0x30] sm:$0xff]
        %v270 = vld [vmem:[%s222 + $0x38] sm:$0xff]
        %v271 = vld [vmem:[#allocation5] sm:$0xf]
        %vm272 = vcmask 31744
        %v274 = vsel %vm272, %v263, 0
        %v277 = vsel %vm272, %v264, 0
        %v280 = vsel %vm272, %v265, 0
        %v283 = vsel %vm272, %v266, 0
        %v286 = vsel %vm272, %v267, 0
        %v289 = vsel %vm272, %v268, 0
        %v292 = vsel %vm272, %v269, 0
        %v295 = vsel %vm272, %v270, 0
        %vm297 = vcmask 1043456
        %v299 = vsel %vm297, %v271, 0
        %301 = vmatprep.subr.mxu0 0.0
        %302 = vmatpush1.msra.mxu0 %v299
        %303 = vmatprep.subr.mxu0 0.0
        %304 = vmatpush1.msra.mxu0 0.0
        %305 = vmatprep.subr.mxu0 0.0
        %306 = vmatpush1.msra.mxu0 0.0
        %307 = vmatprep.subr.mxu0 0.0
        %308 = vmatpush1.msra.mxu0 0.0
        %309 = vmatprep.subr.mxu0 0.0
        %310 = vmatpush1.msra.mxu0 0.0
        %311 = vmatprep.subr.mxu0 0.0
        %312 = vmatpush1.msra.mxu0 0.0
        %313 = vmatprep.subr.mxu0 0.0
        %314 = vmatpush1.msra.mxu0 0.0
        %315 = vmatprep.subr.mxu0 0.0
        %316 = vmatpush1.msra.mxu0 0.0
        %317 = vmatprep.subr.mxu0 0.0
        %318 = vmatpush1.msra.mxu0 0.0
        %319 = vmatprep.subr.mxu0 0.0
        %320 = vmatpush1.msra.mxu0 0.0
        %321 = vmatprep.subr.mxu0 0.0
        %322 = vmatpush1.msra.mxu0 0.0
        %323 = vmatprep.subr.mxu0 0.0
        %324 = vmatpush1.msra.mxu0 0.0
        %325 = vmatprep.subr.mxu0 0.0
        %326 = vmatpush1.msra.mxu0 0.0
        %327 = vmatprep.subr.mxu0 0.0
        %328 = vmatpush1.msra.mxu0 0.0
        %329 = vmatprep.subr.mxu0 0.0
        %330 = vmatpush1.msra.mxu0 0.0
        %331 = vmatprep.subr.mxu0 0.0
        %332 = vmatpush1.msra.mxu0 0.0
        %333 = vmatprep.subr.mxu0 0.0
        %334 = vmatpush1.msra.mxu0 0.0
        %335 = vmatprep.subr.mxu0 0.0
        %336 = vmatpush1.msra.mxu0 0.0
        %337 = vmatprep.subr.mxu0 0.0
        %338 = vmatpush1.msra.mxu0 0.0
        %339 = vmatprep.subr.mxu0 0.0
        %340 = vmatpush1.msra.mxu0 0.0
        %341 = vmatprep.subr.mxu0 0.0
        %342 = vmatpush1.msra.mxu0 0.0
        %343 = vmatprep.subr.mxu0 0.0
        %344 = vmatpush1.msra.mxu0 0.0
        %345 = vmatprep.subr.mxu0 0.0
        %346 = vmatpush1.msra.mxu0 0.0
        %347 = vmatprep.subr.mxu0 0.0
        %348 = vmatpush1.msra.mxu0 0.0
        %349 = vmatprep.subr.mxu0 0.0
        %350 = vmatpush1.msra.mxu0 0.0
        %351 = vmatprep.subr.mxu0 0.0
        %352 = vmatpush1.msra.mxu0 0.0
        %353 = vmatprep.subr.mxu0 0.0
        %354 = vmatpush1.msra.mxu0 0.0
        %355 = vmatprep.subr.mxu0 0.0
        %356 = vmatpush1.msra.mxu0 0.0
        %357 = vmatprep.subr.mxu0 0.0
        %358 = vmatpush1.msra.mxu0 0.0
        %359 = vmatprep.subr.mxu0 0.0
        %360 = vmatpush1.msra.mxu0 0.0
        %361 = vmatprep.subr.mxu0 0.0
        %362 = vmatpush1.msra.mxu0 0.0
        %363 = vmatprep.subr.mxu0 0.0
        %364 = vmatpush1.msra.mxu0 0.0
        %365 = vmatprep.mubr.f32.mxu0 0.0
        %366 = vmatmul.mubr.f32.gmra.mrb[0].mxu0 %v274
        %v367 = vpop.f32.mrb[0].mxu0
        %v368 = vadd.f32 0.0, %v367
        %v369 = vpop.f32.mrb[0].mxu0
        %370 = vmatprep.mubr.f32.mxu0 0.0
        %371 = vmatmul.mubr.f32.gmra.mrb[0].mxu0 %v277
        %v372 = vpop.f32.mrb[0].mxu0
        %v373 = vadd.f32 0.0, %v372
        %v374 = vpop.f32.mrb[0].mxu0
        %375 = vmatprep.mubr.f32.mxu0 0.0
        %376 = vmatmul.mubr.f32.gmra.mrb[0].mxu0 %v280
        %v377 = vpop.f32.mrb[0].mxu0
        %v378 = vadd.f32 0.0, %v377
        %v379 = vpop.f32.mrb[0].mxu0
        %380 = vmatprep.mubr.f32.mxu0 0.0
        %381 = vmatmul.mubr.f32.gmra.mrb[0].mxu0 %v283
        %v382 = vpop.f32.mrb[0].mxu0
        %v383 = vadd.f32 0.0, %v382
        %v384 = vpop.f32.mrb[0].mxu0
        %385 = vmatprep.mubr.f32.mxu0 0.0
        %386 = vmatmul.mubr.f32.gmra.mrb[0].mxu0 %v286
        %v387 = vpop.f32.mrb[0].mxu0
        %v388 = vadd.f32 0.0, %v387
        %v389 = vpop.f32.mrb[0].mxu0
        %390 = vmatprep.mubr.f32.mxu0 0.0
        %391 = vmatmul.mubr.f32.gmra.mrb[0].mxu0 %v289
        %v392 = vpop.f32.mrb[0].mxu0
        %v393 = vadd.f32 0.0, %v392
        %v394 = vpop.f32.mrb[0].mxu0
        %395 = vmatprep.mubr.f32.mxu0 0.0
        %396 = vmatmul.mubr.f32.gmra.mrb[0].mxu0 %v292
        %v397 = vpop.f32.mrb[0].mxu0
        %v398 = vadd.f32 0.0, %v397
        %v399 = vpop.f32.mrb[0].mxu0
        %400 = vmatprep.mubr.f32.mxu0 0.0
        %401 = vmatmul.mubr.f32.gmra.mrb[0].mxu0 %v295
        %v402 = vpop.f32.mrb[0].mxu0
        %v403 = vadd.f32 0.0, %v402
        %v404 = vpop.f32.mrb[0].mxu0
        %405 = vdwg.mxu0
        %v406 = vld [vmem:[%s235] sm:$0xff]
        %v407 = vld [vmem:[%s235 + $0x8] sm:$0xff]
        %v408 = vld [vmem:[%s235 + $0x10] sm:$0xff]
        %v409 = vld [vmem:[%s235 + $0x18] sm:$0xff]
        %v410 = vld [vmem:[%s235 + $0x20] sm:$0xff]
        %v411 = vld [vmem:[%s235 + $0x28] sm:$0xff]
        %v412 = vld [vmem:[%s235 + $0x30] sm:$0xff]
        %v413 = vld [vmem:[%s235 + $0x38] sm:$0xff]
        %v414 = vmax.f32 %v368, 0.0
        %v415 = vmax.f32 %v373, 0.0
        %v416 = vmax.f32 %v378, 0.0
        %v417 = vmax.f32 %v383, 0.0
        %v418 = vmax.f32 %v388, 0.0
        %v419 = vmax.f32 %v393, 0.0
        %v420 = vmax.f32 %v398, 0.0
        %v421 = vmax.f32 %v403, 0.0
        %v422 = vadd.f32 %v406, %v414
        %v423 = vadd.f32 %v407, %v415
        %v424 = vadd.f32 %v408, %v416
        %v425 = vadd.f32 %v409, %v417
        %v426 = vadd.f32 %v410, %v418
        %v427 = vadd.f32 %v411, %v419
        %v428 = vadd.f32 %v412, %v420
        %v429 = vadd.f32 %v413, %v421
        %430 = vst.msk [vmem:[%s262] sm:$0xff] %vm272, %v422
        %431 = vst.msk [vmem:[%s262 + $0x8] sm:$0xff] %vm272, %v423
        %432 = vst.msk [vmem:[%s262 + $0x10] sm:$0xff] %vm272, %v424
        %433 = vst.msk [vmem:[%s262 + $0x18] sm:$0xff] %vm272, %v425
        %434 = vst.msk [vmem:[%s262 + $0x20] sm:$0xff] %vm272, %v426
        %435 = vst.msk [vmem:[%s262 + $0x28] sm:$0xff] %vm272, %v427
        %436 = vst.msk [vmem:[%s262 + $0x30] sm:$0xff] %vm272, %v428
        %437 = vst.msk [vmem:[%s262 + $0x38] sm:$0xff] %vm272, %v429
        %s438 = sand.u32 %s123, 1
        %s439 = scalar_lea.sflag [#allocation4], %s438
        %s440 = sand.u32 %s123, 1
        %s441 = smul.addr %s440, 64
        %s442 = scalar_lea.vmem [#allocation8], %s441
        // Predicated region
        $region45: #{dcat_forward.15} parent=31 // pred_check
          %p443 = pneg %p133
        $region46: #{dcat_forward.15} parent=31 // pred_check_branch
          %445 = sbr.rel (%p443) target = $region48
        $region47: #{dcat_forward.15} parent=31 // pred_region
          %s447 = ssub.s32 1024, 1024
          %448 = vsyncadd %s439, %s447
          %s449 = smul.addr %s26, 8
          %s450 = sadd.s32 %s25, %s449
          %s451 = smul.addr %s450, 128
          %s452 = scalar_lea.hbm %s3, %s451
          %s453 = sshll.u32 %s442, 4
          %s454 = int_to_ptr.vmem [resolvable:$true] %s453
          %459 = dma.vmem_to_hbm [thread:$0]  %s454, 1024, %s452, %s439, 128, 128, 8
        $region48: #{dcat_forward.15} parent=31 // pred_fallthru
          _
      $region32: #{dcat_forward.15} parent=5 // pred_fallthru
        _
      %p460 = scmp.le.s32.totalorder 2, %s16
      // Predicated region
      $region49: #{dcat_forward.15} parent=5 // pred_check
        %p461 = pneg %p460
      $region50: #{dcat_forward.15} parent=5 // pred_check_branch
        %463 = sbr.rel (%p461) target = $region52
      $region51: #{dcat_forward.15} parent=5 // pred_region
        %s464 = ssub.s32 %s16, 2
        // Predicated region
        $region53: #{dcat_forward.15} parent=51 // pred_check
          %p465 = pneg %p139
        $region54: #{dcat_forward.15} parent=51 // pred_check_branch
          %467 = sbr.rel (%p465) target = $region56
        $region55: #{dcat_forward.15} parent=51 // pred_region
          %s468 = sand.u32 %s124, 1
          %s469 = scalar_lea.sflag [#allocation4], %s468
          %s470 = sand.u32 %s124, 1
          %s471 = smul.addr %s470, 64
          %s472 = scalar_lea.vmem [#allocation8], %s471
          %473 = dma.done %s469, 1024
        $region56: #{dcat_forward.15} parent=51 // pred_fallthru
          _
      $region52: #{dcat_forward.15} parent=5 // pred_fallthru
        _
    $region6: #{dcat_forward.15} parent=1 // loop_footer
      %s20 = sadd.s32 1, %s16
    $region7: #{dcat_forward.15} parent=1 // loop_footer_branch
      %15 = sbr.rel target = $region3
    $region8: #{dcat_forward.15} parent=1 // loop_exit
      _
    %474 = vsyncpa [#allocation3], 1
    %s475 = scalar_lea.sflag [#allocation3], 1
    %476 = vsyncpa %s475, 1
    %477 = vsyncpa [#allocation6], 1
    %478 = vsyncpa [#allocation4], 1
    %s479 = scalar_lea.sflag [#allocation4], 1
    %480 = vsyncpa %s479, 1

// kernel: dcat_forward.9
$region0: #{dcat_forward.9}
  #allocation0 [shape = 'u32[]', space=smem, size = 0x4, offset = 0x4, fixed_abs, tag = 'smem constant byte address 0x4 - core index']
  #allocation1 [shape = 'u32[144,128]{1,0:T(1,128)}', space=vmem, size = 0x12000, scoped, tag = 'internal scratch']
  %s0 = inlined_call_operand.hbm [shape: f32[2,8,4], index: 0, kind: input, shape index: {}]
  %s1 = inlined_call_operand.hbm [shape: f32[4,256], index: 1, kind: input, shape index: {}]
  %s2 = inlined_call_operand.hbm [shape: f32[2,8,256], index: 2, kind: input, shape index: {}]
  %s3 = inlined_call_operand.hbm [shape: f32[2,8,256], index: 3, kind: output, shape index: {}]
  %s4 = sld [smem:[#allocation0]]
  $region57: #{dcat_forward.9} parent=0
    _
  %s6 = ssub.s32 1, %s4
  %s7 = scalar_select 0, %s6, %s4
  $region1: #{dcat_forward.9} parent=0
    #allocation2 [shape = 'u8[8192]{0}', space=vmem, size = 0x2000, scoped, tag = 'input window, operand 0']
    #allocation3 [shape = 's32[2]{0}', space=sflag, size = 0x8, scoped, tag = 'scoped memory for dcat_forward.9']
    #allocation4 [shape = 's32[2]{0}', space=sflag, size = 0x8, scoped, tag = 'scoped memory for dcat_forward.9']
    #allocation5 [shape = 'u8[4096]{0}', space=vmem, size = 0x1000, scoped, tag = 'input window, operand 1']
    #allocation6 [shape = 's32[2]{0}', space=sflag, size = 0x8, scoped, tag = 'scoped memory for dcat_forward.9']
    #allocation7 [shape = 'u8[8192]{0}', space=vmem, size = 0x2000, scoped, tag = 'input window, operand 2']
    #allocation8 [shape = 'u8[8192]{0}', space=vmem, size = 0x2000, scoped, tag = 'output window, operand 0']
    %8 = vsyncpa [#allocation3], 0
    %s9 = scalar_lea.sflag [#allocation3], 1
    %10 = vsyncpa %s9, 0
    %11 = vsyncpa [#allocation6], 0
    %s12 = scalar_lea.sflag [#allocation6], 1
    %13 = vsyncpa %s12, 0
    %14 = vsyncpa [#allocation4], 0
    %s15 = scalar_lea.sflag [#allocation4], 1
    %16 = vsyncpa %s15, 0
    loop: start=0, step=1, limit=6
    $region2: #{dcat_forward.9} parent=1 // loop_pre_header
      _
    $region3: #{dcat_forward.9} parent=1 // loop_header
      %s18 = sphi 0, %s22
      %p19 = scmp.ge.s32.totalorder %s18, 6
      %s25 = sphi 0, %s37
      %s26 = sphi 0, %s33
      %s27 = sphi 0, %s25
      %s28 = sphi 0, %s26
      %s29 = sphi 0, %s27
      %s30 = sphi 0, %s28
      %s40 = sphi 0, %s42
      %s43 = sphi 0, %s40
      %s44 = sphi 0, %s43
      %s60 = sphi 0, %s44
      %s66 = sphi 0, %s68
      %s69 = sphi 0, %s66
      %s70 = sphi 0, %s69
      %s86 = sphi 0, %s70
      %s94 = sphi 0, %s96
      %s97 = sphi 0, %s94
      %s98 = sphi 0, %s97
      %s114 = sphi 0, %s98
      %s122 = sphi 0, %s124
      %s125 = sphi 0, %s122
      %s126 = sphi 0, %s125
      %s142 = sphi 0, %s126
    $region4: #{dcat_forward.9} parent=1 // loop_header_branch
      %21 = sbr.rel (%p19) target = $region8
    $region5: #{dcat_forward.9} parent=1 // loop_body
      %s23 = ssub.s32 %s18, 1
      %s24 = ssub.s32 %s18, 2
      %s31 = sadd.s32 1, %s26
      %p32 = scmp.ge.s32.totalorder %s31, 2
      %s33 = scalar_select %p32, 0, %s31
      %s34 = sadd.s32 1, %s25
      %s35 = scalar_select %p32, %s34, %s25
      %p36 = scmp.ge.s32.totalorder %s35, 2
      %s37 = scalar_select %p36, 0, %s35
      %s38 = ssub.s32 %s26, %s33
      %p39 = scmp.eq.s32.totalorder %s38, 0
      %s41 = sadd.s32 %s40, 1
      %s42 = scalar_select %p39, %s40, %s41
      %p45 = pneg %p39
      %p46 = scmp.eq.s32.totalorder %s18, 3
      %p47 = por %p45, %p46
      %p48 = scmp.ne.s32.totalorder %s40, %s43
      %p49 = scmp.eq.s32.totalorder %s18, 0
      %p50 = por %p48, %p49
      %p51 = scmp.ne.s32.totalorder %s40, %s43
      %p52 = scmp.eq.s32.totalorder %s23, 3
      %p53 = por %p51, %p52
      %p54 = scmp.ne.s32.totalorder %s43, %s44
      %p55 = scmp.eq.s32.totalorder %s23, 0
      %p56 = por %p54, %p55
      %p57 = scmp.ne.s32.totalorder %s43, %s44
      %p58 = scmp.eq.s32.totalorder %s24, 3
      %p59 = por %p57, %p58
      %p61 = scmp.ne.s32.totalorder %s44, %s60
      %p62 = scmp.eq.s32.totalorder %s24, 0
      %p63 = por %p61, %p62
      %s64 = ssub.s32 %s25, %s37
      %p65 = scmp.eq.s32.totalorder %s64, 0
      %s67 = sadd.s32 %s66, 1
      %s68 = scalar_select %p65, %s66, %s67
      %p71 = pneg %p65
      %p72 = scmp.eq.s32.totalorder %s18, 3
      %p73 = por %p71, %p72
      %p74 = scmp.ne.s32.totalorder %s66, %s69
      %p75 = scmp.eq.s32.totalorder %s18, 0
      %p76 = por %p74, %p75
      %p77 = scmp.ne.s32.totalorder %s66, %s69
      %p78 = scmp.eq.s32.totalorder %s23, 3
      %p79 = por %p77, %p78
      %p80 = scmp.ne.s32.totalorder %s69, %s70
      %p81 = scmp.eq.s32.totalorder %s23, 0
      %p82 = por %p80, %p81
      %p83 = scmp.ne.s32.totalorder %s69, %s70
      %p84 = scmp.eq.s32.totalorder %s24, 3
      %p85 = por %p83, %p84
      %p87 = scmp.ne.s32.totalorder %s70, %s86
      %p88 = scmp.eq.s32.totalorder %s24, 0
      %p89 = por %p87, %p88
      %s90 = ssub.s32 %s26, %s33
      %s91 = ssub.s32 %s25, %s37
      %s92 = sor.u32 %s90, %s91
      %p93 = scmp.eq.s32.totalorder %s92, 0
      %s95 = sadd.s32 %s94, 1
      %s96 = scalar_select %p93, %s94, %s95
      %p99 = pneg %p93
      %p100 = scmp.eq.s32.totalorder %s18, 3
      %p101 = por %p99, %p100
      %p102 = scmp.ne.s32.totalorder %s94, %s97
      %p103 = scmp.eq.s32.totalorder %s18, 0
      %p104 = por %p102, %p103
      %p105 = scmp.ne.s32.totalorder %s94, %s97
      %p106 = scmp.eq.s32.totalorder %s23, 3
      %p107 = por %p105, %p106
      %p108 = scmp.ne.s32.totalorder %s97, %s98
      %p109 = scmp.eq.s32.totalorder %s23, 0
      %p110 = por %p108, %p109
      %p111 = scmp.ne.s32.totalorder %s97, %s98
      %p112 = scmp.eq.s32.totalorder %s24, 3
      %p113 = por %p111, %p112
      %p115 = scmp.ne.s32.totalorder %s98, %s114
      %p116 = scmp.eq.s32.totalorder %s24, 0
      %p117 = por %p115, %p116
      %s118 = ssub.s32 %s26, %s33
      %s119 = ssub.s32 %s25, %s37
      %s120 = sor.u32 %s118, %s119
      %p121 = scmp.eq.s32.totalorder %s120, 0
      %s123 = sadd.s32 %s122, 1
      %s124 = scalar_select %p121, %s122, %s123
      %p127 = pneg %p121
      %p128 = scmp.eq.s32.totalorder %s18, 3
      %p129 = por %p127, %p128
      %p130 = scmp.ne.s32.totalorder %s122, %s125
      %p131 = scmp.eq.s32.totalorder %s18, 0
      %p132 = por %p130, %p131
      %p133 = scmp.ne.s32.totalorder %s122, %s125
      %p134 = scmp.eq.s32.totalorder %s23, 3
      %p135 = por %p133, %p134
      %p136 = scmp.ne.s32.totalorder %s125, %s126
      %p137 = scmp.eq.s32.totalorder %s23, 0
      %p138 = por %p136, %p137
      %p139 = scmp.ne.s32.totalorder %s125, %s126
      %p140 = scmp.eq.s32.totalorder %s24, 3
      %p141 = por %p139, %p140
      %p143 = scmp.ne.s32.totalorder %s126, %s142
      %p144 = scmp.eq.s32.totalorder %s24, 0
      %p145 = por %p143, %p144
      %p146 = scmp.le.s32.totalorder 1, %s18
      %p147 = scmp.lt.s32.totalorder %s18, 5
      %p148 = pnand %p146, %p147
      %p149 = pneg %p148
      // Predicated region
      $region9: #{dcat_forward.9} parent=5 // pred_check
        _
      $region10: #{dcat_forward.9} parent=5 // pred_check_branch
        %151 = sbr.rel (%p148) target = $region12
      $region11: #{dcat_forward.9} parent=5 // pred_region
        %s152 = ssub.s32 %s18, 1
      $region12: #{dcat_forward.9} parent=5 // pred_fallthru
        _
      %p153 = scmp.lt.s32.totalorder %s18, 4
      // Predicated region
      $region13: #{dcat_forward.9} parent=5 // pred_check
        %p154 = pneg %p153
      $region14: #{dcat_forward.9} parent=5 // pred_check_branch
        %156 = sbr.rel (%p154) target = $region16
      $region15: #{dcat_forward.9} parent=5 // pred_region
        // Predicated region
        $region17: #{dcat_forward.9} parent=15 // pred_check
          %p157 = pneg %p50
        $region18: #{dcat_forward.9} parent=15 // pred_check_branch
          %159 = sbr.rel (%p157) target = $region20
        $region19: #{dcat_forward.9} parent=15 // pred_region
          %s160 = sand.u32 %s40, 1
          %s161 = scalar_lea.sflag [#allocation3], %s160
          %s162 = sand.u32 %s40, 1
          %s163 = smul.addr %s162, 8
          %s164 = scalar_lea.vmem [#allocation2], %s163
          %s166 = ssub.s32 128, 128
          %167 = vsyncadd %s161, %s166
          %s168 = smul.addr %s26, 128
          %s169 = scalar_lea.hbm %s0, %s168
          %s171 = sshll.u32 %s164, 4
          %s172 = int_to_ptr.vmem [resolvable:$true] %s171
          %174 = dma.hbm_to_vmem [thread:$0]  %s169, 128, %s172, %s161
        $region20: #{dcat_forward.9} parent=15 // pred_fallthru
          _
        // Predicated region
        $region21: #{dcat_forward.9} parent=15 // pred_check
          %p175 = pneg %p76
        $region22: #{dcat_forward.9} parent=15 // pred_check_branch
          %177 = sbr.rel (%p175) target = $region24
        $region23: #{dcat_forward.9} parent=15 // pred_region
          %s178 = sand.u32 %s18, 1
          %s179 = scalar_lea.sflag [#allocation6], %s178
          %s180 = sand.u32 %s66, 1
          %s181 = smul.addr %s180, 4
          %s182 = scalar_lea.vmem [#allocation5], %s181
          %s184 = ssub.s32 64, 64
          %185 = vsyncadd %s179, %s184
          %s186 = smul.addr %s25, 64
          %s187 = scalar_lea.hbm %s1, %s186
          %s189 = sshll.u32 %s182, 4
          %s190 = int_to_ptr.vmem [resolvable:$true] %s189
          %192 = dma.hbm_to_vmem [thread:$0]  %s187, 64, %s190, %s179
        $region24: #{dcat_forward.9} parent=15 // pred_fallthru
          _
        // Predicated region
        $region25: #{dcat_forward.9} parent=15 // pred_check
          %p193 = pneg %p104
        $region26: #{dcat_forward.9} parent=15 // pred_check_branch
          %195 = sbr.rel (%p193) target = $region28
        $region27: #{dcat_forward.9} parent=15 // pred_region
          %s196 = sand.u32 %s18, 1
          %s197 = scalar_lea.sflag [#allocation6], %s196
          %s198 = sand.u32 %s94, 1
          %s199 = smul.addr %s198, 8
          %s200 = scalar_lea.vmem [#allocation7], %s199
          %s202 = ssub.s32 128, 128
          %203 = vsyncadd %s197, %s202
          %s204 = smul.addr %s26, 2
          %s205 = sadd.s32 %s25, %s204
          %s206 = smul.addr %s205, 128
          %s207 = scalar_lea.hbm %s2, %s206
          %s209 = sshll.u32 %s200, 4
          %s210 = int_to_ptr.vmem [resolvable:$true] %s209
          %212 = dma.hbm_to_vmem [thread:$0]  %s207, 128, %s210, %s197
        $region28: #{dcat_forward.9} parent=15 // pred_fallthru
          _
      $region16: #{dcat_forward.9} parent=5 // pred_fallthru
        _
      %p213 = scmp.le.s32.totalorder 1, %s18
      %p214 = scmp.lt.s32.totalorder %s18, 5
      %p215 = pnand %p213, %p214
      %p216 = pneg %p215
      // Predicated region
      $region29: #{dcat_forward.9} parent=5 // pred_check
        _
      $region30: #{dcat_forward.9} parent=5 // pred_check_branch
        %218 = sbr.rel (%p215) target = $region32
      $region31: #{dcat_forward.9} parent=5 // pred_region
        %s219 = ssub.s32 %s18, 1
        %s220 = sand.u32 %s43, 1
        %s221 = scalar_lea.sflag [#allocation3], %s220
        %s222 = sand.u32 %s43, 1
        %s223 = smul.addr %s222, 8
        %s224 = scalar_lea.vmem [#allocation2], %s223
        // Predicated region
        $region33: #{dcat_forward.9} parent=31 // pred_check
          %p225 = pneg %p56
        $region34: #{dcat_forward.9} parent=31 // pred_check_branch
          %227 = sbr.rel (%p225) target = $region36
        $region35: #{dcat_forward.9} parent=31 // pred_region
          %228 = dma.done %s221, 128
        $region36: #{dcat_forward.9} parent=31 // pred_fallthru
          _
        %s229 = sand.u32 %s23, 1
        %s230 = scalar_lea.sflag [#allocation6], %s229
        %s231 = sand.u32 %s69, 1
        %s232 = smul.addr %s231, 4
        %s233 = scalar_lea.vmem [#allocation5], %s232
        // Predicated region
        $region37: #{dcat_forward.9} parent=31 // pred_check
          %p234 = pneg %p82
        $region38: #{dcat_forward.9} parent=31 // pred_check_branch
          %236 = sbr.rel (%p234) target = $region40
        $region39: #{dcat_forward.9} parent=31 // pred_region
          %237 = dma.done %s230, 64
        $region40: #{dcat_forward.9} parent=31 // pred_fallthru
          _
        %s238 = sand.u32 %s23, 1
        %s239 = scalar_lea.sflag [#allocation6], %s238
        %s240 = sand.u32 %s97, 1
        %s241 = smul.addr %s240, 8
        %s242 = scalar_lea.vmem [#allocation7], %s241
        // Predicated region
        $region41: #{dcat_forward.9} parent=31 // pred_check
          %p243 = pneg %p110
        $region42: #{dcat_forward.9} parent=31 // pred_check_branch
          %245 = sbr.rel (%p243) target = $region44
        $region43: #{dcat_forward.9} parent=31 // pred_region
          %246 = dma.done %s239, 128
        $region44: #{dcat_forward.9} parent=31 // pred_fallthru
          _
        %s247 = sand.u32 %s43, 1
        %s248 = scalar_lea.sflag [#allocation3], %s247
        %s249 = sand.u32 %s43, 1
        %s250 = smul.addr %s249, 8
        %s251 = scalar_lea.vmem [#allocation2], %s250
        %p252 = pneg %p56
        %p253 = pneg %p53
        %s254 = sand.u32 %s23, 1
        %s255 = scalar_lea.sflag [#allocation6], %s254
        %s256 = sand.u32 %s69, 1
        %s257 = smul.addr %s256, 4
        %s258 = scalar_lea.vmem [#allocation5], %s257
        %p259 = pneg %p82
        %p260 = pneg %p79
        %s261 = sand.u32 %s23, 1
        %s262 = scalar_lea.sflag [#allocation6], %s261
        %s263 = sand.u32 %s97, 1
        %s264 = smul.addr %s263, 8
        %s265 = scalar_lea.vmem [#allocation7], %s264
        %p266 = pneg %p110
        %p267 = pneg %p107
        %p268 = pneg %p138
        %p269 = pneg %p135
        %s270 = sand.u32 %s125, 1
        %s271 = scalar_lea.sflag [#allocation4], %s270
        %s272 = sand.u32 %s125, 1
        %s273 = smul.addr %s272, 8
        %s274 = scalar_lea.vmem [#allocation8], %s273
        %v275 = vld [vmem:[%s224] sm:$0xff]
        %v276 = vld [vmem:[%s233] sm:$0xf]
        %vm277 = vcmask 31744
        %v279 = vsel %vm277, %v275, 0
        %vm281 = vcmask 1043456
        %v283 = vsel %vm281, %v276, 0
        %285 = vmatprep.subr.mxu0 0.0
        %286 = vmatpush1.msra.mxu0 %v283
        %287 = vmatprep.subr.mxu0 0.0
        %288 = vmatpush1.msra.mxu0 0.0
        %289 = vmatprep.subr.mxu0 0.0
        %290 = vmatpush1.msra.mxu0 0.0
        %291 = vmatprep.subr.mxu0 0.0
        %292 = vmatpush1.msra.mxu0 0.0
        %293 = vmatprep.subr.mxu0 0.0
        %294 = vmatpush1.msra.mxu0 0.0
        %295 = vmatprep.subr.mxu0 0.0
        %296 = vmatpush1.msra.mxu0 0.0
        %297 = vmatprep.subr.mxu0 0.0
        %298 = vmatpush1.msra.mxu0 0.0
        %299 = vmatprep.subr.mxu0 0.0
        %300 = vmatpush1.msra.mxu0 0.0
        %301 = vmatprep.subr.mxu0 0.0
        %302 = vmatpush1.msra.mxu0 0.0
        %303 = vmatprep.subr.mxu0 0.0
        %304 = vmatpush1.msra.mxu0 0.0
        %305 = vmatprep.subr.mxu0 0.0
        %306 = vmatpush1.msra.mxu0 0.0
        %307 = vmatprep.subr.mxu0 0.0
        %308 = vmatpush1.msra.mxu0 0.0
        %309 = vmatprep.subr.mxu0 0.0
        %310 = vmatpush1.msra.mxu0 0.0
        %311 = vmatprep.subr.mxu0 0.0
        %312 = vmatpush1.msra.mxu0 0.0
        %313 = vmatprep.subr.mxu0 0.0
        %314 = vmatpush1.msra.mxu0 0.0
        %315 = vmatprep.subr.mxu0 0.0
        %316 = vmatpush1.msra.mxu0 0.0
        %317 = vmatprep.subr.mxu0 0.0
        %318 = vmatpush1.msra.mxu0 0.0
        %319 = vmatprep.subr.mxu0 0.0
        %320 = vmatpush1.msra.mxu0 0.0
        %321 = vmatprep.subr.mxu0 0.0
        %322 = vmatpush1.msra.mxu0 0.0
        %323 = vmatprep.subr.mxu0 0.0
        %324 = vmatpush1.msra.mxu0 0.0
        %325 = vmatprep.subr.mxu0 0.0
        %326 = vmatpush1.msra.mxu0 0.0
        %327 = vmatprep.subr.mxu0 0.0
        %328 = vmatpush1.msra.mxu0 0.0
        %329 = vmatprep.subr.mxu0 0.0
        %330 = vmatpush1.msra.mxu0 0.0
        %331 = vmatprep.subr.mxu0 0.0
        %332 = vmatpush1.msra.mxu0 0.0
        %333 = vmatprep.subr.mxu0 0.0
        %334 = vmatpush1.msra.mxu0 0.0
        %335 = vmatprep.subr.mxu0 0.0
        %336 = vmatpush1.msra.mxu0 0.0
        %337 = vmatprep.subr.mxu0 0.0
        %338 = vmatpush1.msra.mxu0 0.0
        %339 = vmatprep.subr.mxu0 0.0
        %340 = vmatpush1.msra.mxu0 0.0
        %341 = vmatprep.subr.mxu0 0.0
        %342 = vmatpush1.msra.mxu0 0.0
        %343 = vmatprep.subr.mxu0 0.0
        %344 = vmatpush1.msra.mxu0 0.0
        %345 = vmatprep.subr.mxu0 0.0
        %346 = vmatpush1.msra.mxu0 0.0
        %347 = vmatprep.subr.mxu0 0.0
        %348 = vmatpush1.msra.mxu0 0.0
        %349 = vmatprep.mubr.f32.mxu0 0.0
        %350 = vmatmul.mubr.f32.gmra.mrb[0].mxu0 %v279
        %v351 = vpop.f32.mrb[0].mxu0
        %v352 = vadd.f32 0.0, %v351
        %v353 = vpop.f32.mrb[0].mxu0
        %354 = vdwg.mxu0
        %v355 = vld [vmem:[%s242] sm:$0xff]
        %v356 = vmax.f32 %v352, 0.0
        %v357 = vadd.f32 %v355, %v356
        %358 = vst [vmem:[%s274] sm:$0xff] %v357
        %s359 = sand.u32 %s125, 1
        %s360 = scalar_lea.sflag [#allocation4], %s359
        %s361 = sand.u32 %s125, 1
        %s362 = smul.addr %s361, 8
        %s363 = scalar_lea.vmem [#allocation8], %s362
        // Predicated region
        $region45: #{dcat_forward.9} parent=31 // pred_check
          %p364 = pneg %p135
        $region46: #{dcat_forward.9} parent=31 // pred_check_branch
          %366 = sbr.rel (%p364) target = $region48
        $region47: #{dcat_forward.9} parent=31 // pred_region
          %s368 = ssub.s32 128, 128
          %369 = vsyncadd %s360, %s368
          %s370 = smul.addr %s28, 2
          %s371 = sadd.s32 %s27, %s370
          %s372 = smul.addr %s371, 128
          %s373 = scalar_lea.hbm %s3, %s372
          %s375 = sshll.u32 %s363, 4
          %s376 = int_to_ptr.vmem [resolvable:$true] %s375
          %378 = dma.vmem_to_hbm [thread:$0]  %s376, 128, %s373, %s360
        $region48: #{dcat_forward.9} parent=31 // pred_fallthru
          _
      $region32: #{dcat_forward.9} parent=5 // pred_fallthru
        _
      %p379 = scmp.le.s32.totalorder 2, %s18
      // Predicated region
      $region49: #{dcat_forward.9} parent=5 // pred_check
        %p380 = pneg %p379
      $region50: #{dcat_forward.9} parent=5 // pred_check_branch
        %382 = sbr.rel (%p380) target = $region52
      $region51: #{dcat_forward.9} parent=5 // pred_region
        %s383 = ssub.s32 %s18, 2
        // Predicated region
        $region53: #{dcat_forward.9} parent=51 // pred_check
          %p384 = pneg %p141
        $region54: #{dcat_forward.9} parent=51 // pred_check_branch
          %386 = sbr.rel (%p384) target = $region56
        $region55: #{dcat_forward.9} parent=51 // pred_region
          %s387 = sand.u32 %s126, 1
          %s388 = scalar_lea.sflag [#allocation4], %s387
          %s389 = sand.u32 %s126, 1
          %s390 = smul.addr %s389, 8
          %s391 = scalar_lea.vmem [#allocation8], %s390
          %392 = dma.done %s388, 128
        $region56: #{dcat_forward.9} parent=51 // pred_fallthru
          _
      $region52: #{dcat_forward.9} parent=5 // pred_fallthru
        _
    $region6: #{dcat_forward.9} parent=1 // loop_footer
      %s22 = sadd.s32 1, %s18
    $region7: #{dcat_forward.9} parent=1 // loop_footer_branch
      %17 = sbr.rel target = $region3
    $region8: #{dcat_forward.9} parent=1 // loop_exit
      _
    %393 = vsyncpa [#allocation3], 1
    %s394 = scalar_lea.sflag [#allocation3], 1
    %395 = vsyncpa %s394, 1
    %396 = vsyncpa [#allocation6], 1
    %s397 = scalar_lea.sflag [#allocation6], 1
    %398 = vsyncpa %s397, 1
    %399 = vsyncpa [#allocation4], 1
    %s400 = scalar_lea.sflag [#allocation4], 1
    %401 = vsyncpa %s400, 1

</llo_original>
